<compile_context>
chip_gen: v6e
topology: v6e:2x2x1
jax: 0.10.0
libtpu: 0.0.40
codegen_flags: <defaults>
</compile_context>

<pallas_src>
import functools

import jax
import jax.numpy as jnp
from jax.experimental import pallas as pl
from jax.experimental.pallas import tpu as pltpu


EPS = 1e-5
VMEM_LIMIT = 32 * 1024 * 1024   # >= scoped default on v5e/v6e/v7x, << physical
TM = 512                        # kernel-1 row tile (review: keep tiles big)


def _round_up(x, m):
    return ((x + m - 1) // m) * m


# ---------------------------------------------------------------------------
# Kernel 1: BN1 (folded scale/shift) + ReLU + 1x1 conv == row-tiled matmul,
#           plus fused per-tile sum / sum-of-squares for BN2 statistics.
# ---------------------------------------------------------------------------
def bn_relu_conv1x1_kernel(x_ref, s1_ref, t1_ref, w1_ref, y_ref, stats_ref, *, nhw):
    # x_ref    : (TM, Cin)    f32   rows of the flattened NHWC input
    # s1/t1    : (1, Cin)     f32   BN1 folded scale / shift
    # w1       : (Cin, D)     bf16  1x1 conv weight
    # y_ref    : (TM, D)      bf16  1x1 conv output (bf16 to halve HBM traffic)
    # stats    : (1, 2, D)    f32   per-tile [sum; sum-of-squares] of y (f32 acc)
    tm = x_ref.shape[0]
    h = jnp.maximum(x_ref[...] * s1_ref[...] + t1_ref[...], 0.0)
    y = jnp.dot(h.astype(jnp.bfloat16), w1_ref[...],
                preferred_element_type=jnp.float32)
    y_ref[...] = y.astype(jnp.bfloat16)

    if nhw % tm != 0:
        # Partial last block: exclude out-of-range rows from the statistics
        # (their writeback is already masked by Pallas).
        row = pl.program_id(0) * tm + jax.lax.broadcasted_iota(jnp.int32, (tm, 1), 0)
        y = jnp.where(row < nhw, y, 0.0)

    s = jnp.sum(y, axis=0, keepdims=True)         # (1, D)
    sq = jnp.sum(y * y, axis=0, keepdims=True)    # (1, D)
    stats_ref[...] = jnp.concatenate([s, sq], axis=0)[None]   # (1, 2, D)


# ---------------------------------------------------------------------------
# Kernel 2: BN2 (folded) + ReLU + 3x3 conv (padding=1), one image per step.
# ---------------------------------------------------------------------------
def bn_relu_conv3x3_kernel(y1_ref, s2_ref, t2_ref, w2p_ref, out_ref, hbuf_ref, *, W):
    # y1_ref : (HW, D)  bf16  one image of the 1x1-conv output, flat row-major
    # s2/t2  : (1, D)   f32   BN2 folded scale / shift
    # w2p    : (9, D, Gp) bf16 3x3 taps, output dim zero-padded to Gp (mult of 128)
    # out    : (HW, G)  f32   only the new growth channels (flat row-major)
    # hbuf   : (PAD + HW + PAD, D) f32 scratch: flat activations with a zero halo
    #          of PAD rows on each end (provides the H padding of the conv).
    HW, D = y1_ref.shape
    H = HW // W
    G = out_ref.shape[-1]
    Gp = w2p_ref.shape[-1]
    PAD = (hbuf_ref.shape[0] - HW) // 2

    h2 = jnp.maximum(y1_ref[...].astype(jnp.float32) * s2_ref[...] + t2_ref[...], 0.0)

    # Halo re-written every step on purpose: under "parallel" megacore
    # partitioning each core has its own scratch, so a program_id()==0 guard
    # would leave one core's halo uninitialized.  2*PAD rows is trivially cheap.
    zero_halo = jnp.zeros((PAD, D), jnp.float32)
    hbuf_ref[pl.ds(0, PAD), :] = zero_halo
    hbuf_ref[pl.ds(PAD + HW, PAD), :] = zero_halo
    hbuf_ref[pl.ds(PAD, HW), :] = h2

    # Hoisted column masks (valid output positions for the +/-1 column taps);
    # row out-of-range is covered by the zero halo.
    col = jax.lax.broadcasted_iota(jnp.int32, (H, W, D), 1).reshape(HW, D)
    mask_l = col >= 1          # output column j has a valid left neighbour
    mask_r = col < (W - 1)     # output column j has a valid right neighbour

    acc = jnp.zeros((HW, Gp), jnp.float32)
    for oi in (-1, 0, 1):
        # Aligned row-tap load: element (i, j) of the oi-shifted row lives at
        # hbuf row PAD + oi*W + (i*W + j); PAD and W are multiples of 8.
        base = PAD + oi * W
        row_tap = hbuf_ref[pl.ds(base, HW), :]        # (HW, D) f32
        t0 = (oi + 1) * 3

        # oj = -1 : out[k] needs in[k-1]  -> roll towards higher indices by 1
        #           (the wrapped / cross-row entries are exactly the masked ones).
        left = jnp.where(mask_l, pltpu.roll(row_tap, shift=1, axis=0), 0.0)
        acc = acc + jnp.dot(left.astype(jnp.bfloat16), w2p_ref[t0 + 0],
                            preferred_element_type=jnp.float32)
        # oj = 0
        acc = acc + jnp.dot(row_tap.astype(jnp.bfloat16), w2p_ref[t0 + 1],
                            preferred_element_type=jnp.float32)
        # oj = +1 : out[k] needs in[k+1]  -> roll by HW-1 (== -1 mod HW).
        right = jnp.where(mask_r, pltpu.roll(row_tap, shift=HW - 1, axis=0), 0.0)
        acc = acc + jnp.dot(right.astype(jnp.bfloat16), w2p_ref[t0 + 2],
                            preferred_element_type=jnp.float32)

    # growth < 128 => masked partial stores; kept (fewer bytes beats lane padding).
    out_ref[...] = acc[:, :G]


# ---------------------------------------------------------------------------
# Wrappers
# ---------------------------------------------------------------------------
def bottleneck_forward_nhwc(x_nhwc, params):
    """NHWC forward of the Bottleneck block. Returns (N, H, W, Cin + growth)."""
    g1, b1, w1, g2, b2, w2 = params
    N, H, W, Cin = x_nhwc.shape
    inner = w1.shape[1]
    growth = w2.shape[3]
    HW = H * W
    NHW = N * HW

    xf = x_nhwc.reshape(NHW, Cin)

    # ---- BN1 statistics (training mode, biased variance) -> folded scale/shift.
    mu1 = jnp.mean(xf, axis=0)
    var1 = jnp.var(xf, axis=0)
    r1 = g1[0] * jax.lax.rsqrt(var1 + EPS)
    scale1 = r1.reshape(1, Cin)
    shift1 = (b1[0] - mu1 * r1).reshape(1, Cin)

    cparams = pltpu.CompilerParams(
        dimension_semantics=("parallel",),
        vmem_limit_bytes=VMEM_LIMIT,
    )

    # ---- Kernel 1: BN1+ReLU+1x1 conv (+ fused BN2 partial sums).
    tm = TM if NHW >= TM else NHW
    n_tiles = -(-NHW // tm)

    y1f, stats = pl.pallas_call(
        functools.partial(bn_relu_conv1x1_kernel, nhw=NHW),
        out_shape=(
            jax.ShapeDtypeStruct((NHW, inner), jnp.bfloat16),
            jax.ShapeDtypeStruct((n_tiles, 2, inner), jnp.float32),
        ),
        grid=(n_tiles,),
        in_specs=[
            pl.BlockSpec((tm, Cin), lambda i: (i, 0)),
            pl.BlockSpec((1, Cin), lambda i: (0, 0)),      # constant -> DMA'd once
            pl.BlockSpec((1, Cin), lambda i: (0, 0)),
            pl.BlockSpec((Cin, inner), lambda i: (0, 0)),
        ],
        out_specs=(
            pl.BlockSpec((tm, inner), lambda i: (i, 0)),
            pl.BlockSpec((1, 2, inner), lambda i: (i, 0, 0)),
        ),
        compiler_params=cparams,
    )(xf, scale1, shift1, w1.astype(jnp.bfloat16))

    # ---- BN2 statistics from the fused per-tile sums (no extra pass over y1).
    tot = jnp.sum(stats, axis=0)                   # (2, inner)
    mu2 = tot[0] / NHW
    var2 = jnp.maximum(tot[1] / NHW - mu2 * mu2, 0.0)   # biased variance
    r2 = g2[0] * jax.lax.rsqrt(var2 + EPS)
    scale2 = r2.reshape(1, inner)
    shift2 = (b2[0] - mu2 * r2).reshape(1, inner)

    # 3x3 weights packed per tap; output channels zero-padded to a lane-dense
    # multiple of 128 for the MXU, sliced back to `growth` before the store.
    gp = _round_up(growth, 128)
    w2p = jnp.zeros((9, inner, gp), jnp.float32)
    w2p = w2p.at[:, :, :growth].set(w2.reshape(9, inner, growth))
    w2p = w2p.astype(jnp.bfloat16)

    pad = _round_up(max(W, 8), 8)

    # ---- Kernel 2: BN2+ReLU+3x3 conv, one image per grid step (flat slabs).
    y2f = pl.pallas_call(
        functools.partial(bn_relu_conv3x3_kernel, W=W),
        out_shape=jax.ShapeDtypeStruct((NHW, growth), jnp.float32),
        grid=(N,),
        in_specs=[
            pl.BlockSpec((HW, inner), lambda n: (n, 0)),
            pl.BlockSpec((1, inner), lambda n: (0, 0)),
            pl.BlockSpec((1, inner), lambda n: (0, 0)),
            pl.BlockSpec((9, inner, gp), lambda n: (0, 0, 0)),
        ],
        out_specs=pl.BlockSpec((HW, growth), lambda n: (n, 0)),
        scratch_shapes=[pltpu.VMEM((HW + 2 * pad, inner), jnp.float32)],
        compiler_params=cparams,
    )(y1f, scale2, shift2, w2p)

    y2 = y2f.reshape(N, H, W, growth)
    # Channel concat with the untouched input happens outside the kernel.
    return jnp.concatenate([x_nhwc, y2], axis=-1)


def bottleneck_forward(x_nchw, params):
    """PyTorch-layout (NCHW) entry point: (N, Cin, H, W) -> (N, Cin+growth, H, W)."""
    x_nhwc = jnp.transpose(x_nchw, (0, 2, 3, 1))
    out = bottleneck_forward_nhwc(x_nhwc, params)
    return jnp.transpose(out, (0, 3, 1, 2))


# ---------------------------------------------------------------------------
# Parameters + pure-JAX reference (mirrors the PyTorch module, training-mode BN)
# ---------------------------------------------------------------------------
def make_params(key, in_channels, growth_rate):
    inner = 4 * growth_rate
    k1, k2, k3, k4 = jax.random.split(key, 4)
    g1 = (1.0 + 0.1 * jax.random.normal(k1, (1, in_channels))).astype(jnp.float32)
    b1 = (0.1 * jax.random.normal(k2, (1, in_channels))).astype(jnp.float32)
    g2 = (1.0 + 0.1 * jax.random.normal(k3, (1, inner))).astype(jnp.float32)
    b2 = (0.1 * jax.random.normal(k4, (1, inner))).astype(jnp.float32)
    kw1, kw2 = jax.random.split(jax.random.fold_in(key, 7))
    w1 = (jax.random.normal(kw1, (in_channels, inner)) * 0.1).astype(jnp.float32)
    w2 = (jax.random.normal(kw2, (3, 3, inner, growth_rate)) * 0.1).astype(jnp.float32)
    return g1, b1, w1, g2, b2, w2


def reference_forward(x_nchw, params):
    g1, b1, w1, g2, b2, w2 = params
    x = jnp.transpose(x_nchw, (0, 2, 3, 1))
    mu = jnp.mean(x, axis=(0, 1, 2))
    var = jnp.var(x, axis=(0, 1, 2))
    h = jnp.maximum((x - mu) * jax.lax.rsqrt(var + EPS) * g1[0] + b1[0], 0.0)
    y1 = jnp.einsum('nhwc,cd->nhwd', h, w1)
    mu2 = jnp.mean(y1, axis=(0, 1, 2))
    var2 = jnp.var(y1, axis=(0, 1, 2))
    h2 = jnp.maximum((y1 - mu2) * jax.lax.rsqrt(var2 + EPS) * g2[0] + b2[0], 0.0)
    y2 = jax.lax.conv_general_dilated(
        h2, w2, window_strides=(1, 1), padding=[(1, 1), (1, 1)],
        dimension_numbers=('NHWC', 'HWIO', 'NHWC'))
    out = jnp.concatenate([x, y2], axis=-1)
    return jnp.transpose(out, (0, 3, 1, 2))


if __name__ == "__main__":
    key = jax.random.PRNGKey(0)
    N, Cin, H, W = 2, 4, 16, 16
    growth_rate = 8

    kx, kp = jax.random.split(key)
    x = jax.random.normal(kx, (N, Cin, H, W), dtype=jnp.float32)
    params = make_params(kp, Cin, growth_rate)

    fwd = jax.jit(bottleneck_forward)
    out = jax.block_until_ready(fwd(x, params))

    ref = reference_forward(x, params)
    assert out.shape == (N, Cin + growth_rate, H, W), out.shape
    # Tolerances account for bf16 MXU inputs + bf16 y1 storage (f32 accumulate)
    # vs the all-f32 reference.
    max_err = float(jnp.max(jnp.abs(out - ref)))
    rel_err = float(jnp.linalg.norm(out - ref) / jnp.linalg.norm(ref))
    assert rel_err < 2e-2, (max_err, rel_err)
    assert jnp.allclose(out, ref, rtol=5e-2, atol=1e-1), (max_err, rel_err)
    print("KERNEL_OK")
</pallas_src>

<mosaic_0001>
module attributes {stable_mosaic.version = 11 : i64} {
  func.func @bn_relu_conv1x1_kernel(%arg0: i32, %arg1: memref<512x4xf32, #tpu.memory_space<vmem>>, %arg2: memref<1x4xf32, #tpu.memory_space<vmem>>, %arg3: memref<1x4xf32, #tpu.memory_space<vmem>>, %arg4: memref<4x32xbf16, #tpu.memory_space<vmem>>, %arg5: memref<512x32xbf16, #tpu.memory_space<vmem>>, %arg6: memref<1x2x32xf32, #tpu.memory_space<vmem>>) attributes {dimension_semantics = [#tpu.dimension_semantics<parallel>], iteration_bounds = array<i64: 1>, scalar_prefetch = 0 : i64, scratch_operands = 0 : i64, tpu.core_type = #tpu.core_type<tc>, window_params = [{transform_indices = @transform_0, window_bounds = array<i64: 512, 4>}, {pipeline_mode = #tpu.pipeline_mode<synchronous>, transform_indices = @transform_1, window_bounds = array<i64: 1, 4>}, {pipeline_mode = #tpu.pipeline_mode<synchronous>, transform_indices = @transform_2, window_bounds = array<i64: 1, 4>}, {pipeline_mode = #tpu.pipeline_mode<synchronous>, transform_indices = @transform_3, window_bounds = array<i64: 4, 32>}, {transform_indices = @transform_4, window_bounds = array<i64: 512, 32>}, {transform_indices = @transform_5, window_bounds = array<i64: 1, 2, 32>}]} {
    %c0 = arith.constant 0 : index
    %c0_0 = arith.constant 0 : index
    %0 = vector.load %arg1[%c0, %c0_0] : memref<512x4xf32, #tpu.memory_space<vmem>>, vector<512x4xf32>
    %c0_1 = arith.constant 0 : index
    %c0_2 = arith.constant 0 : index
    %1 = vector.load %arg2[%c0_1, %c0_2] : memref<1x4xf32, #tpu.memory_space<vmem>>, vector<1x4xf32>
    %2 = vector.broadcast %1 : vector<1x4xf32> to vector<512x4xf32>
    %3 = arith.mulf %0, %2 : vector<512x4xf32>
    %c0_3 = arith.constant 0 : index
    %c0_4 = arith.constant 0 : index
    %4 = vector.load %arg3[%c0_3, %c0_4] : memref<1x4xf32, #tpu.memory_space<vmem>>, vector<1x4xf32>
    %5 = vector.broadcast %4 : vector<1x4xf32> to vector<512x4xf32>
    %6 = arith.addf %3, %5 : vector<512x4xf32>
    %cst = arith.constant 0.000000e+00 : f32
    %7 = vector.broadcast %cst : f32 to vector<512x4xf32>
    %8 = arith.maximumf %6, %7 : vector<512x4xf32>
    %9 = arith.truncf %8 : vector<512x4xf32> to vector<512x4xbf16>
    %c0_5 = arith.constant 0 : index
    %c0_6 = arith.constant 0 : index
    %10 = vector.load %arg4[%c0_5, %c0_6] : memref<4x32xbf16, #tpu.memory_space<vmem>>, vector<4x32xbf16>
    %cst_7 = arith.constant dense<0.000000e+00> : vector<512x32xf32>
    %11 = tpu.matmul %9, %10, %cst_7 {dimension_numbers = #tpu.dot_dimension_numbers<[1], [0], [0], [1], [0, 0, 1, 1], [], []>} : vector<512x4xbf16>, vector<4x32xbf16>, vector<512x32xf32> -> vector<512x32xf32>
    %12 = arith.truncf %11 : vector<512x32xf32> to vector<512x32xbf16>
    %c0_8 = arith.constant 0 : index
    %c0_9 = arith.constant 0 : index
    %13 = vector.load %arg5[%c0_8, %c0_9] : memref<512x32xbf16, #tpu.memory_space<vmem>>, vector<512x32xbf16>
    tpu.vector_store %arg5[%c0_8, %c0_9], %12 {strides = array<i32>} : memref<512x32xbf16, #tpu.memory_space<vmem>>, vector<512x32xbf16>,
    %cst_10 = arith.constant dense<0.000000e+00> : vector<32xf32>
    %14 = vector.multi_reduction <add>, %11, %cst_10 [0] : vector<512x32xf32> to vector<32xf32>
    %15 = vector.shape_cast %14 : vector<32xf32> to vector<1x32xf32>
    %16 = arith.mulf %11, %11 : vector<512x32xf32>
    %cst_11 = arith.constant dense<0.000000e+00> : vector<32xf32>
    %17 = vector.multi_reduction <add>, %16, %cst_11 [0] : vector<512x32xf32> to vector<32xf32>
    %18 = vector.shape_cast %17 : vector<32xf32> to vector<1x32xf32>
    %19 = tpu.concatenate %15, %18 in 0 : vector<1x32xf32>, vector<1x32xf32> -> vector<2x32xf32>
    %20 = vector.shape_cast %19 : vector<2x32xf32> to vector<1x2x32xf32>
    %c0_12 = arith.constant 0 : index
    %c0_13 = arith.constant 0 : index
    %c0_14 = arith.constant 0 : index
    %21 = vector.load %arg6[%c0_12, %c0_13, %c0_14] : memref<1x2x32xf32, #tpu.memory_space<vmem>>, vector<1x2x32xf32>
    tpu.vector_store %arg6[%c0_12, %c0_13, %c0_14], %20 {strides = array<i32>} : memref<1x2x32xf32, #tpu.memory_space<vmem>>, vector<1x2x32xf32>,
    return
  }
  func.func @transform_0(%arg0: i32) -> (i32, i32) {
    %c0_i32 = arith.constant 0 : i32
    %c0_i32_0 = arith.constant 0 : i32
    return %arg0, %c0_i32 : i32, i32
  }
  func.func @transform_1(%arg0: i32) -> (i32, i32) {
    %c0_i32 = arith.constant 0 : i32
    %c0_i32_0 = arith.constant 0 : i32
    %c0_i32_1 = arith.constant 0 : i32
    return %c0_i32, %c0_i32_0 : i32, i32
  }
  func.func @transform_2(%arg0: i32) -> (i32, i32) {
    %c0_i32 = arith.constant 0 : i32
    %c0_i32_0 = arith.constant 0 : i32
    %c0_i32_1 = arith.constant 0 : i32
    return %c0_i32, %c0_i32_0 : i32, i32
  }
  func.func @transform_3(%arg0: i32) -> (i32, i32) {
    %c0_i32 = arith.constant 0 : i32
    %c0_i32_0 = arith.constant 0 : i32
    %c0_i32_1 = arith.constant 0 : i32
    return %c0_i32, %c0_i32_0 : i32, i32
  }
  func.func @transform_4(%arg0: i32) -> (i32, i32) {
    %c0_i32 = arith.constant 0 : i32
    %c0_i32_0 = arith.constant 0 : i32
    return %arg0, %c0_i32 : i32, i32
  }
  func.func @transform_5(%arg0: i32) -> (i32, i32, i32) {
    %c0_i32 = arith.constant 0 : i32
    %c0_i32_0 = arith.constant 0 : i32
    %c0_i32_1 = arith.constant 0 : i32
    return %arg0, %c0_i32, %c0_i32_0 : i32, i32, i32
  }
}

module attributes {stable_mosaic.version = 11 : i64} {
  func.func @bn_relu_conv3x3_kernel(%arg0: i32, %arg1: memref<256x32xbf16, #tpu.memory_space<vmem>>, %arg2: memref<1x32xf32, #tpu.memory_space<vmem>>, %arg3: memref<1x32xf32, #tpu.memory_space<vmem>>, %arg4: memref<9x32x128xbf16, #tpu.memory_space<vmem>>, %arg5: memref<256x8xf32, #tpu.memory_space<vmem>>, %arg6: memref<288x32xf32, #tpu.memory_space<vmem>>) attributes {dimension_semantics = [#tpu.dimension_semantics<parallel>], iteration_bounds = array<i64: 2>, scalar_prefetch = 0 : i64, scratch_operands = 1 : i64, tpu.core_type = #tpu.core_type<tc>, window_params = [{transform_indices = @transform_0, window_bounds = array<i64: 256, 32>}, {pipeline_mode = #tpu.pipeline_mode<synchronous>, transform_indices = @transform_1, window_bounds = array<i64: 1, 32>}, {pipeline_mode = #tpu.pipeline_mode<synchronous>, transform_indices = @transform_2, window_bounds = array<i64: 1, 32>}, {pipeline_mode = #tpu.pipeline_mode<synchronous>, transform_indices = @transform_3, window_bounds = array<i64: 9, 32, 128>}, {transform_indices = @transform_4, window_bounds = array<i64: 256, 8>}]} {
    %c0 = arith.constant 0 : index
    %c0_0 = arith.constant 0 : index
    %0 = vector.load %arg1[%c0, %c0_0] : memref<256x32xbf16, #tpu.memory_space<vmem>>, vector<256x32xbf16>
    %1 = arith.extf %0 : vector<256x32xbf16> to vector<256x32xf32>
    %c0_1 = arith.constant 0 : index
    %c0_2 = arith.constant 0 : index
    %2 = vector.load %arg2[%c0_1, %c0_2] : memref<1x32xf32, #tpu.memory_space<vmem>>, vector<1x32xf32>
    %3 = vector.broadcast %2 : vector<1x32xf32> to vector<256x32xf32>
    %4 = arith.mulf %1, %3 : vector<256x32xf32>
    %c0_3 = arith.constant 0 : index
    %c0_4 = arith.constant 0 : index
    %5 = vector.load %arg3[%c0_3, %c0_4] : memref<1x32xf32, #tpu.memory_space<vmem>>, vector<1x32xf32>
    %6 = vector.broadcast %5 : vector<1x32xf32> to vector<256x32xf32>
    %7 = arith.addf %4, %6 : vector<256x32xf32>
    %cst = arith.constant 0.000000e+00 : f32
    %8 = vector.broadcast %cst : f32 to vector<256x32xf32>
    %9 = arith.maximumf %7, %8 : vector<256x32xf32>
    %cst_5 = arith.constant 0.000000e+00 : f32
    %10 = vector.broadcast %cst_5 : f32 to vector<16x32xf32>
    %c0_6 = arith.constant 0 : index
    %c0_7 = arith.constant 0 : index
    %11 = vector.load %arg6[%c0_6, %c0_7] : memref<288x32xf32, #tpu.memory_space<vmem>>, vector<16x32xf32>
    tpu.vector_store %arg6[%c0_6, %c0_7], %10 {strides = array<i32>} : memref<288x32xf32, #tpu.memory_space<vmem>>, vector<16x32xf32>,
    %c272 = arith.constant 272 : index
    %c0_8 = arith.constant 0 : index
    %12 = vector.load %arg6[%c272, %c0_8] : memref<288x32xf32, #tpu.memory_space<vmem>>, vector<16x32xf32>
    tpu.vector_store %arg6[%c272, %c0_8], %10 {strides = array<i32>} : memref<288x32xf32, #tpu.memory_space<vmem>>, vector<16x32xf32>,
    %c16 = arith.constant 16 : index
    %c0_9 = arith.constant 0 : index
    %13 = vector.load %arg6[%c16, %c0_9] : memref<288x32xf32, #tpu.memory_space<vmem>>, vector<256x32xf32>
    tpu.vector_store %arg6[%c16, %c0_9], %9 {strides = array<i32>} : memref<288x32xf32, #tpu.memory_space<vmem>>, vector<256x32xf32>,
    %14 = tpu.iota {dimensions = array<i32: 1>} : vector<16x16x32xi32>
    %15 = vector.shape_cast %14 : vector<16x16x32xi32> to vector<256x32xi32>
    %c1_i32 = arith.constant 1 : i32
    %16 = vector.broadcast %c1_i32 : i32 to vector<256x32xi32>
    %17 = arith.cmpi sge, %15, %16 : vector<256x32xi32>
    %c15_i32 = arith.constant 15 : i32
    %18 = vector.broadcast %c15_i32 : i32 to vector<256x32xi32>
    %19 = arith.cmpi slt, %15, %18 : vector<256x32xi32>
    %cst_10 = arith.constant 0.000000e+00 : f32
    %20 = vector.broadcast %cst_10 : f32 to vector<256x128xf32>
    %c0_11 = arith.constant 0 : index
    %c0_12 = arith.constant 0 : index
    %21 = vector.load %arg6[%c0_11, %c0_12] : memref<288x32xf32, #tpu.memory_space<vmem>>, vector<256x32xf32>
    %c1_i32_13 = arith.constant 1 : i32
    %22 = tpu.dynamic_rotate %21 by %c1_i32_13 dim 0 : vector<256x32xf32>, i32 -> vector<256x32xf32>
    %cst_14 = arith.constant 0.000000e+00 : f32
    %23 = vector.broadcast %cst_14 : f32 to vector<256x32xf32>
    %24 = arith.select %17, %22, %23 : vector<256x32xi1>, vector<256x32xf32>
    %25 = arith.truncf %24 : vector<256x32xf32> to vector<256x32xbf16>
    %c0_15 = arith.constant 0 : index
    %c0_16 = arith.constant 0 : index
    %c0_17 = arith.constant 0 : index
    %26 = vector.load %arg4[%c0_15, %c0_16, %c0_17] : memref<9x32x128xbf16, #tpu.memory_space<vmem>>, vector<1x32x128xbf16>
    %27 = vector.shape_cast %26 : vector<1x32x128xbf16> to vector<32x128xbf16>
    %cst_18 = arith.constant dense<0.000000e+00> : vector<256x128xf32>
    %28 = tpu.matmul %25, %27, %cst_18 {dimension_numbers = #tpu.dot_dimension_numbers<[1], [0], [0], [1], [0, 0, 1, 1], [], []>} : vector<256x32xbf16>, vector<32x128xbf16>, vector<256x128xf32> -> vector<256x128xf32>
    %29 = arith.addf %20, %28 : vector<256x128xf32>
    %30 = arith.truncf %21 : vector<256x32xf32> to vector<256x32xbf16>
    %c1 = arith.constant 1 : index
    %c0_19 = arith.constant 0 : index
    %c0_20 = arith.constant 0 : index
    %31 = vector.load %arg4[%c1, %c0_19, %c0_20] : memref<9x32x128xbf16, #tpu.memory_space<vmem>>, vector<1x32x128xbf16>
    %32 = vector.shape_cast %31 : vector<1x32x128xbf16> to vector<32x128xbf16>
    %cst_21 = arith.constant dense<0.000000e+00> : vector<256x128xf32>
    %33 = tpu.matmul %30, %32, %cst_21 {dimension_numbers = #tpu.dot_dimension_numbers<[1], [0], [0], [1], [0, 0, 1, 1], [], []>} : vector<256x32xbf16>, vector<32x128xbf16>, vector<256x128xf32> -> vector<256x128xf32>
    %34 = arith.addf %29, %33 : vector<256x128xf32>
    %c255_i32 = arith.constant 255 : i32
    %35 = tpu.dynamic_rotate %21 by %c255_i32 dim 0 : vector<256x32xf32>, i32 -> vector<256x32xf32>
    %cst_22 = arith.constant 0.000000e+00 : f32
    %36 = vector.broadcast %cst_22 : f32 to vector<256x32xf32>
    %37 = arith.select %19, %35, %36 : vector<256x32xi1>, vector<256x32xf32>
    %38 = arith.truncf %37 : vector<256x32xf32> to vector<256x32xbf16>
    %c2 = arith.constant 2 : index
    %c0_23 = arith.constant 0 : index
    %c0_24 = arith.constant 0 : index
    %39 = vector.load %arg4[%c2, %c0_23, %c0_24] : memref<9x32x128xbf16, #tpu.memory_space<vmem>>, vector<1x32x128xbf16>
    %40 = vector.shape_cast %39 : vector<1x32x128xbf16> to vector<32x128xbf16>
    %cst_25 = arith.constant dense<0.000000e+00> : vector<256x128xf32>
    %41 = tpu.matmul %38, %40, %cst_25 {dimension_numbers = #tpu.dot_dimension_numbers<[1], [0], [0], [1], [0, 0, 1, 1], [], []>} : vector<256x32xbf16>, vector<32x128xbf16>, vector<256x128xf32> -> vector<256x128xf32>
    %42 = arith.addf %34, %41 : vector<256x128xf32>
    %c16_26 = arith.constant 16 : index
    %c0_27 = arith.constant 0 : index
    %43 = vector.load %arg6[%c16_26, %c0_27] : memref<288x32xf32, #tpu.memory_space<vmem>>, vector<256x32xf32>
    %c1_i32_28 = arith.constant 1 : i32
    %44 = tpu.dynamic_rotate %43 by %c1_i32_28 dim 0 : vector<256x32xf32>, i32 -> vector<256x32xf32>
    %cst_29 = arith.constant 0.000000e+00 : f32
    %45 = vector.broadcast %cst_29 : f32 to vector<256x32xf32>
    %46 = arith.select %17, %44, %45 : vector<256x32xi1>, vector<256x32xf32>
    %47 = arith.truncf %46 : vector<256x32xf32> to vector<256x32xbf16>
    %c3 = arith.constant 3 : index
    %c0_30 = arith.constant 0 : index
    %c0_31 = arith.constant 0 : index
    %48 = vector.load %arg4[%c3, %c0_30, %c0_31] : memref<9x32x128xbf16, #tpu.memory_space<vmem>>, vector<1x32x128xbf16>
    %49 = vector.shape_cast %48 : vector<1x32x128xbf16> to vector<32x128xbf16>
    %cst_32 = arith.constant dense<0.000000e+00> : vector<256x128xf32>
    %50 = tpu.matmul %47, %49, %cst_32 {dimension_numbers = #tpu.dot_dimension_numbers<[1], [0], [0], [1], [0, 0, 1, 1], [], []>} : vector<256x32xbf16>, vector<32x128xbf16>, vector<256x128xf32> -> vector<256x128xf32>
    %51 = arith.addf %42, %50 : vector<256x128xf32>
    %52 = arith.truncf %43 : vector<256x32xf32> to vector<256x32xbf16>
    %c4 = arith.constant 4 : index
    %c0_33 = arith.constant 0 : index
    %c0_34 = arith.constant 0 : index
    %53 = vector.load %arg4[%c4, %c0_33, %c0_34] : memref<9x32x128xbf16, #tpu.memory_space<vmem>>, vector<1x32x128xbf16>
    %54 = vector.shape_cast %53 : vector<1x32x128xbf16> to vector<32x128xbf16>
    %cst_35 = arith.constant dense<0.000000e+00> : vector<256x128xf32>
    %55 = tpu.matmul %52, %54, %cst_35 {dimension_numbers = #tpu.dot_dimension_numbers<[1], [0], [0], [1], [0, 0, 1, 1], [], []>} : vector<256x32xbf16>, vector<32x128xbf16>, vector<256x128xf32> -> vector<256x128xf32>
    %56 = arith.addf %51, %55 : vector<256x128xf32>
    %c255_i32_36 = arith.constant 255 : i32
    %57 = tpu.dynamic_rotate %43 by %c255_i32_36 dim 0 : vector<256x32xf32>, i32 -> vector<256x32xf32>
    %cst_37 = arith.constant 0.000000e+00 : f32
    %58 = vector.broadcast %cst_37 : f32 to vector<256x32xf32>
    %59 = arith.select %19, %57, %58 : vector<256x32xi1>, vector<256x32xf32>
    %60 = arith.truncf %59 : vector<256x32xf32> to vector<256x32xbf16>
    %c5 = arith.constant 5 : index
    %c0_38 = arith.constant 0 : index
    %c0_39 = arith.constant 0 : index
    %61 = vector.load %arg4[%c5, %c0_38, %c0_39] : memref<9x32x128xbf16, #tpu.memory_space<vmem>>, vector<1x32x128xbf16>
    %62 = vector.shape_cast %61 : vector<1x32x128xbf16> to vector<32x128xbf16>
    %cst_40 = arith.constant dense<0.000000e+00> : vector<256x128xf32>
    %63 = tpu.matmul %60, %62, %cst_40 {dimension_numbers = #tpu.dot_dimension_numbers<[1], [0], [0], [1], [0, 0, 1, 1], [], []>} : vector<256x32xbf16>, vector<32x128xbf16>, vector<256x128xf32> -> vector<256x128xf32>
    %64 = arith.addf %56, %63 : vector<256x128xf32>
    %c32 = arith.constant 32 : index
    %c0_41 = arith.constant 0 : index
    %65 = vector.load %arg6[%c32, %c0_41] : memref<288x32xf32, #tpu.memory_space<vmem>>, vector<256x32xf32>
    %c1_i32_42 = arith.constant 1 : i32
    %66 = tpu.dynamic_rotate %65 by %c1_i32_42 dim 0 : vector<256x32xf32>, i32 -> vector<256x32xf32>
    %cst_43 = arith.constant 0.000000e+00 : f32
    %67 = vector.broadcast %cst_43 : f32 to vector<256x32xf32>
    %68 = arith.select %17, %66, %67 : vector<256x32xi1>, vector<256x32xf32>
    %69 = arith.truncf %68 : vector<256x32xf32> to vector<256x32xbf16>
    %c6 = arith.constant 6 : index
    %c0_44 = arith.constant 0 : index
    %c0_45 = arith.constant 0 : index
    %70 = vector.load %arg4[%c6, %c0_44, %c0_45] : memref<9x32x128xbf16, #tpu.memory_space<vmem>>, vector<1x32x128xbf16>
    %71 = vector.shape_cast %70 : vector<1x32x128xbf16> to vector<32x128xbf16>
    %cst_46 = arith.constant dense<0.000000e+00> : vector<256x128xf32>
    %72 = tpu.matmul %69, %71, %cst_46 {dimension_numbers = #tpu.dot_dimension_numbers<[1], [0], [0], [1], [0, 0, 1, 1], [], []>} : vector<256x32xbf16>, vector<32x128xbf16>, vector<256x128xf32> -> vector<256x128xf32>
    %73 = arith.addf %64, %72 : vector<256x128xf32>
    %74 = arith.truncf %65 : vector<256x32xf32> to vector<256x32xbf16>
    %c7 = arith.constant 7 : index
    %c0_47 = arith.constant 0 : index
    %c0_48 = arith.constant 0 : index
    %75 = vector.load %arg4[%c7, %c0_47, %c0_48] : memref<9x32x128xbf16, #tpu.memory_space<vmem>>, vector<1x32x128xbf16>
    %76 = vector.shape_cast %75 : vector<1x32x128xbf16> to vector<32x128xbf16>
    %cst_49 = arith.constant dense<0.000000e+00> : vector<256x128xf32>
    %77 = tpu.matmul %74, %76, %cst_49 {dimension_numbers = #tpu.dot_dimension_numbers<[1], [0], [0], [1], [0, 0, 1, 1], [], []>} : vector<256x32xbf16>, vector<32x128xbf16>, vector<256x128xf32> -> vector<256x128xf32>
    %78 = arith.addf %73, %77 : vector<256x128xf32>
    %c255_i32_50 = arith.constant 255 : i32
    %79 = tpu.dynamic_rotate %65 by %c255_i32_50 dim 0 : vector<256x32xf32>, i32 -> vector<256x32xf32>
    %cst_51 = arith.constant 0.000000e+00 : f32
    %80 = vector.broadcast %cst_51 : f32 to vector<256x32xf32>
    %81 = arith.select %19, %79, %80 : vector<256x32xi1>, vector<256x32xf32>
    %82 = arith.truncf %81 : vector<256x32xf32> to vector<256x32xbf16>
    %c8 = arith.constant 8 : index
    %c0_52 = arith.constant 0 : index
    %c0_53 = arith.constant 0 : index
    %83 = vector.load %arg4[%c8, %c0_52, %c0_53] : memref<9x32x128xbf16, #tpu.memory_space<vmem>>, vector<1x32x128xbf16>
    %84 = vector.shape_cast %83 : vector<1x32x128xbf16> to vector<32x128xbf16>
    %cst_54 = arith.constant dense<0.000000e+00> : vector<256x128xf32>
    %85 = tpu.matmul %82, %84, %cst_54 {dimension_numbers = #tpu.dot_dimension_numbers<[1], [0], [0], [1], [0, 0, 1, 1], [], []>} : vector<256x32xbf16>, vector<32x128xbf16>, vector<256x128xf32> -> vector<256x128xf32>
    %86 = arith.addf %78, %85 : vector<256x128xf32>
    %87 = vector.extract_strided_slice %86 {offsets = [0, 0], sizes = [256, 8], strides = [1, 1]} : vector<256x128xf32> to vector<256x8xf32>
    %c0_55 = arith.constant 0 : index
    %c0_56 = arith.constant 0 : index
    %88 = vector.load %arg5[%c0_55, %c0_56] : memref<256x8xf32, #tpu.memory_space<vmem>>, vector<256x8xf32>
    tpu.vector_store %arg5[%c0_55, %c0_56], %87 {strides = array<i32>} : memref<256x8xf32, #tpu.memory_space<vmem>>, vector<256x8xf32>,
    return
  }
  func.func @transform_0(%arg0: i32) -> (i32, i32) {
    %c0_i32 = arith.constant 0 : i32
    %c0_i32_0 = arith.constant 0 : i32
    return %arg0, %c0_i32 : i32, i32
  }
  func.func @transform_1(%arg0: i32) -> (i32, i32) {
    %c0_i32 = arith.constant 0 : i32
    %c0_i32_0 = arith.constant 0 : i32
    %c0_i32_1 = arith.constant 0 : i32
    return %c0_i32, %c0_i32_0 : i32, i32
  }
  func.func @transform_2(%arg0: i32) -> (i32, i32) {
    %c0_i32 = arith.constant 0 : i32
    %c0_i32_0 = arith.constant 0 : i32
    %c0_i32_1 = arith.constant 0 : i32
    return %c0_i32, %c0_i32_0 : i32, i32
  }
  func.func @transform_3(%arg0: i32) -> (i32, i32, i32) {
    %c0_i32 = arith.constant 0 : i32
    %c0_i32_0 = arith.constant 0 : i32
    %c0_i32_1 = arith.constant 0 : i32
    %c0_i32_2 = arith.constant 0 : i32
    return %c0_i32, %c0_i32_0, %c0_i32_1 : i32, i32, i32
  }
  func.func @transform_4(%arg0: i32) -> (i32, i32) {
    %c0_i32 = arith.constant 0 : i32
    %c0_i32_0 = arith.constant 0 : i32
    return %arg0, %c0_i32 : i32, i32
  }
}

</mosaic_0001>

<llo_original>
// kernel: bottleneck_forward.2
$region0: #{bottleneck_forward.2}
  #allocation0 [shape = 'u32[]', space=smem, size = 0x4, offset = 0x4, fixed_abs, tag = 'smem constant byte address 0x4 - core index']
  #allocation1 [shape = 'u32[144,128]{1,0:T(1,128)}', space=vmem, size = 0x12000, scoped, tag = 'internal scratch']
  %s0 = inlined_call_operand.vmem [shape: f32[512,4], index: 0, kind: input, shape index: {}]
  %s1 = inlined_call_operand.vmem [shape: f32[1,4], index: 1, kind: input, shape index: {}]
  %s2 = inlined_call_operand.vmem [shape: f32[1,4], index: 2, kind: input, shape index: {}]
  %s3 = inlined_call_operand.vmem [shape: bf16[4,32], index: 3, kind: input, shape index: {}]
  %s4 = inlined_call_operand.vmem [shape: bf16[512,32], index: 4, kind: output, shape index: {0}]
  %s5 = inlined_call_operand.vmem [shape: f32[1,2,32], index: 5, kind: output, shape index: {1}]
  %6 = xla_tuple %s4, %s5
  %s7 = sld [smem:[#allocation0]]
  $region34: #{bottleneck_forward.2} parent=0
    _
  %s9 = ssub.s32 1, %s7
  %s10 = scalar_select 0, %s9, %s7
  // Predicated region
  $region2: #{bottleneck_forward.2} parent=0 // pred_check
    _
  $region3: #{bottleneck_forward.2} parent=0 // pred_check_branch
    %12 = sbr.rel (0) target = $region5
  $region4: #{bottleneck_forward.2} parent=0 // pred_region
    _
  $region5: #{bottleneck_forward.2} parent=0 // pred_fallthru
    _
  // Predicated region
  $region6: #{bottleneck_forward.2} parent=0 // pred_check
    _
  $region7: #{bottleneck_forward.2} parent=0 // pred_check_branch
    %14 = sbr.rel (0) target = $region9
  $region8: #{bottleneck_forward.2} parent=0 // pred_region
    _
  $region9: #{bottleneck_forward.2} parent=0 // pred_fallthru
    _
  // Predicated region
  $region10: #{bottleneck_forward.2} parent=0 // pred_check
    _
  $region11: #{bottleneck_forward.2} parent=0 // pred_check_branch
    %16 = sbr.rel (0) target = $region13
  $region12: #{bottleneck_forward.2} parent=0 // pred_region
    _
  $region13: #{bottleneck_forward.2} parent=0 // pred_fallthru
    _
  // Predicated region
  $region14: #{bottleneck_forward.2} parent=0 // pred_check
    _
  $region15: #{bottleneck_forward.2} parent=0 // pred_check_branch
    %18 = sbr.rel (0) target = $region17
  $region16: #{bottleneck_forward.2} parent=0 // pred_region
    _
  $region17: #{bottleneck_forward.2} parent=0 // pred_fallthru
    _
  %v20 = vld [vmem:[%s0] sm:$0xff]
  %v21 = vld [vmem:[%s0 + $0x8] sm:$0xff]
  %v22 = vld [vmem:[%s0 + $0x10] sm:$0xff]
  %v23 = vld [vmem:[%s0 + $0x18] sm:$0xff]
  %v24 = vld [vmem:[%s0 + $0x20] sm:$0xff]
  %v25 = vld [vmem:[%s0 + $0x28] sm:$0xff]
  %v26 = vld [vmem:[%s0 + $0x30] sm:$0xff]
  %v27 = vld [vmem:[%s0 + $0x38] sm:$0xff]
  %v28 = vld [vmem:[%s0 + $0x40] sm:$0xff]
  %v29 = vld [vmem:[%s0 + $0x48] sm:$0xff]
  %v30 = vld [vmem:[%s0 + $0x50] sm:$0xff]
  %v31 = vld [vmem:[%s0 + $0x58] sm:$0xff]
  %v32 = vld [vmem:[%s0 + $0x60] sm:$0xff]
  %v33 = vld [vmem:[%s0 + $0x68] sm:$0xff]
  %v34 = vld [vmem:[%s0 + $0x70] sm:$0xff]
  %v35 = vld [vmem:[%s0 + $0x78] sm:$0xff]
  %v36 = vld [vmem:[%s0 + $0x80] sm:$0xff]
  %v37 = vld [vmem:[%s0 + $0x88] sm:$0xff]
  %v38 = vld [vmem:[%s0 + $0x90] sm:$0xff]
  %v39 = vld [vmem:[%s0 + $0x98] sm:$0xff]
  %v40 = vld [vmem:[%s0 + $0xa0] sm:$0xff]
  %v41 = vld [vmem:[%s0 + $0xa8] sm:$0xff]
  %v42 = vld [vmem:[%s0 + $0xb0] sm:$0xff]
  %v43 = vld [vmem:[%s0 + $0xb8] sm:$0xff]
  %v44 = vld [vmem:[%s0 + $0xc0] sm:$0xff]
  %v45 = vld [vmem:[%s0 + $0xc8] sm:$0xff]
  %v46 = vld [vmem:[%s0 + $0xd0] sm:$0xff]
  %v47 = vld [vmem:[%s0 + $0xd8] sm:$0xff]
  %v48 = vld [vmem:[%s0 + $0xe0] sm:$0xff]
  %v49 = vld [vmem:[%s0 + $0xe8] sm:$0xff]
  %v50 = vld [vmem:[%s0 + $0xf0] sm:$0xff]
  %v51 = vld [vmem:[%s0 + $0xf8] sm:$0xff]
  %v52 = vld [vmem:[%s0 + $0x100] sm:$0xff]
  %v53 = vld [vmem:[%s0 + $0x108] sm:$0xff]
  %v54 = vld [vmem:[%s0 + $0x110] sm:$0xff]
  %v55 = vld [vmem:[%s0 + $0x118] sm:$0xff]
  %v56 = vld [vmem:[%s0 + $0x120] sm:$0xff]
  %v57 = vld [vmem:[%s0 + $0x128] sm:$0xff]
  %v58 = vld [vmem:[%s0 + $0x130] sm:$0xff]
  %v59 = vld [vmem:[%s0 + $0x138] sm:$0xff]
  %v60 = vld [vmem:[%s0 + $0x140] sm:$0xff]
  %v61 = vld [vmem:[%s0 + $0x148] sm:$0xff]
  %v62 = vld [vmem:[%s0 + $0x150] sm:$0xff]
  %v63 = vld [vmem:[%s0 + $0x158] sm:$0xff]
  %v64 = vld [vmem:[%s0 + $0x160] sm:$0xff]
  %v65 = vld [vmem:[%s0 + $0x168] sm:$0xff]
  %v66 = vld [vmem:[%s0 + $0x170] sm:$0xff]
  %v67 = vld [vmem:[%s0 + $0x178] sm:$0xff]
  %v68 = vld [vmem:[%s0 + $0x180] sm:$0xff]
  %v69 = vld [vmem:[%s0 + $0x188] sm:$0xff]
  %v70 = vld [vmem:[%s0 + $0x190] sm:$0xff]
  %v71 = vld [vmem:[%s0 + $0x198] sm:$0xff]
  %v72 = vld [vmem:[%s0 + $0x1a0] sm:$0xff]
  %v73 = vld [vmem:[%s0 + $0x1a8] sm:$0xff]
  %v74 = vld [vmem:[%s0 + $0x1b0] sm:$0xff]
  %v75 = vld [vmem:[%s0 + $0x1b8] sm:$0xff]
  %v76 = vld [vmem:[%s0 + $0x1c0] sm:$0xff]
  %v77 = vld [vmem:[%s0 + $0x1c8] sm:$0xff]
  %v78 = vld [vmem:[%s0 + $0x1d0] sm:$0xff]
  %v79 = vld [vmem:[%s0 + $0x1d8] sm:$0xff]
  %v80 = vld [vmem:[%s0 + $0x1e0] sm:$0xff]
  %v81 = vld [vmem:[%s0 + $0x1e8] sm:$0xff]
  %v82 = vld [vmem:[%s0 + $0x1f0] sm:$0xff]
  %v83 = vld [vmem:[%s0 + $0x1f8] sm:$0xff]
  %v84 = vld [vmem:[%s1] sm:$0x1]
  %v86 = vlaneseq
  %v87 = vshrl.u32 %v86, 7
  %v88 = vsub.s32 0, %v87
  %v89 = vrot.slane %v84, %v88
  %v91 = vmul.f32 %v20, %v89
  %v92 = vmul.f32 %v21, %v89
  %v93 = vmul.f32 %v22, %v89
  %v94 = vmul.f32 %v23, %v89
  %v95 = vmul.f32 %v24, %v89
  %v96 = vmul.f32 %v25, %v89
  %v97 = vmul.f32 %v26, %v89
  %v98 = vmul.f32 %v27, %v89
  %v99 = vmul.f32 %v28, %v89
  %v100 = vmul.f32 %v29, %v89
  %v101 = vmul.f32 %v30, %v89
  %v102 = vmul.f32 %v31, %v89
  %v103 = vmul.f32 %v32, %v89
  %v104 = vmul.f32 %v33, %v89
  %v105 = vmul.f32 %v34, %v89
  %v106 = vmul.f32 %v35, %v89
  %v107 = vmul.f32 %v36, %v89
  %v108 = vmul.f32 %v37, %v89
  %v109 = vmul.f32 %v38, %v89
  %v110 = vmul.f32 %v39, %v89
  %v111 = vmul.f32 %v40, %v89
  %v112 = vmul.f32 %v41, %v89
  %v113 = vmul.f32 %v42, %v89
  %v114 = vmul.f32 %v43, %v89
  %v115 = vmul.f32 %v44, %v89
  %v116 = vmul.f32 %v45, %v89
  %v117 = vmul.f32 %v46, %v89
  %v118 = vmul.f32 %v47, %v89
  %v119 = vmul.f32 %v48, %v89
  %v120 = vmul.f32 %v49, %v89
  %v121 = vmul.f32 %v50, %v89
  %v122 = vmul.f32 %v51, %v89
  %v123 = vmul.f32 %v52, %v89
  %v124 = vmul.f32 %v53, %v89
  %v125 = vmul.f32 %v54, %v89
  %v126 = vmul.f32 %v55, %v89
  %v127 = vmul.f32 %v56, %v89
  %v128 = vmul.f32 %v57, %v89
  %v129 = vmul.f32 %v58, %v89
  %v130 = vmul.f32 %v59, %v89
  %v131 = vmul.f32 %v60, %v89
  %v132 = vmul.f32 %v61, %v89
  %v133 = vmul.f32 %v62, %v89
  %v134 = vmul.f32 %v63, %v89
  %v135 = vmul.f32 %v64, %v89
  %v136 = vmul.f32 %v65, %v89
  %v137 = vmul.f32 %v66, %v89
  %v138 = vmul.f32 %v67, %v89
  %v139 = vmul.f32 %v68, %v89
  %v140 = vmul.f32 %v69, %v89
  %v141 = vmul.f32 %v70, %v89
  %v142 = vmul.f32 %v71, %v89
  %v143 = vmul.f32 %v72, %v89
  %v144 = vmul.f32 %v73, %v89
  %v145 = vmul.f32 %v74, %v89
  %v146 = vmul.f32 %v75, %v89
  %v147 = vmul.f32 %v76, %v89
  %v148 = vmul.f32 %v77, %v89
  %v149 = vmul.f32 %v78, %v89
  %v150 = vmul.f32 %v79, %v89
  %v151 = vmul.f32 %v80, %v89
  %v152 = vmul.f32 %v81, %v89
  %v153 = vmul.f32 %v82, %v89
  %v154 = vmul.f32 %v83, %v89
  %v155 = vld [vmem:[%s2] sm:$0x1]
  %v157 = vlaneseq
  %v158 = vshrl.u32 %v157, 7
  %v159 = vsub.s32 0, %v158
  %v160 = vrot.slane %v155, %v159
  %v162 = vadd.f32 %v91, %v160
  %v163 = vadd.f32 %v92, %v160
  %v164 = vadd.f32 %v93, %v160
  %v165 = vadd.f32 %v94, %v160
  %v166 = vadd.f32 %v95, %v160
  %v167 = vadd.f32 %v96, %v160
  %v168 = vadd.f32 %v97, %v160
  %v169 = vadd.f32 %v98, %v160
  %v170 = vadd.f32 %v99, %v160
  %v171 = vadd.f32 %v100, %v160
  %v172 = vadd.f32 %v101, %v160
  %v173 = vadd.f32 %v102, %v160
  %v174 = vadd.f32 %v103, %v160
  %v175 = vadd.f32 %v104, %v160
  %v176 = vadd.f32 %v105, %v160
  %v177 = vadd.f32 %v106, %v160
  %v178 = vadd.f32 %v107, %v160
  %v179 = vadd.f32 %v108, %v160
  %v180 = vadd.f32 %v109, %v160
  %v181 = vadd.f32 %v110, %v160
  %v182 = vadd.f32 %v111, %v160
  %v183 = vadd.f32 %v112, %v160
  %v184 = vadd.f32 %v113, %v160
  %v185 = vadd.f32 %v114, %v160
  %v186 = vadd.f32 %v115, %v160
  %v187 = vadd.f32 %v116, %v160
  %v188 = vadd.f32 %v117, %v160
  %v189 = vadd.f32 %v118, %v160
  %v190 = vadd.f32 %v119, %v160
  %v191 = vadd.f32 %v120, %v160
  %v192 = vadd.f32 %v121, %v160
  %v193 = vadd.f32 %v122, %v160
  %v194 = vadd.f32 %v123, %v160
  %v195 = vadd.f32 %v124, %v160
  %v196 = vadd.f32 %v125, %v160
  %v197 = vadd.f32 %v126, %v160
  %v198 = vadd.f32 %v127, %v160
  %v199 = vadd.f32 %v128, %v160
  %v200 = vadd.f32 %v129, %v160
  %v201 = vadd.f32 %v130, %v160
  %v202 = vadd.f32 %v131, %v160
  %v203 = vadd.f32 %v132, %v160
  %v204 = vadd.f32 %v133, %v160
  %v205 = vadd.f32 %v134, %v160
  %v206 = vadd.f32 %v135, %v160
  %v207 = vadd.f32 %v136, %v160
  %v208 = vadd.f32 %v137, %v160
  %v209 = vadd.f32 %v138, %v160
  %v210 = vadd.f32 %v139, %v160
  %v211 = vadd.f32 %v140, %v160
  %v212 = vadd.f32 %v141, %v160
  %v213 = vadd.f32 %v142, %v160
  %v214 = vadd.f32 %v143, %v160
  %v215 = vadd.f32 %v144, %v160
  %v216 = vadd.f32 %v145, %v160
  %v217 = vadd.f32 %v146, %v160
  %v218 = vadd.f32 %v147, %v160
  %v219 = vadd.f32 %v148, %v160
  %v220 = vadd.f32 %v149, %v160
  %v221 = vadd.f32 %v150, %v160
  %v222 = vadd.f32 %v151, %v160
  %v223 = vadd.f32 %v152, %v160
  %v224 = vadd.f32 %v153, %v160
  %v225 = vadd.f32 %v154, %v160
  %v226 = vmax.f32 %v162, 0.0
  %v227 = vmax.f32 %v163, 0.0
  %v228 = vmax.f32 %v164, 0.0
  %v229 = vmax.f32 %v165, 0.0
  %v230 = vmax.f32 %v166, 0.0
  %v231 = vmax.f32 %v167, 0.0
  %v232 = vmax.f32 %v168, 0.0
  %v233 = vmax.f32 %v169, 0.0
  %v234 = vmax.f32 %v170, 0.0
  %v235 = vmax.f32 %v171, 0.0
  %v236 = vmax.f32 %v172, 0.0
  %v237 = vmax.f32 %v173, 0.0
  %v238 = vmax.f32 %v174, 0.0
  %v239 = vmax.f32 %v175, 0.0
  %v240 = vmax.f32 %v176, 0.0
  %v241 = vmax.f32 %v177, 0.0
  %v242 = vmax.f32 %v178, 0.0
  %v243 = vmax.f32 %v179, 0.0
  %v244 = vmax.f32 %v180, 0.0
  %v245 = vmax.f32 %v181, 0.0
  %v246 = vmax.f32 %v182, 0.0
  %v247 = vmax.f32 %v183, 0.0
  %v248 = vmax.f32 %v184, 0.0
  %v249 = vmax.f32 %v185, 0.0
  %v250 = vmax.f32 %v186, 0.0
  %v251 = vmax.f32 %v187, 0.0
  %v252 = vmax.f32 %v188, 0.0
  %v253 = vmax.f32 %v189, 0.0
  %v254 = vmax.f32 %v190, 0.0
  %v255 = vmax.f32 %v191, 0.0
  %v256 = vmax.f32 %v192, 0.0
  %v257 = vmax.f32 %v193, 0.0
  %v258 = vmax.f32 %v194, 0.0
  %v259 = vmax.f32 %v195, 0.0
  %v260 = vmax.f32 %v196, 0.0
  %v261 = vmax.f32 %v197, 0.0
  %v262 = vmax.f32 %v198, 0.0
  %v263 = vmax.f32 %v199, 0.0
  %v264 = vmax.f32 %v200, 0.0
  %v265 = vmax.f32 %v201, 0.0
  %v266 = vmax.f32 %v202, 0.0
  %v267 = vmax.f32 %v203, 0.0
  %v268 = vmax.f32 %v204, 0.0
  %v269 = vmax.f32 %v205, 0.0
  %v270 = vmax.f32 %v206, 0.0
  %v271 = vmax.f32 %v207, 0.0
  %v272 = vmax.f32 %v208, 0.0
  %v273 = vmax.f32 %v209, 0.0
  %v274 = vmax.f32 %v210, 0.0
  %v275 = vmax.f32 %v211, 0.0
  %v276 = vmax.f32 %v212, 0.0
  %v277 = vmax.f32 %v213, 0.0
  %v278 = vmax.f32 %v214, 0.0
  %v279 = vmax.f32 %v215, 0.0
  %v280 = vmax.f32 %v216, 0.0
  %v281 = vmax.f32 %v217, 0.0
  %v282 = vmax.f32 %v218, 0.0
  %v283 = vmax.f32 %v219, 0.0
  %v284 = vmax.f32 %v220, 0.0
  %v285 = vmax.f32 %v221, 0.0
  %v286 = vmax.f32 %v222, 0.0
  %v287 = vmax.f32 %v223, 0.0
  %v288 = vmax.f32 %v224, 0.0
  %v289 = vmax.f32 %v225, 0.0
  %v290 = vpack.c.bf16 %v227, %v226
  %v291 = vpack.c.bf16 %v229, %v228
  %v292 = vpack.c.bf16 %v231, %v230
  %v293 = vpack.c.bf16 %v233, %v232
  %v294 = vpack.c.bf16 %v235, %v234
  %v295 = vpack.c.bf16 %v237, %v236
  %v296 = vpack.c.bf16 %v239, %v238
  %v297 = vpack.c.bf16 %v241, %v240
  %v298 = vpack.c.bf16 %v243, %v242
  %v299 = vpack.c.bf16 %v245, %v244
  %v300 = vpack.c.bf16 %v247, %v246
  %v301 = vpack.c.bf16 %v249, %v248
  %v302 = vpack.c.bf16 %v251, %v250
  %v303 = vpack.c.bf16 %v253, %v252
  %v304 = vpack.c.bf16 %v255, %v254
  %v305 = vpack.c.bf16 %v257, %v256
  %v306 = vpack.c.bf16 %v259, %v258
  %v307 = vpack.c.bf16 %v261, %v260
  %v308 = vpack.c.bf16 %v263, %v262
  %v309 = vpack.c.bf16 %v265, %v264
  %v310 = vpack.c.bf16 %v267, %v266
  %v311 = vpack.c.bf16 %v269, %v268
  %v312 = vpack.c.bf16 %v271, %v270
  %v313 = vpack.c.bf16 %v273, %v272
  %v314 = vpack.c.bf16 %v275, %v274
  %v315 = vpack.c.bf16 %v277, %v276
  %v316 = vpack.c.bf16 %v279, %v278
  %v317 = vpack.c.bf16 %v281, %v280
  %v318 = vpack.c.bf16 %v283, %v282
  %v319 = vpack.c.bf16 %v285, %v284
  %v320 = vpack.c.bf16 %v287, %v286
  %v321 = vpack.c.bf16 %v289, %v288
  %v322 = vld [vmem:[%s3] sm:$0x3]
  %vm323 = vcmask 31744
  %v325 = vsel %vm323, %v290, 0
  %v328 = vsel %vm323, %v291, 0
  %v331 = vsel %vm323, %v292, 0
  %v334 = vsel %vm323, %v293, 0
  %v337 = vsel %vm323, %v294, 0
  %v340 = vsel %vm323, %v295, 0
  %v343 = vsel %vm323, %v296, 0
  %v346 = vsel %vm323, %v297, 0
  %v349 = vsel %vm323, %v298, 0
  %v352 = vsel %vm323, %v299, 0
  %v355 = vsel %vm323, %v300, 0
  %v358 = vsel %vm323, %v301, 0
  %v361 = vsel %vm323, %v302, 0
  %v364 = vsel %vm323, %v303, 0
  %v367 = vsel %vm323, %v304, 0
  %v370 = vsel %vm323, %v305, 0
  %v373 = vsel %vm323, %v306, 0
  %v376 = vsel %vm323, %v307, 0
  %v379 = vsel %vm323, %v308, 0
  %v382 = vsel %vm323, %v309, 0
  %v385 = vsel %vm323, %v310, 0
  %v388 = vsel %vm323, %v311, 0
  %v391 = vsel %vm323, %v312, 0
  %v394 = vsel %vm323, %v313, 0
  %v397 = vsel %vm323, %v314, 0
  %v400 = vsel %vm323, %v315, 0
  %v403 = vsel %vm323, %v316, 0
  %v406 = vsel %vm323, %v317, 0
  %v409 = vsel %vm323, %v318, 0
  %v412 = vsel %vm323, %v319, 0
  %v415 = vsel %vm323, %v320, 0
  %v418 = vsel %vm323, %v321, 0
  %vm420 = vcmask 1041408
  %v422 = vsel %vm420, %v322, 0
  %424 = vmatprep.subr.bf16.mxu0 0
  %425 = vmatpush1.bf16.msra.mxu0 0
  %426 = vmatprep.subr.bf16.mxu0 0
  %427 = vmatpush1.bf16.msra.mxu0 0
  %428 = vmatprep.subr.bf16.mxu0 0
  %429 = vmatpush1.bf16.msra.mxu0 0
  %430 = vmatprep.subr.bf16.mxu0 0
  %431 = vmatpush1.bf16.msra.mxu0 0
  %432 = vmatprep.subr.bf16.mxu0 0
  %433 = vmatpush1.bf16.msra.mxu0 0
  %434 = vmatprep.subr.bf16.mxu0 0
  %435 = vmatpush1.bf16.msra.mxu0 0
  %436 = vmatprep.subr.bf16.mxu0 0
  %437 = vmatpush1.bf16.msra.mxu0 0
  %438 = vmatprep.subr.bf16.mxu0 0
  %439 = vmatpush1.bf16.msra.mxu0 %v422
  %440 = vmatprep.subr.bf16.mxu0 0
  %441 = vmatpush2.bf16.msra.mxu0 0
  %442 = vmatprep.subr.bf16.mxu0 0
  %443 = vmatpush2.bf16.msra.mxu0 0
  %444 = vmatprep.subr.bf16.mxu0 0
  %445 = vmatpush2.bf16.msra.mxu0 0
  %446 = vmatprep.subr.bf16.mxu0 0
  %447 = vmatpush2.bf16.msra.mxu0 0
  %448 = vmatprep.subr.bf16.mxu0 0
  %449 = vmatpush2.bf16.msra.mxu0 0
  %450 = vmatprep.subr.bf16.mxu0 0
  %451 = vmatpush2.bf16.msra.mxu0 0
  %452 = vmatprep.subr.bf16.mxu0 0
  %453 = vmatpush2.bf16.msra.mxu0 0
  %454 = vmatprep.subr.bf16.mxu0 0
  %455 = vmatpush2.bf16.msra.mxu0 0
  %456 = vmatprep.mubr.bf16.mxu0 0
  %457 = vmatmul.mubr.bf16.gmra.mxu0 %v325
  %v458 = vpop.f32.mrf.mxu0
  %v459 = vadd.f32 0.0, %v458
  %v460 = vpop.f32.mrf.mxu0
  %v461 = vpop.f32.mrf.mxu0
  %v462 = vadd.f32 0.0, %v461
  %v463 = vpop.f32.mrf.mxu0
  %464 = vmatprep.mubr.bf16.mxu0 0
  %465 = vmatmul.mubr.bf16.gmra.mxu0 %v328
  %v466 = vpop.f32.mrf.mxu0
  %v467 = vadd.f32 0.0, %v466
  %v468 = vpop.f32.mrf.mxu0
  %v469 = vpop.f32.mrf.mxu0
  %v470 = vadd.f32 0.0, %v469
  %v471 = vpop.f32.mrf.mxu0
  %472 = vmatprep.mubr.bf16.mxu0 0
  %473 = vmatmul.mubr.bf16.gmra.mxu0 %v331
  %v474 = vpop.f32.mrf.mxu0
  %v475 = vadd.f32 0.0, %v474
  %v476 = vpop.f32.mrf.mxu0
  %v477 = vpop.f32.mrf.mxu0
  %v478 = vadd.f32 0.0, %v477
  %v479 = vpop.f32.mrf.mxu0
  %480 = vmatprep.mubr.bf16.mxu0 0
  %481 = vmatmul.mubr.bf16.gmra.mxu0 %v334
  %v482 = vpop.f32.mrf.mxu0
  %v483 = vadd.f32 0.0, %v482
  %v484 = vpop.f32.mrf.mxu0
  %v485 = vpop.f32.mrf.mxu0
  %v486 = vadd.f32 0.0, %v485
  %v487 = vpop.f32.mrf.mxu0
  %488 = vmatprep.mubr.bf16.mxu0 0
  %489 = vmatmul.mubr.bf16.gmra.mxu0 %v337
  %v490 = vpop.f32.mrf.mxu0
  %v491 = vadd.f32 0.0, %v490
  %v492 = vpop.f32.mrf.mxu0
  %v493 = vpop.f32.mrf.mxu0
  %v494 = vadd.f32 0.0, %v493
  %v495 = vpop.f32.mrf.mxu0
  %496 = vmatprep.mubr.bf16.mxu0 0
  %497 = vmatmul.mubr.bf16.gmra.mxu0 %v340
  %v498 = vpop.f32.mrf.mxu0
  %v499 = vadd.f32 0.0, %v498
  %v500 = vpop.f32.mrf.mxu0
  %v501 = vpop.f32.mrf.mxu0
  %v502 = vadd.f32 0.0, %v501
  %v503 = vpop.f32.mrf.mxu0
  %504 = vmatprep.mubr.bf16.mxu0 0
  %505 = vmatmul.mubr.bf16.gmra.mxu0 %v343
  %v506 = vpop.f32.mrf.mxu0
  %v507 = vadd.f32 0.0, %v506
  %v508 = vpop.f32.mrf.mxu0
  %v509 = vpop.f32.mrf.mxu0
  %v510 = vadd.f32 0.0, %v509
  %v511 = vpop.f32.mrf.mxu0
  %512 = vmatprep.mubr.bf16.mxu0 0
  %513 = vmatmul.mubr.bf16.gmra.mxu0 %v346
  %v514 = vpop.f32.mrf.mxu0
  %v515 = vadd.f32 0.0, %v514
  %v516 = vpop.f32.mrf.mxu0
  %v517 = vpop.f32.mrf.mxu0
  %v518 = vadd.f32 0.0, %v517
  %v519 = vpop.f32.mrf.mxu0
  %520 = vmatprep.mubr.bf16.mxu0 0
  %521 = vmatmul.mubr.bf16.gmra.mxu0 %v349
  %v522 = vpop.f32.mrf.mxu0
  %v523 = vadd.f32 0.0, %v522
  %v524 = vpop.f32.mrf.mxu0
  %v525 = vpop.f32.mrf.mxu0
  %v526 = vadd.f32 0.0, %v525
  %v527 = vpop.f32.mrf.mxu0
  %528 = vmatprep.mubr.bf16.mxu0 0
  %529 = vmatmul.mubr.bf16.gmra.mxu0 %v352
  %v530 = vpop.f32.mrf.mxu0
  %v531 = vadd.f32 0.0, %v530
  %v532 = vpop.f32.mrf.mxu0
  %v533 = vpop.f32.mrf.mxu0
  %v534 = vadd.f32 0.0, %v533
  %v535 = vpop.f32.mrf.mxu0
  %536 = vmatprep.mubr.bf16.mxu0 0
  %537 = vmatmul.mubr.bf16.gmra.mxu0 %v355
  %v538 = vpop.f32.mrf.mxu0
  %v539 = vadd.f32 0.0, %v538
  %v540 = vpop.f32.mrf.mxu0
  %v541 = vpop.f32.mrf.mxu0
  %v542 = vadd.f32 0.0, %v541
  %v543 = vpop.f32.mrf.mxu0
  %544 = vmatprep.mubr.bf16.mxu0 0
  %545 = vmatmul.mubr.bf16.gmra.mxu0 %v358
  %v546 = vpop.f32.mrf.mxu0
  %v547 = vadd.f32 0.0, %v546
  %v548 = vpop.f32.mrf.mxu0
  %v549 = vpop.f32.mrf.mxu0
  %v550 = vadd.f32 0.0, %v549
  %v551 = vpop.f32.mrf.mxu0
  %552 = vmatprep.mubr.bf16.mxu0 0
  %553 = vmatmul.mubr.bf16.gmra.mxu0 %v361
  %v554 = vpop.f32.mrf.mxu0
  %v555 = vadd.f32 0.0, %v554
  %v556 = vpop.f32.mrf.mxu0
  %v557 = vpop.f32.mrf.mxu0
  %v558 = vadd.f32 0.0, %v557
  %v559 = vpop.f32.mrf.mxu0
  %560 = vmatprep.mubr.bf16.mxu0 0
  %561 = vmatmul.mubr.bf16.gmra.mxu0 %v364
  %v562 = vpop.f32.mrf.mxu0
  %v563 = vadd.f32 0.0, %v562
  %v564 = vpop.f32.mrf.mxu0
  %v565 = vpop.f32.mrf.mxu0
  %v566 = vadd.f32 0.0, %v565
  %v567 = vpop.f32.mrf.mxu0
  %568 = vmatprep.mubr.bf16.mxu0 0
  %569 = vmatmul.mubr.bf16.gmra.mxu0 %v367
  %v570 = vpop.f32.mrf.mxu0
  %v571 = vadd.f32 0.0, %v570
  %v572 = vpop.f32.mrf.mxu0
  %v573 = vpop.f32.mrf.mxu0
  %v574 = vadd.f32 0.0, %v573
  %v575 = vpop.f32.mrf.mxu0
  %576 = vmatprep.mubr.bf16.mxu0 0
  %577 = vmatmul.mubr.bf16.gmra.mxu0 %v370
  %v578 = vpop.f32.mrf.mxu0
  %v579 = vadd.f32 0.0, %v578
  %v580 = vpop.f32.mrf.mxu0
  %v581 = vpop.f32.mrf.mxu0
  %v582 = vadd.f32 0.0, %v581
  %v583 = vpop.f32.mrf.mxu0
  %584 = vmatprep.mubr.bf16.mxu0 0
  %585 = vmatmul.mubr.bf16.gmra.mxu0 %v373
  %v586 = vpop.f32.mrf.mxu0
  %v587 = vadd.f32 0.0, %v586
  %v588 = vpop.f32.mrf.mxu0
  %v589 = vpop.f32.mrf.mxu0
  %v590 = vadd.f32 0.0, %v589
  %v591 = vpop.f32.mrf.mxu0
  %592 = vmatprep.mubr.bf16.mxu0 0
  %593 = vmatmul.mubr.bf16.gmra.mxu0 %v376
  %v594 = vpop.f32.mrf.mxu0
  %v595 = vadd.f32 0.0, %v594
  %v596 = vpop.f32.mrf.mxu0
  %v597 = vpop.f32.mrf.mxu0
  %v598 = vadd.f32 0.0, %v597
  %v599 = vpop.f32.mrf.mxu0
  %600 = vmatprep.mubr.bf16.mxu0 0
  %601 = vmatmul.mubr.bf16.gmra.mxu0 %v379
  %v602 = vpop.f32.mrf.mxu0
  %v603 = vadd.f32 0.0, %v602
  %v604 = vpop.f32.mrf.mxu0
  %v605 = vpop.f32.mrf.mxu0
  %v606 = vadd.f32 0.0, %v605
  %v607 = vpop.f32.mrf.mxu0
  %608 = vmatprep.mubr.bf16.mxu0 0
  %609 = vmatmul.mubr.bf16.gmra.mxu0 %v382
  %v610 = vpop.f32.mrf.mxu0
  %v611 = vadd.f32 0.0, %v610
  %v612 = vpop.f32.mrf.mxu0
  %v613 = vpop.f32.mrf.mxu0
  %v614 = vadd.f32 0.0, %v613
  %v615 = vpop.f32.mrf.mxu0
  %616 = vmatprep.mubr.bf16.mxu0 0
  %617 = vmatmul.mubr.bf16.gmra.mxu0 %v385
  %v618 = vpop.f32.mrf.mxu0
  %v619 = vadd.f32 0.0, %v618
  %v620 = vpop.f32.mrf.mxu0
  %v621 = vpop.f32.mrf.mxu0
  %v622 = vadd.f32 0.0, %v621
  %v623 = vpop.f32.mrf.mxu0
  %624 = vmatprep.mubr.bf16.mxu0 0
  %625 = vmatmul.mubr.bf16.gmra.mxu0 %v388
  %v626 = vpop.f32.mrf.mxu0
  %v627 = vadd.f32 0.0, %v626
  %v628 = vpop.f32.mrf.mxu0
  %v629 = vpop.f32.mrf.mxu0
  %v630 = vadd.f32 0.0, %v629
  %v631 = vpop.f32.mrf.mxu0
  %632 = vmatprep.mubr.bf16.mxu0 0
  %633 = vmatmul.mubr.bf16.gmra.mxu0 %v391
  %v634 = vpop.f32.mrf.mxu0
  %v635 = vadd.f32 0.0, %v634
  %v636 = vpop.f32.mrf.mxu0
  %v637 = vpop.f32.mrf.mxu0
  %v638 = vadd.f32 0.0, %v637
  %v639 = vpop.f32.mrf.mxu0
  %640 = vmatprep.mubr.bf16.mxu0 0
  %641 = vmatmul.mubr.bf16.gmra.mxu0 %v394
  %v642 = vpop.f32.mrf.mxu0
  %v643 = vadd.f32 0.0, %v642
  %v644 = vpop.f32.mrf.mxu0
  %v645 = vpop.f32.mrf.mxu0
  %v646 = vadd.f32 0.0, %v645
  %v647 = vpop.f32.mrf.mxu0
  %648 = vmatprep.mubr.bf16.mxu0 0
  %649 = vmatmul.mubr.bf16.gmra.mxu0 %v397
  %v650 = vpop.f32.mrf.mxu0
  %v651 = vadd.f32 0.0, %v650
  %v652 = vpop.f32.mrf.mxu0
  %v653 = vpop.f32.mrf.mxu0
  %v654 = vadd.f32 0.0, %v653
  %v655 = vpop.f32.mrf.mxu0
  %656 = vmatprep.mubr.bf16.mxu0 0
  %657 = vmatmul.mubr.bf16.gmra.mxu0 %v400
  %v658 = vpop.f32.mrf.mxu0
  %v659 = vadd.f32 0.0, %v658
  %v660 = vpop.f32.mrf.mxu0
  %v661 = vpop.f32.mrf.mxu0
  %v662 = vadd.f32 0.0, %v661
  %v663 = vpop.f32.mrf.mxu0
  %664 = vmatprep.mubr.bf16.mxu0 0
  %665 = vmatmul.mubr.bf16.gmra.mxu0 %v403
  %v666 = vpop.f32.mrf.mxu0
  %v667 = vadd.f32 0.0, %v666
  %v668 = vpop.f32.mrf.mxu0
  %v669 = vpop.f32.mrf.mxu0
  %v670 = vadd.f32 0.0, %v669
  %v671 = vpop.f32.mrf.mxu0
  %672 = vmatprep.mubr.bf16.mxu0 0
  %673 = vmatmul.mubr.bf16.gmra.mxu0 %v406
  %v674 = vpop.f32.mrf.mxu0
  %v675 = vadd.f32 0.0, %v674
  %v676 = vpop.f32.mrf.mxu0
  %v677 = vpop.f32.mrf.mxu0
  %v678 = vadd.f32 0.0, %v677
  %v679 = vpop.f32.mrf.mxu0
  %680 = vmatprep.mubr.bf16.mxu0 0
  %681 = vmatmul.mubr.bf16.gmra.mxu0 %v409
  %v682 = vpop.f32.mrf.mxu0
  %v683 = vadd.f32 0.0, %v682
  %v684 = vpop.f32.mrf.mxu0
  %v685 = vpop.f32.mrf.mxu0
  %v686 = vadd.f32 0.0, %v685
  %v687 = vpop.f32.mrf.mxu0
  %688 = vmatprep.mubr.bf16.mxu0 0
  %689 = vmatmul.mubr.bf16.gmra.mxu0 %v412
  %v690 = vpop.f32.mrf.mxu0
  %v691 = vadd.f32 0.0, %v690
  %v692 = vpop.f32.mrf.mxu0
  %v693 = vpop.f32.mrf.mxu0
  %v694 = vadd.f32 0.0, %v693
  %v695 = vpop.f32.mrf.mxu0
  %696 = vmatprep.mubr.bf16.mxu0 0
  %697 = vmatmul.mubr.bf16.gmra.mxu0 %v415
  %v698 = vpop.f32.mrf.mxu0
  %v699 = vadd.f32 0.0, %v698
  %v700 = vpop.f32.mrf.mxu0
  %v701 = vpop.f32.mrf.mxu0
  %v702 = vadd.f32 0.0, %v701
  %v703 = vpop.f32.mrf.mxu0
  %704 = vmatprep.mubr.bf16.mxu0 0
  %705 = vmatmul.mubr.bf16.gmra.mxu0 %v418
  %v706 = vpop.f32.mrf.mxu0
  %v707 = vadd.f32 0.0, %v706
  %v708 = vpop.f32.mrf.mxu0
  %v709 = vpop.f32.mrf.mxu0
  %v710 = vadd.f32 0.0, %v709
  %v711 = vpop.f32.mrf.mxu0
  %712 = vdwg.mxu0
  %v713 = vpack.c.bf16 %v462, %v459
  %v714 = vpack.c.bf16 %v470, %v467
  %v715 = vpack.c.bf16 %v478, %v475
  %v716 = vpack.c.bf16 %v486, %v483
  %v717 = vpack.c.bf16 %v494, %v491
  %v718 = vpack.c.bf16 %v502, %v499
  %v719 = vpack.c.bf16 %v510, %v507
  %v720 = vpack.c.bf16 %v518, %v515
  %v721 = vpack.c.bf16 %v526, %v523
  %v722 = vpack.c.bf16 %v534, %v531
  %v723 = vpack.c.bf16 %v542, %v539
  %v724 = vpack.c.bf16 %v550, %v547
  %v725 = vpack.c.bf16 %v558, %v555
  %v726 = vpack.c.bf16 %v566, %v563
  %v727 = vpack.c.bf16 %v574, %v571
  %v728 = vpack.c.bf16 %v582, %v579
  %v729 = vpack.c.bf16 %v590, %v587
  %v730 = vpack.c.bf16 %v598, %v595
  %v731 = vpack.c.bf16 %v606, %v603
  %v732 = vpack.c.bf16 %v614, %v611
  %v733 = vpack.c.bf16 %v622, %v619
  %v734 = vpack.c.bf16 %v630, %v627
  %v735 = vpack.c.bf16 %v638, %v635
  %v736 = vpack.c.bf16 %v646, %v643
  %v737 = vpack.c.bf16 %v654, %v651
  %v738 = vpack.c.bf16 %v662, %v659
  %v739 = vpack.c.bf16 %v670, %v667
  %v740 = vpack.c.bf16 %v678, %v675
  %v741 = vpack.c.bf16 %v686, %v683
  %v742 = vpack.c.bf16 %v694, %v691
  %v743 = vpack.c.bf16 %v702, %v699
  %v744 = vpack.c.bf16 %v710, %v707
  %v777 = vunpack.c.l.b16 %v713
  %v778 = vunpack.c.h.b16 %v713
  %v779 = vunpack.c.l.b16 %v714
  %v780 = vunpack.c.h.b16 %v714
  %v781 = vunpack.c.l.b16 %v715
  %v782 = vunpack.c.h.b16 %v715
  %v783 = vunpack.c.l.b16 %v716
  %v784 = vunpack.c.h.b16 %v716
  %v785 = vunpack.c.l.b16 %v717
  %v786 = vunpack.c.h.b16 %v717
  %v787 = vunpack.c.l.b16 %v718
  %v788 = vunpack.c.h.b16 %v718
  %v789 = vunpack.c.l.b16 %v719
  %v790 = vunpack.c.h.b16 %v719
  %v791 = vunpack.c.l.b16 %v720
  %v792 = vunpack.c.h.b16 %v720
  %v793 = vunpack.c.l.b16 %v721
  %v794 = vunpack.c.h.b16 %v721
  %v795 = vunpack.c.l.b16 %v722
  %v796 = vunpack.c.h.b16 %v722
  %v797 = vunpack.c.l.b16 %v723
  %v798 = vunpack.c.h.b16 %v723
  %v799 = vunpack.c.l.b16 %v724
  %v800 = vunpack.c.h.b16 %v724
  %v801 = vunpack.c.l.b16 %v725
  %v802 = vunpack.c.h.b16 %v725
  %v803 = vunpack.c.l.b16 %v726
  %v804 = vunpack.c.h.b16 %v726
  %v805 = vunpack.c.l.b16 %v727
  %v806 = vunpack.c.h.b16 %v727
  %v807 = vunpack.c.l.b16 %v728
  %v808 = vunpack.c.h.b16 %v728
  %v809 = vunpack.c.l.b16 %v729
  %v810 = vunpack.c.h.b16 %v729
  %v811 = vunpack.c.l.b16 %v730
  %v812 = vunpack.c.h.b16 %v730
  %v813 = vunpack.c.l.b16 %v731
  %v814 = vunpack.c.h.b16 %v731
  %v815 = vunpack.c.l.b16 %v732
  %v816 = vunpack.c.h.b16 %v732
  %v817 = vunpack.c.l.b16 %v733
  %v818 = vunpack.c.h.b16 %v733
  %v819 = vunpack.c.l.b16 %v734
  %v820 = vunpack.c.h.b16 %v734
  %v821 = vunpack.c.l.b16 %v735
  %v822 = vunpack.c.h.b16 %v735
  %v823 = vunpack.c.l.b16 %v736
  %v824 = vunpack.c.h.b16 %v736
  %v825 = vunpack.c.l.b16 %v737
  %v826 = vunpack.c.h.b16 %v737
  %v827 = vunpack.c.l.b16 %v738
  %v828 = vunpack.c.h.b16 %v738
  %v829 = vunpack.c.l.b16 %v739
  %v830 = vunpack.c.h.b16 %v739
  %v831 = vunpack.c.l.b16 %v740
  %v832 = vunpack.c.h.b16 %v740
  %v833 = vunpack.c.l.b16 %v741
  %v834 = vunpack.c.h.b16 %v741
  %v835 = vunpack.c.l.b16 %v742
  %v836 = vunpack.c.h.b16 %v742
  %v837 = vunpack.c.l.b16 %v743
  %v838 = vunpack.c.h.b16 %v743
  %v839 = vunpack.c.l.b16 %v744
  %v840 = vunpack.c.h.b16 %v744
  %v841 = vpack.c.b16 %v777, %v777
  %v842 = vpack.c.b16 %v778, %v778
  %v843 = vpack.c.b16 %v779, %v779
  %v844 = vpack.c.b16 %v780, %v780
  %v845 = vpack.c.b16 %v781, %v781
  %v846 = vpack.c.b16 %v782, %v782
  %v847 = vpack.c.b16 %v783, %v783
  %v848 = vpack.c.b16 %v784, %v784
  %v849 = vpack.c.b16 %v785, %v785
  %v850 = vpack.c.b16 %v786, %v786
  %v851 = vpack.c.b16 %v787, %v787
  %v852 = vpack.c.b16 %v788, %v788
  %v853 = vpack.c.b16 %v789, %v789
  %v854 = vpack.c.b16 %v790, %v790
  %v855 = vpack.c.b16 %v791, %v791
  %v856 = vpack.c.b16 %v792, %v792
  %v857 = vpack.c.b16 %v793, %v793
  %v858 = vpack.c.b16 %v794, %v794
  %v859 = vpack.c.b16 %v795, %v795
  %v860 = vpack.c.b16 %v796, %v796
  %v861 = vpack.c.b16 %v797, %v797
  %v862 = vpack.c.b16 %v798, %v798
  %v863 = vpack.c.b16 %v799, %v799
  %v864 = vpack.c.b16 %v800, %v800
  %v865 = vpack.c.b16 %v801, %v801
  %v866 = vpack.c.b16 %v802, %v802
  %v867 = vpack.c.b16 %v803, %v803
  %v868 = vpack.c.b16 %v804, %v804
  %v869 = vpack.c.b16 %v805, %v805
  %v870 = vpack.c.b16 %v806, %v806
  %v871 = vpack.c.b16 %v807, %v807
  %v872 = vpack.c.b16 %v808, %v808
  %v873 = vpack.c.b16 %v809, %v809
  %v874 = vpack.c.b16 %v810, %v810
  %v875 = vpack.c.b16 %v811, %v811
  %v876 = vpack.c.b16 %v812, %v812
  %v877 = vpack.c.b16 %v813, %v813
  %v878 = vpack.c.b16 %v814, %v814
  %v879 = vpack.c.b16 %v815, %v815
  %v880 = vpack.c.b16 %v816, %v816
  %v881 = vpack.c.b16 %v817, %v817
  %v882 = vpack.c.b16 %v818, %v818
  %v883 = vpack.c.b16 %v819, %v819
  %v884 = vpack.c.b16 %v820, %v820
  %v885 = vpack.c.b16 %v821, %v821
  %v886 = vpack.c.b16 %v822, %v822
  %v887 = vpack.c.b16 %v823, %v823
  %v888 = vpack.c.b16 %v824, %v824
  %v889 = vpack.c.b16 %v825, %v825
  %v890 = vpack.c.b16 %v826, %v826
  %v891 = vpack.c.b16 %v827, %v827
  %v892 = vpack.c.b16 %v828, %v828
  %v893 = vpack.c.b16 %v829, %v829
  %v894 = vpack.c.b16 %v830, %v830
  %v895 = vpack.c.b16 %v831, %v831
  %v896 = vpack.c.b16 %v832, %v832
  %v897 = vpack.c.b16 %v833, %v833
  %v898 = vpack.c.b16 %v834, %v834
  %v899 = vpack.c.b16 %v835, %v835
  %v900 = vpack.c.b16 %v836, %v836
  %v901 = vpack.c.b16 %v837, %v837
  %v902 = vpack.c.b16 %v838, %v838
  %v903 = vpack.c.b16 %v839, %v839
  %v904 = vpack.c.b16 %v840, %v840
  %vm969 = vcmask 257024
  %970 = vst.msk [vmem:[%s4] sm:$0xf] %vm969, %v841
  %971 = vst.msk [vmem:[%s4 + $0x4] sm:$0xf] %vm969, %v842
  %972 = vst.msk [vmem:[%s4 + $0x8] sm:$0xf] %vm969, %v843
  %973 = vst.msk [vmem:[%s4 + $0xc] sm:$0xf] %vm969, %v844
  %974 = vst.msk [vmem:[%s4 + $0x10] sm:$0xf] %vm969, %v845
  %975 = vst.msk [vmem:[%s4 + $0x14] sm:$0xf] %vm969, %v846
  %976 = vst.msk [vmem:[%s4 + $0x18] sm:$0xf] %vm969, %v847
  %977 = vst.msk [vmem:[%s4 + $0x1c] sm:$0xf] %vm969, %v848
  %978 = vst.msk [vmem:[%s4 + $0x20] sm:$0xf] %vm969, %v849
  %979 = vst.msk [vmem:[%s4 + $0x24] sm:$0xf] %vm969, %v850
  %980 = vst.msk [vmem:[%s4 + $0x28] sm:$0xf] %vm969, %v851
  %981 = vst.msk [vmem:[%s4 + $0x2c] sm:$0xf] %vm969, %v852
  %982 = vst.msk [vmem:[%s4 + $0x30] sm:$0xf] %vm969, %v853
  %983 = vst.msk [vmem:[%s4 + $0x34] sm:$0xf] %vm969, %v854
  %984 = vst.msk [vmem:[%s4 + $0x38] sm:$0xf] %vm969, %v855
  %985 = vst.msk [vmem:[%s4 + $0x3c] sm:$0xf] %vm969, %v856
  %986 = vst.msk [vmem:[%s4 + $0x40] sm:$0xf] %vm969, %v857
  %987 = vst.msk [vmem:[%s4 + $0x44] sm:$0xf] %vm969, %v858
  %988 = vst.msk [vmem:[%s4 + $0x48] sm:$0xf] %vm969, %v859
  %989 = vst.msk [vmem:[%s4 + $0x4c] sm:$0xf] %vm969, %v860
  %990 = vst.msk [vmem:[%s4 + $0x50] sm:$0xf] %vm969, %v861
  %991 = vst.msk [vmem:[%s4 + $0x54] sm:$0xf] %vm969, %v862
  %992 = vst.msk [vmem:[%s4 + $0x58] sm:$0xf] %vm969, %v863
  %993 = vst.msk [vmem:[%s4 + $0x5c] sm:$0xf] %vm969, %v864
  %994 = vst.msk [vmem:[%s4 + $0x60] sm:$0xf] %vm969, %v865
  %995 = vst.msk [vmem:[%s4 + $0x64] sm:$0xf] %vm969, %v866
  %996 = vst.msk [vmem:[%s4 + $0x68] sm:$0xf] %vm969, %v867
  %997 = vst.msk [vmem:[%s4 + $0x6c] sm:$0xf] %vm969, %v868
  %998 = vst.msk [vmem:[%s4 + $0x70] sm:$0xf] %vm969, %v869
  %999 = vst.msk [vmem:[%s4 + $0x74] sm:$0xf] %vm969, %v870
  %1000 = vst.msk [vmem:[%s4 + $0x78] sm:$0xf] %vm969, %v871
  %1001 = vst.msk [vmem:[%s4 + $0x7c] sm:$0xf] %vm969, %v872
  %1002 = vst.msk [vmem:[%s4 + $0x80] sm:$0xf] %vm969, %v873
  %1003 = vst.msk [vmem:[%s4 + $0x84] sm:$0xf] %vm969, %v874
  %1004 = vst.msk [vmem:[%s4 + $0x88] sm:$0xf] %vm969, %v875
  %1005 = vst.msk [vmem:[%s4 + $0x8c] sm:$0xf] %vm969, %v876
  %1006 = vst.msk [vmem:[%s4 + $0x90] sm:$0xf] %vm969, %v877
  %1007 = vst.msk [vmem:[%s4 + $0x94] sm:$0xf] %vm969, %v878
  %1008 = vst.msk [vmem:[%s4 + $0x98] sm:$0xf] %vm969, %v879
  %1009 = vst.msk [vmem:[%s4 + $0x9c] sm:$0xf] %vm969, %v880
  %1010 = vst.msk [vmem:[%s4 + $0xa0] sm:$0xf] %vm969, %v881
  %1011 = vst.msk [vmem:[%s4 + $0xa4] sm:$0xf] %vm969, %v882
  %1012 = vst.msk [vmem:[%s4 + $0xa8] sm:$0xf] %vm969, %v883
  %1013 = vst.msk [vmem:[%s4 + $0xac] sm:$0xf] %vm969, %v884
  %1014 = vst.msk [vmem:[%s4 + $0xb0] sm:$0xf] %vm969, %v885
  %1015 = vst.msk [vmem:[%s4 + $0xb4] sm:$0xf] %vm969, %v886
  %1016 = vst.msk [vmem:[%s4 + $0xb8] sm:$0xf] %vm969, %v887
  %1017 = vst.msk [vmem:[%s4 + $0xbc] sm:$0xf] %vm969, %v888
  %1018 = vst.msk [vmem:[%s4 + $0xc0] sm:$0xf] %vm969, %v889
  %1019 = vst.msk [vmem:[%s4 + $0xc4] sm:$0xf] %vm969, %v890
  %1020 = vst.msk [vmem:[%s4 + $0xc8] sm:$0xf] %vm969, %v891
  %1021 = vst.msk [vmem:[%s4 + $0xcc] sm:$0xf] %vm969, %v892
  %1022 = vst.msk [vmem:[%s4 + $0xd0] sm:$0xf] %vm969, %v893
  %1023 = vst.msk [vmem:[%s4 + $0xd4] sm:$0xf] %vm969, %v894
  %1024 = vst.msk [vmem:[%s4 + $0xd8] sm:$0xf] %vm969, %v895
  %1025 = vst.msk [vmem:[%s4 + $0xdc] sm:$0xf] %vm969, %v896
  %1026 = vst.msk [vmem:[%s4 + $0xe0] sm:$0xf] %vm969, %v897
  %1027 = vst.msk [vmem:[%s4 + $0xe4] sm:$0xf] %vm969, %v898
  %1028 = vst.msk [vmem:[%s4 + $0xe8] sm:$0xf] %vm969, %v899
  %1029 = vst.msk [vmem:[%s4 + $0xec] sm:$0xf] %vm969, %v900
  %1030 = vst.msk [vmem:[%s4 + $0xf0] sm:$0xf] %vm969, %v901
  %1031 = vst.msk [vmem:[%s4 + $0xf4] sm:$0xf] %vm969, %v902
  %1032 = vst.msk [vmem:[%s4 + $0xf8] sm:$0xf] %vm969, %v903
  %1033 = vst.msk [vmem:[%s4 + $0xfc] sm:$0xf] %vm969, %v904
  %vm1034 = vcmask 261120
  %v1035 = vsel %vm1034, %v459, 0.0
  %v1036 = vsel %vm1034, %v462, 0.0
  %v1037 = vadd.f32 %v1035, %v1036
  %v1038 = vsel %vm1034, %v467, 0.0
  %v1039 = vadd.f32 %v1037, %v1038
  %v1040 = vsel %vm1034, %v470, 0.0
  %v1041 = vadd.f32 %v1039, %v1040
  %v1042 = vsel %vm1034, %v475, 0.0
  %v1043 = vadd.f32 %v1041, %v1042
  %v1044 = vsel %vm1034, %v478, 0.0
  %v1045 = vadd.f32 %v1043, %v1044
  %v1046 = vsel %vm1034, %v483, 0.0
  %v1047 = vadd.f32 %v1045, %v1046
  %v1048 = vsel %vm1034, %v486, 0.0
  %v1049 = vadd.f32 %v1047, %v1048
  %v1050 = vsel %vm1034, %v491, 0.0
  %v1051 = vadd.f32 %v1049, %v1050
  %v1052 = vsel %vm1034, %v494, 0.0
  %v1053 = vadd.f32 %v1051, %v1052
  %v1054 = vsel %vm1034, %v499, 0.0
  %v1055 = vadd.f32 %v1053, %v1054
  %v1056 = vsel %vm1034, %v502, 0.0
  %v1057 = vadd.f32 %v1055, %v1056
  %v1058 = vsel %vm1034, %v507, 0.0
  %v1059 = vadd.f32 %v1057, %v1058
  %v1060 = vsel %vm1034, %v510, 0.0
  %v1061 = vadd.f32 %v1059, %v1060
  %v1062 = vsel %vm1034, %v515, 0.0
  %v1063 = vadd.f32 %v1061, %v1062
  %v1064 = vsel %vm1034, %v518, 0.0
  %v1065 = vadd.f32 %v1063, %v1064
  %v1066 = vsel %vm1034, %v523, 0.0
  %v1067 = vadd.f32 %v1065, %v1066
  %v1068 = vsel %vm1034, %v526, 0.0
  %v1069 = vadd.f32 %v1067, %v1068
  %v1070 = vsel %vm1034, %v531, 0.0
  %v1071 = vadd.f32 %v1069, %v1070
  %v1072 = vsel %vm1034, %v534, 0.0
  %v1073 = vadd.f32 %v1071, %v1072
  %v1074 = vsel %vm1034, %v539, 0.0
  %v1075 = vadd.f32 %v1073, %v1074
  %v1076 = vsel %vm1034, %v542, 0.0
  %v1077 = vadd.f32 %v1075, %v1076
  %v1078 = vsel %vm1034, %v547, 0.0
  %v1079 = vadd.f32 %v1077, %v1078
  %v1080 = vsel %vm1034, %v550, 0.0
  %v1081 = vadd.f32 %v1079, %v1080
  %v1082 = vsel %vm1034, %v555, 0.0
  %v1083 = vadd.f32 %v1081, %v1082
  %v1084 = vsel %vm1034, %v558, 0.0
  %v1085 = vadd.f32 %v1083, %v1084
  %v1086 = vsel %vm1034, %v563, 0.0
  %v1087 = vadd.f32 %v1085, %v1086
  %v1088 = vsel %vm1034, %v566, 0.0
  %v1089 = vadd.f32 %v1087, %v1088
  %v1090 = vsel %vm1034, %v571, 0.0
  %v1091 = vadd.f32 %v1089, %v1090
  %v1092 = vsel %vm1034, %v574, 0.0
  %v1093 = vadd.f32 %v1091, %v1092
  %v1094 = vsel %vm1034, %v579, 0.0
  %v1095 = vadd.f32 %v1093, %v1094
  %v1096 = vsel %vm1034, %v582, 0.0
  %v1097 = vadd.f32 %v1095, %v1096
  %v1098 = vsel %vm1034, %v587, 0.0
  %v1099 = vadd.f32 %v1097, %v1098
  %v1100 = vsel %vm1034, %v590, 0.0
  %v1101 = vadd.f32 %v1099, %v1100
  %v1102 = vsel %vm1034, %v595, 0.0
  %v1103 = vadd.f32 %v1101, %v1102
  %v1104 = vsel %vm1034, %v598, 0.0
  %v1105 = vadd.f32 %v1103, %v1104
  %v1106 = vsel %vm1034, %v603, 0.0
  %v1107 = vadd.f32 %v1105, %v1106
  %v1108 = vsel %vm1034, %v606, 0.0
  %v1109 = vadd.f32 %v1107, %v1108
  %v1110 = vsel %vm1034, %v611, 0.0
  %v1111 = vadd.f32 %v1109, %v1110
  %v1112 = vsel %vm1034, %v614, 0.0
  %v1113 = vadd.f32 %v1111, %v1112
  %v1114 = vsel %vm1034, %v619, 0.0
  %v1115 = vadd.f32 %v1113, %v1114
  %v1116 = vsel %vm1034, %v622, 0.0
  %v1117 = vadd.f32 %v1115, %v1116
  %v1118 = vsel %vm1034, %v627, 0.0
  %v1119 = vadd.f32 %v1117, %v1118
  %v1120 = vsel %vm1034, %v630, 0.0
  %v1121 = vadd.f32 %v1119, %v1120
  %v1122 = vsel %vm1034, %v635, 0.0
  %v1123 = vadd.f32 %v1121, %v1122
  %v1124 = vsel %vm1034, %v638, 0.0
  %v1125 = vadd.f32 %v1123, %v1124
  %v1126 = vsel %vm1034, %v643, 0.0
  %v1127 = vadd.f32 %v1125, %v1126
  %v1128 = vsel %vm1034, %v646, 0.0
  %v1129 = vadd.f32 %v1127, %v1128
  %v1130 = vsel %vm1034, %v651, 0.0
  %v1131 = vadd.f32 %v1129, %v1130
  %v1132 = vsel %vm1034, %v654, 0.0
  %v1133 = vadd.f32 %v1131, %v1132
  %v1134 = vsel %vm1034, %v659, 0.0
  %v1135 = vadd.f32 %v1133, %v1134
  %v1136 = vsel %vm1034, %v662, 0.0
  %v1137 = vadd.f32 %v1135, %v1136
  %v1138 = vsel %vm1034, %v667, 0.0
  %v1139 = vadd.f32 %v1137, %v1138
  %v1140 = vsel %vm1034, %v670, 0.0
  %v1141 = vadd.f32 %v1139, %v1140
  %v1142 = vsel %vm1034, %v675, 0.0
  %v1143 = vadd.f32 %v1141, %v1142
  %v1144 = vsel %vm1034, %v678, 0.0
  %v1145 = vadd.f32 %v1143, %v1144
  %v1146 = vsel %vm1034, %v683, 0.0
  %v1147 = vadd.f32 %v1145, %v1146
  %v1148 = vsel %vm1034, %v686, 0.0
  %v1149 = vadd.f32 %v1147, %v1148
  %v1150 = vsel %vm1034, %v691, 0.0
  %v1151 = vadd.f32 %v1149, %v1150
  %v1152 = vsel %vm1034, %v694, 0.0
  %v1153 = vadd.f32 %v1151, %v1152
  %v1154 = vsel %vm1034, %v699, 0.0
  %v1155 = vadd.f32 %v1153, %v1154
  %v1156 = vsel %vm1034, %v702, 0.0
  %v1157 = vadd.f32 %v1155, %v1156
  %v1158 = vsel %vm1034, %v707, 0.0
  %v1159 = vadd.f32 %v1157, %v1158
  %v1160 = vsel %vm1034, %v710, 0.0
  %v1161 = vadd.f32 %v1159, %v1160
  %v1162 = vrot.slane %v1161, 4
  %v1163 = vadd.f32 %v1161, %v1162
  %v1164 = vrot.slane %v1163, 2
  %v1165 = vadd.f32 %v1163, %v1164
  %v1166 = vrot.slane %v1165, 1
  %v1167 = vadd.f32 %v1165, %v1166
  %v1168 = vmul.f32 %v459, %v459
  %v1169 = vmul.f32 %v462, %v462
  %v1170 = vmul.f32 %v467, %v467
  %v1171 = vmul.f32 %v470, %v470
  %v1172 = vmul.f32 %v475, %v475
  %v1173 = vmul.f32 %v478, %v478
  %v1174 = vmul.f32 %v483, %v483
  %v1175 = vmul.f32 %v486, %v486
  %v1176 = vmul.f32 %v491, %v491
  %v1177 = vmul.f32 %v494, %v494
  %v1178 = vmul.f32 %v499, %v499
  %v1179 = vmul.f32 %v502, %v502
  %v1180 = vmul.f32 %v507, %v507
  %v1181 = vmul.f32 %v510, %v510
  %v1182 = vmul.f32 %v515, %v515
  %v1183 = vmul.f32 %v518, %v518
  %v1184 = vmul.f32 %v523, %v523
  %v1185 = vmul.f32 %v526, %v526
  %v1186 = vmul.f32 %v531, %v531
  %v1187 = vmul.f32 %v534, %v534
  %v1188 = vmul.f32 %v539, %v539
  %v1189 = vmul.f32 %v542, %v542
  %v1190 = vmul.f32 %v547, %v547
  %v1191 = vmul.f32 %v550, %v550
  %v1192 = vmul.f32 %v555, %v555
  %v1193 = vmul.f32 %v558, %v558
  %v1194 = vmul.f32 %v563, %v563
  %v1195 = vmul.f32 %v566, %v566
  %v1196 = vmul.f32 %v571, %v571
  %v1197 = vmul.f32 %v574, %v574
  %v1198 = vmul.f32 %v579, %v579
  %v1199 = vmul.f32 %v582, %v582
  %v1200 = vmul.f32 %v587, %v587
  %v1201 = vmul.f32 %v590, %v590
  %v1202 = vmul.f32 %v595, %v595
  %v1203 = vmul.f32 %v598, %v598
  %v1204 = vmul.f32 %v603, %v603
  %v1205 = vmul.f32 %v606, %v606
  %v1206 = vmul.f32 %v611, %v611
  %v1207 = vmul.f32 %v614, %v614
  %v1208 = vmul.f32 %v619, %v619
  %v1209 = vmul.f32 %v622, %v622
  %v1210 = vmul.f32 %v627, %v627
  %v1211 = vmul.f32 %v630, %v630
  %v1212 = vmul.f32 %v635, %v635
  %v1213 = vmul.f32 %v638, %v638
  %v1214 = vmul.f32 %v643, %v643
  %v1215 = vmul.f32 %v646, %v646
  %v1216 = vmul.f32 %v651, %v651
  %v1217 = vmul.f32 %v654, %v654
  %v1218 = vmul.f32 %v659, %v659
  %v1219 = vmul.f32 %v662, %v662
  %v1220 = vmul.f32 %v667, %v667
  %v1221 = vmul.f32 %v670, %v670
  %v1222 = vmul.f32 %v675, %v675
  %v1223 = vmul.f32 %v678, %v678
  %v1224 = vmul.f32 %v683, %v683
  %v1225 = vmul.f32 %v686, %v686
  %v1226 = vmul.f32 %v691, %v691
  %v1227 = vmul.f32 %v694, %v694
  %v1228 = vmul.f32 %v699, %v699
  %v1229 = vmul.f32 %v702, %v702
  %v1230 = vmul.f32 %v707, %v707
  %v1231 = vmul.f32 %v710, %v710
  %v1232 = vsel %vm1034, %v1168, 0.0
  %v1233 = vsel %vm1034, %v1169, 0.0
  %v1234 = vadd.f32 %v1232, %v1233
  %v1235 = vsel %vm1034, %v1170, 0.0
  %v1236 = vadd.f32 %v1234, %v1235
  %v1237 = vsel %vm1034, %v1171, 0.0
  %v1238 = vadd.f32 %v1236, %v1237
  %v1239 = vsel %vm1034, %v1172, 0.0
  %v1240 = vadd.f32 %v1238, %v1239
  %v1241 = vsel %vm1034, %v1173, 0.0
  %v1242 = vadd.f32 %v1240, %v1241
  %v1243 = vsel %vm1034, %v1174, 0.0
  %v1244 = vadd.f32 %v1242, %v1243
  %v1245 = vsel %vm1034, %v1175, 0.0
  %v1246 = vadd.f32 %v1244, %v1245
  %v1247 = vsel %vm1034, %v1176, 0.0
  %v1248 = vadd.f32 %v1246, %v1247
  %v1249 = vsel %vm1034, %v1177, 0.0
  %v1250 = vadd.f32 %v1248, %v1249
  %v1251 = vsel %vm1034, %v1178, 0.0
  %v1252 = vadd.f32 %v1250, %v1251
  %v1253 = vsel %vm1034, %v1179, 0.0
  %v1254 = vadd.f32 %v1252, %v1253
  %v1255 = vsel %vm1034, %v1180, 0.0
  %v1256 = vadd.f32 %v1254, %v1255
  %v1257 = vsel %vm1034, %v1181, 0.0
  %v1258 = vadd.f32 %v1256, %v1257
  %v1259 = vsel %vm1034, %v1182, 0.0
  %v1260 = vadd.f32 %v1258, %v1259
  %v1261 = vsel %vm1034, %v1183, 0.0
  %v1262 = vadd.f32 %v1260, %v1261
  %v1263 = vsel %vm1034, %v1184, 0.0
  %v1264 = vadd.f32 %v1262, %v1263
  %v1265 = vsel %vm1034, %v1185, 0.0
  %v1266 = vadd.f32 %v1264, %v1265
  %v1267 = vsel %vm1034, %v1186, 0.0
  %v1268 = vadd.f32 %v1266, %v1267
  %v1269 = vsel %vm1034, %v1187, 0.0
  %v1270 = vadd.f32 %v1268, %v1269
  %v1271 = vsel %vm1034, %v1188, 0.0
  %v1272 = vadd.f32 %v1270, %v1271
  %v1273 = vsel %vm1034, %v1189, 0.0
  %v1274 = vadd.f32 %v1272, %v1273
  %v1275 = vsel %vm1034, %v1190, 0.0
  %v1276 = vadd.f32 %v1274, %v1275
  %v1277 = vsel %vm1034, %v1191, 0.0
  %v1278 = vadd.f32 %v1276, %v1277
  %v1279 = vsel %vm1034, %v1192, 0.0
  %v1280 = vadd.f32 %v1278, %v1279
  %v1281 = vsel %vm1034, %v1193, 0.0
  %v1282 = vadd.f32 %v1280, %v1281
  %v1283 = vsel %vm1034, %v1194, 0.0
  %v1284 = vadd.f32 %v1282, %v1283
  %v1285 = vsel %vm1034, %v1195, 0.0
  %v1286 = vadd.f32 %v1284, %v1285
  %v1287 = vsel %vm1034, %v1196, 0.0
  %v1288 = vadd.f32 %v1286, %v1287
  %v1289 = vsel %vm1034, %v1197, 0.0
  %v1290 = vadd.f32 %v1288, %v1289
  %v1291 = vsel %vm1034, %v1198, 0.0
  %v1292 = vadd.f32 %v1290, %v1291
  %v1293 = vsel %vm1034, %v1199, 0.0
  %v1294 = vadd.f32 %v1292, %v1293
  %v1295 = vsel %vm1034, %v1200, 0.0
  %v1296 = vadd.f32 %v1294, %v1295
  %v1297 = vsel %vm1034, %v1201, 0.0
  %v1298 = vadd.f32 %v1296, %v1297
  %v1299 = vsel %vm1034, %v1202, 0.0
  %v1300 = vadd.f32 %v1298, %v1299
  %v1301 = vsel %vm1034, %v1203, 0.0
  %v1302 = vadd.f32 %v1300, %v1301
  %v1303 = vsel %vm1034, %v1204, 0.0
  %v1304 = vadd.f32 %v1302, %v1303
  %v1305 = vsel %vm1034, %v1205, 0.0
  %v1306 = vadd.f32 %v1304, %v1305
  %v1307 = vsel %vm1034, %v1206, 0.0
  %v1308 = vadd.f32 %v1306, %v1307
  %v1309 = vsel %vm1034, %v1207, 0.0
  %v1310 = vadd.f32 %v1308, %v1309
  %v1311 = vsel %vm1034, %v1208, 0.0
  %v1312 = vadd.f32 %v1310, %v1311
  %v1313 = vsel %vm1034, %v1209, 0.0
  %v1314 = vadd.f32 %v1312, %v1313
  %v1315 = vsel %vm1034, %v1210, 0.0
  %v1316 = vadd.f32 %v1314, %v1315
  %v1317 = vsel %vm1034, %v1211, 0.0
  %v1318 = vadd.f32 %v1316, %v1317
  %v1319 = vsel %vm1034, %v1212, 0.0
  %v1320 = vadd.f32 %v1318, %v1319
  %v1321 = vsel %vm1034, %v1213, 0.0
  %v1322 = vadd.f32 %v1320, %v1321
  %v1323 = vsel %vm1034, %v1214, 0.0
  %v1324 = vadd.f32 %v1322, %v1323
  %v1325 = vsel %vm1034, %v1215, 0.0
  %v1326 = vadd.f32 %v1324, %v1325
  %v1327 = vsel %vm1034, %v1216, 0.0
  %v1328 = vadd.f32 %v1326, %v1327
  %v1329 = vsel %vm1034, %v1217, 0.0
  %v1330 = vadd.f32 %v1328, %v1329
  %v1331 = vsel %vm1034, %v1218, 0.0
  %v1332 = vadd.f32 %v1330, %v1331
  %v1333 = vsel %vm1034, %v1219, 0.0
  %v1334 = vadd.f32 %v1332, %v1333
  %v1335 = vsel %vm1034, %v1220, 0.0
  %v1336 = vadd.f32 %v1334, %v1335
  %v1337 = vsel %vm1034, %v1221, 0.0
  %v1338 = vadd.f32 %v1336, %v1337
  %v1339 = vsel %vm1034, %v1222, 0.0
  %v1340 = vadd.f32 %v1338, %v1339
  %v1341 = vsel %vm1034, %v1223, 0.0
  %v1342 = vadd.f32 %v1340, %v1341
  %v1343 = vsel %vm1034, %v1224, 0.0
  %v1344 = vadd.f32 %v1342, %v1343
  %v1345 = vsel %vm1034, %v1225, 0.0
  %v1346 = vadd.f32 %v1344, %v1345
  %v1347 = vsel %vm1034, %v1226, 0.0
  %v1348 = vadd.f32 %v1346, %v1347
  %v1349 = vsel %vm1034, %v1227, 0.0
  %v1350 = vadd.f32 %v1348, %v1349
  %v1351 = vsel %vm1034, %v1228, 0.0
  %v1352 = vadd.f32 %v1350, %v1351
  %v1353 = vsel %vm1034, %v1229, 0.0
  %v1354 = vadd.f32 %v1352, %v1353
  %v1355 = vsel %vm1034, %v1230, 0.0
  %v1356 = vadd.f32 %v1354, %v1355
  %v1357 = vsel %vm1034, %v1231, 0.0
  %v1358 = vadd.f32 %v1356, %v1357
  %v1359 = vrot.slane %v1358, 4
  %v1360 = vadd.f32 %v1358, %v1359
  %v1361 = vrot.slane %v1360, 2
  %v1362 = vadd.f32 %v1360, %v1361
  %v1363 = vrot.slane %v1362, 1
  %v1364 = vadd.f32 %v1362, %v1363
  %vm1365 = vcmask 1040384
  %v1366 = vsel %vm1365, %v1167, %v1364
  %vm1367 = vcmask 254976
  %1368 = vst.msk [vmem:[%s5] sm:$0x3] %vm1367, %v1366
  // Predicated region
  $region18: #{bottleneck_forward.2} parent=0 // pred_check
    _
  $region19: #{bottleneck_forward.2} parent=0 // pred_check_branch
    %1370 = sbr.rel (0) target = $region21
  $region20: #{bottleneck_forward.2} parent=0 // pred_region
    _
  $region21: #{bottleneck_forward.2} parent=0 // pred_fallthru
    _
  // Predicated region
  $region22: #{bottleneck_forward.2} parent=0 // pred_check
    _
  $region23: #{bottleneck_forward.2} parent=0 // pred_check_branch
    %1372 = sbr.rel (0) target = $region25
  $region24: #{bottleneck_forward.2} parent=0 // pred_region
    _
  $region25: #{bottleneck_forward.2} parent=0 // pred_fallthru
    _
  // Predicated region
  $region26: #{bottleneck_forward.2} parent=0 // pred_check
    _
  $region27: #{bottleneck_forward.2} parent=0 // pred_check_branch
    %1374 = sbr.rel (0) target = $region29
  $region28: #{bottleneck_forward.2} parent=0 // pred_region
    _
  $region29: #{bottleneck_forward.2} parent=0 // pred_fallthru
    _
  // Predicated region
  $region30: #{bottleneck_forward.2} parent=0 // pred_check
    _
  $region31: #{bottleneck_forward.2} parent=0 // pred_check_branch
    %1376 = sbr.rel (0) target = $region33
  $region32: #{bottleneck_forward.2} parent=0 // pred_region
    _
  $region33: #{bottleneck_forward.2} parent=0 // pred_fallthru
    _

// kernel: bottleneck_forward.3
$region0: #{bottleneck_forward.3}
  #allocation0 [shape = 'u32[]', space=smem, size = 0x4, offset = 0x4, fixed_abs, tag = 'smem constant byte address 0x4 - core index']
  #allocation1 [shape = 'u32[144,128]{1,0:T(1,128)}', space=vmem, size = 0x12000, scoped, tag = 'internal scratch']
  #allocation2 [shape = 'f32[288,32]{1,0:T(8,128)}', space=vmem, size = 0x24000, scoped, tag = 'scratch operand']
  %s0 = inlined_call_operand.vmem [shape: bf16[512,32], index: 0, kind: input, shape index: {}]
  %s1 = inlined_call_operand.vmem [shape: f32[1,32], index: 1, kind: input, shape index: {}]
  %s2 = inlined_call_operand.vmem [shape: f32[1,32], index: 2, kind: input, shape index: {}]
  %s3 = inlined_call_operand.vmem [shape: bf16[9,32,128], index: 3, kind: input, shape index: {}]
  %s4 = inlined_call_operand.vmem [shape: f32[512,8], index: 4, kind: output, shape index: {}]
  %s5 = sld [smem:[#allocation0]]
  $region49: #{bottleneck_forward.3} parent=0
    _
  %s7 = ssub.s32 1, %s5
  %s8 = scalar_select 0, %s7, %s5
  loop: start=0, step=1, limit=4
  $region2: #{bottleneck_forward.3} parent=0 // loop_pre_header
    _
  $region3: #{bottleneck_forward.3} parent=0 // loop_header
    %s10 = sphi 0, %s14
    %p11 = scmp.ge.s32.totalorder %s10, 4
    %s20 = sphi 0, %s22
    %s23 = sphi 0, %s20
    %s24 = sphi 0, %s23
    %s40 = sphi 0, %s24
    %s44 = sphi 0, %s44
    %s46 = sphi 0, %s44
    %s47 = sphi 0, %s46
    %s61 = sphi 0, %s47
    %s65 = sphi 0, %s65
    %s67 = sphi 0, %s65
    %s68 = sphi 0, %s67
    %s82 = sphi 0, %s68
    %s86 = sphi 0, %s86
    %s88 = sphi 0, %s86
    %s89 = sphi 0, %s88
    %s103 = sphi 0, %s89
    %s109 = sphi 0, %s111
    %s112 = sphi 0, %s109
    %s113 = sphi 0, %s112
    %s129 = sphi 0, %s113
  $region4: #{bottleneck_forward.3} parent=0 // loop_header_branch
    %13 = sbr.rel (%p11) target = $region8
  $region5: #{bottleneck_forward.3} parent=0 // loop_body
    %s15 = ssub.s32 %s10, 1
    %s16 = ssub.s32 %s10, 2
    %s17 = sadd.s32 %s10, 1
    %s18 = ssub.s32 %s10, %s17
    %p19 = scmp.eq.s32.totalorder %s18, 0
    %s21 = sadd.s32 %s20, 1
    %s22 = scalar_select %p19, %s20, %s21
    %p25 = pneg %p19
    %p26 = scmp.eq.s32.totalorder %s10, 1
    %p27 = por %p25, %p26
    %p28 = scmp.ne.s32.totalorder %s20, %s23
    %p29 = scmp.eq.s32.totalorder %s10, 0
    %p30 = por %p28, %p29
    %p31 = scmp.ne.s32.totalorder %s20, %s23
    %p32 = scmp.eq.s32.totalorder %s15, 1
    %p33 = por %p31, %p32
    %p34 = scmp.ne.s32.totalorder %s23, %s24
    %p35 = scmp.eq.s32.totalorder %s15, 0
    %p36 = por %p34, %p35
    %p37 = scmp.ne.s32.totalorder %s23, %s24
    %p38 = scmp.eq.s32.totalorder %s16, 1
    %p39 = por %p37, %p38
    %p41 = scmp.ne.s32.totalorder %s24, %s40
    %p42 = scmp.eq.s32.totalorder %s16, 0
    %p43 = por %p41, %p42
    %s45 = sadd.s32 %s44, 1
    %p48 = scmp.eq.s32.totalorder %s10, 1
    %p49 = scmp.ne.s32.totalorder %s44, %s46
    %p50 = scmp.eq.s32.totalorder %s10, 0
    %p51 = por %p49, %p50
    %p52 = scmp.ne.s32.totalorder %s44, %s46
    %p53 = scmp.eq.s32.totalorder %s15, 1
    %p54 = por %p52, %p53
    %p55 = scmp.ne.s32.totalorder %s46, %s47
    %p56 = scmp.eq.s32.totalorder %s15, 0
    %p57 = por %p55, %p56
    %p58 = scmp.ne.s32.totalorder %s46, %s47
    %p59 = scmp.eq.s32.totalorder %s16, 1
    %p60 = por %p58, %p59
    %p62 = scmp.ne.s32.totalorder %s47, %s61
    %p63 = scmp.eq.s32.totalorder %s16, 0
    %p64 = por %p62, %p63
    %s66 = sadd.s32 %s65, 1
    %p69 = scmp.eq.s32.totalorder %s10, 1
    %p70 = scmp.ne.s32.totalorder %s65, %s67
    %p71 = scmp.eq.s32.totalorder %s10, 0
    %p72 = por %p70, %p71
    %p73 = scmp.ne.s32.totalorder %s65, %s67
    %p74 = scmp.eq.s32.totalorder %s15, 1
    %p75 = por %p73, %p74
    %p76 = scmp.ne.s32.totalorder %s67, %s68
    %p77 = scmp.eq.s32.totalorder %s15, 0
    %p78 = por %p76, %p77
    %p79 = scmp.ne.s32.totalorder %s67, %s68
    %p80 = scmp.eq.s32.totalorder %s16, 1
    %p81 = por %p79, %p80
    %p83 = scmp.ne.s32.totalorder %s68, %s82
    %p84 = scmp.eq.s32.totalorder %s16, 0
    %p85 = por %p83, %p84
    %s87 = sadd.s32 %s86, 1
    %p90 = scmp.eq.s32.totalorder %s10, 1
    %p91 = scmp.ne.s32.totalorder %s86, %s88
    %p92 = scmp.eq.s32.totalorder %s10, 0
    %p93 = por %p91, %p92
    %p94 = scmp.ne.s32.totalorder %s86, %s88
    %p95 = scmp.eq.s32.totalorder %s15, 1
    %p96 = por %p94, %p95
    %p97 = scmp.ne.s32.totalorder %s88, %s89
    %p98 = scmp.eq.s32.totalorder %s15, 0
    %p99 = por %p97, %p98
    %p100 = scmp.ne.s32.totalorder %s88, %s89
    %p101 = scmp.eq.s32.totalorder %s16, 1
    %p102 = por %p100, %p101
    %p104 = scmp.ne.s32.totalorder %s89, %s103
    %p105 = scmp.eq.s32.totalorder %s16, 0
    %p106 = por %p104, %p105
    %s107 = ssub.s32 %s10, %s17
    %p108 = scmp.eq.s32.totalorder %s107, 0
    %s110 = sadd.s32 %s109, 1
    %s111 = scalar_select %p108, %s109, %s110
    %p114 = pneg %p108
    %p115 = scmp.eq.s32.totalorder %s10, 1
    %p116 = por %p114, %p115
    %p117 = scmp.ne.s32.totalorder %s109, %s112
    %p118 = scmp.eq.s32.totalorder %s10, 0
    %p119 = por %p117, %p118
    %p120 = scmp.ne.s32.totalorder %s109, %s112
    %p121 = scmp.eq.s32.totalorder %s15, 1
    %p122 = por %p120, %p121
    %p123 = scmp.ne.s32.totalorder %s112, %s113
    %p124 = scmp.eq.s32.totalorder %s15, 0
    %p125 = por %p123, %p124
    %p126 = scmp.ne.s32.totalorder %s112, %s113
    %p127 = scmp.eq.s32.totalorder %s16, 1
    %p128 = por %p126, %p127
    %p130 = scmp.ne.s32.totalorder %s113, %s129
    %p131 = scmp.eq.s32.totalorder %s16, 0
    %p132 = por %p130, %p131
    %p133 = scmp.le.s32.totalorder 1, %s10
    %p134 = scmp.lt.s32.totalorder %s10, 3
    %p135 = pnand %p133, %p134
    %p136 = pneg %p135
    // Predicated region
    $region9: #{bottleneck_forward.3} parent=5 // pred_check
      _
    $region10: #{bottleneck_forward.3} parent=5 // pred_check_branch
      %138 = sbr.rel (%p135) target = $region12
    $region11: #{bottleneck_forward.3} parent=5 // pred_region
      %s139 = ssub.s32 %s10, 1
      // Predicated region
      $region13: #{bottleneck_forward.3} parent=11 // pred_check
        %p140 = pneg %p57
      $region14: #{bottleneck_forward.3} parent=11 // pred_check_branch
        %142 = sbr.rel (%p140) target = $region16
      $region15: #{bottleneck_forward.3} parent=11 // pred_region
        _
      $region16: #{bottleneck_forward.3} parent=11 // pred_fallthru
        _
      // Predicated region
      $region17: #{bottleneck_forward.3} parent=11 // pred_check
        %p143 = pneg %p78
      $region18: #{bottleneck_forward.3} parent=11 // pred_check_branch
        %145 = sbr.rel (%p143) target = $region20
      $region19: #{bottleneck_forward.3} parent=11 // pred_region
        _
      $region20: #{bottleneck_forward.3} parent=11 // pred_fallthru
        _
      // Predicated region
      $region21: #{bottleneck_forward.3} parent=11 // pred_check
        %p146 = pneg %p99
      $region22: #{bottleneck_forward.3} parent=11 // pred_check_branch
        %148 = sbr.rel (%p146) target = $region24
      $region23: #{bottleneck_forward.3} parent=11 // pred_region
        _
      $region24: #{bottleneck_forward.3} parent=11 // pred_fallthru
        _
    $region12: #{bottleneck_forward.3} parent=5 // pred_fallthru
      _
    %p149 = scmp.lt.s32.totalorder %s10, 2
    // Predicated region
    $region25: #{bottleneck_forward.3} parent=5 // pred_check
      %p150 = pneg %p149
    $region26: #{bottleneck_forward.3} parent=5 // pred_check_branch
      %152 = sbr.rel (%p150) target = $region28
    $region27: #{bottleneck_forward.3} parent=5 // pred_region
      // Predicated region
      $region29: #{bottleneck_forward.3} parent=27 // pred_check
        %p153 = pneg %p30
      $region30: #{bottleneck_forward.3} parent=27 // pred_check_branch
        %155 = sbr.rel (%p153) target = $region32
      $region31: #{bottleneck_forward.3} parent=27 // pred_region
        %s156 = smul.u32 32, %s10
        %p157 = scmp.lt.s32.totalorder %s156, 63
        %s158 = scalar_select %p157, %s156, 63
        %s159 = smul.addr %s158, 4
        %s160 = scalar_lea.vmem %s0, %s159
        %s161 = smul.u32 32, %s10
      $region32: #{bottleneck_forward.3} parent=27 // pred_fallthru
        _
    $region28: #{bottleneck_forward.3} parent=5 // pred_fallthru
      _
    %p162 = scmp.le.s32.totalorder 1, %s10
    %p163 = scmp.lt.s32.totalorder %s10, 3
    %p164 = pnand %p162, %p163
    %p165 = pneg %p164
    // Predicated region
    $region33: #{bottleneck_forward.3} parent=5 // pred_check
      _
    $region34: #{bottleneck_forward.3} parent=5 // pred_check_branch
      %167 = sbr.rel (%p164) target = $region36
    $region35: #{bottleneck_forward.3} parent=5 // pred_region
      %s168 = ssub.s32 %s10, 1
      %s169 = smul.u32 32, %s15
      %p170 = scmp.lt.s32.totalorder %s169, 63
      %s171 = scalar_select %p170, %s169, 63
      %s172 = smul.addr %s171, 4
      %s173 = scalar_lea.vmem %s0, %s172
      %p174 = pneg %p36
      %p175 = pneg %p33
      %p176 = pneg %p57
      %p177 = pneg %p54
      %p178 = pneg %p78
      %p179 = pneg %p75
      %p180 = pneg %p99
      %p181 = pneg %p96
      %p182 = pneg %p125
      %p183 = pneg %p122
      %s184 = smul.u32 32, %s15
      %p185 = scmp.lt.s32.totalorder %s184, 63
      %s186 = scalar_select %p185, %s184, 63
      %s187 = smul.addr %s186, 8
      %s188 = scalar_lea.vmem %s4, %s187
      %s189 = smul.u32 32, %s15
      %p190 = scmp.lt.s32.totalorder %s189, 63
      %s191 = scalar_select %p190, %s189, 63
      %s192 = smul.addr %s191, 4
      %s193 = scalar_lea.vmem %s0, %s192
      %s194 = smul.u32 32, %s15
      %s195 = smul.u32 32, %s15
      %p196 = scmp.lt.s32.totalorder %s195, 63
      %s197 = scalar_select %p196, %s195, 63
      %s198 = smul.addr %s197, 8
      %s199 = scalar_lea.vmem %s4, %s198
      %s200 = smul.u32 32, %s15
      %v202 = vld [vmem:[%s193] sm:$0xf]
      %v203 = vld [vmem:[%s193 + $0x4] sm:$0xf]
      %v204 = vld [vmem:[%s193 + $0x8] sm:$0xf]
      %v205 = vld [vmem:[%s193 + $0xc] sm:$0xf]
      %v206 = vld [vmem:[%s193 + $0x10] sm:$0xf]
      %v207 = vld [vmem:[%s193 + $0x14] sm:$0xf]
      %v208 = vld [vmem:[%s193 + $0x18] sm:$0xf]
      %v209 = vld [vmem:[%s193 + $0x1c] sm:$0xf]
      %v210 = vld [vmem:[%s193 + $0x20] sm:$0xf]
      %v211 = vld [vmem:[%s193 + $0x24] sm:$0xf]
      %v212 = vld [vmem:[%s193 + $0x28] sm:$0xf]
      %v213 = vld [vmem:[%s193 + $0x2c] sm:$0xf]
      %v214 = vld [vmem:[%s193 + $0x30] sm:$0xf]
      %v215 = vld [vmem:[%s193 + $0x34] sm:$0xf]
      %v216 = vld [vmem:[%s193 + $0x38] sm:$0xf]
      %v217 = vld [vmem:[%s193 + $0x3c] sm:$0xf]
      %v218 = vld [vmem:[%s193 + $0x40] sm:$0xf]
      %v219 = vld [vmem:[%s193 + $0x44] sm:$0xf]
      %v220 = vld [vmem:[%s193 + $0x48] sm:$0xf]
      %v221 = vld [vmem:[%s193 + $0x4c] sm:$0xf]
      %v222 = vld [vmem:[%s193 + $0x50] sm:$0xf]
      %v223 = vld [vmem:[%s193 + $0x54] sm:$0xf]
      %v224 = vld [vmem:[%s193 + $0x58] sm:$0xf]
      %v225 = vld [vmem:[%s193 + $0x5c] sm:$0xf]
      %v226 = vld [vmem:[%s193 + $0x60] sm:$0xf]
      %v227 = vld [vmem:[%s193 + $0x64] sm:$0xf]
      %v228 = vld [vmem:[%s193 + $0x68] sm:$0xf]
      %v229 = vld [vmem:[%s193 + $0x6c] sm:$0xf]
      %v230 = vld [vmem:[%s193 + $0x70] sm:$0xf]
      %v231 = vld [vmem:[%s193 + $0x74] sm:$0xf]
      %v232 = vld [vmem:[%s193 + $0x78] sm:$0xf]
      %v233 = vld [vmem:[%s193 + $0x7c] sm:$0xf]
      %v234 = vunpack.c.l.bf16 %v202
      %v235 = vunpack.c.l.bf16 %v203
      %v236 = vunpack.c.l.bf16 %v204
      %v237 = vunpack.c.l.bf16 %v205
      %v238 = vunpack.c.l.bf16 %v206
      %v239 = vunpack.c.l.bf16 %v207
      %v240 = vunpack.c.l.bf16 %v208
      %v241 = vunpack.c.l.bf16 %v209
      %v242 = vunpack.c.l.bf16 %v210
      %v243 = vunpack.c.l.bf16 %v211
      %v244 = vunpack.c.l.bf16 %v212
      %v245 = vunpack.c.l.bf16 %v213
      %v246 = vunpack.c.l.bf16 %v214
      %v247 = vunpack.c.l.bf16 %v215
      %v248 = vunpack.c.l.bf16 %v216
      %v249 = vunpack.c.l.bf16 %v217
      %v250 = vunpack.c.l.bf16 %v218
      %v251 = vunpack.c.l.bf16 %v219
      %v252 = vunpack.c.l.bf16 %v220
      %v253 = vunpack.c.l.bf16 %v221
      %v254 = vunpack.c.l.bf16 %v222
      %v255 = vunpack.c.l.bf16 %v223
      %v256 = vunpack.c.l.bf16 %v224
      %v257 = vunpack.c.l.bf16 %v225
      %v258 = vunpack.c.l.bf16 %v226
      %v259 = vunpack.c.l.bf16 %v227
      %v260 = vunpack.c.l.bf16 %v228
      %v261 = vunpack.c.l.bf16 %v229
      %v262 = vunpack.c.l.bf16 %v230
      %v263 = vunpack.c.l.bf16 %v231
      %v264 = vunpack.c.l.bf16 %v232
      %v265 = vunpack.c.l.bf16 %v233
      %v266 = vld [vmem:[%s1] sm:$0x1]
      %v268 = vlaneseq
      %v269 = vshrl.u32 %v268, 7
      %v270 = vsub.s32 0, %v269
      %v271 = vrot.slane %v266, %v270
      %v273 = vmul.f32 %v234, %v271
      %v274 = vmul.f32 %v235, %v271
      %v275 = vmul.f32 %v236, %v271
      %v276 = vmul.f32 %v237, %v271
      %v277 = vmul.f32 %v238, %v271
      %v278 = vmul.f32 %v239, %v271
      %v279 = vmul.f32 %v240, %v271
      %v280 = vmul.f32 %v241, %v271
      %v281 = vmul.f32 %v242, %v271
      %v282 = vmul.f32 %v243, %v271
      %v283 = vmul.f32 %v244, %v271
      %v284 = vmul.f32 %v245, %v271
      %v285 = vmul.f32 %v246, %v271
      %v286 = vmul.f32 %v247, %v271
      %v287 = vmul.f32 %v248, %v271
      %v288 = vmul.f32 %v249, %v271
      %v289 = vmul.f32 %v250, %v271
      %v290 = vmul.f32 %v251, %v271
      %v291 = vmul.f32 %v252, %v271
      %v292 = vmul.f32 %v253, %v271
      %v293 = vmul.f32 %v254, %v271
      %v294 = vmul.f32 %v255, %v271
      %v295 = vmul.f32 %v256, %v271
      %v296 = vmul.f32 %v257, %v271
      %v297 = vmul.f32 %v258, %v271
      %v298 = vmul.f32 %v259, %v271
      %v299 = vmul.f32 %v260, %v271
      %v300 = vmul.f32 %v261, %v271
      %v301 = vmul.f32 %v262, %v271
      %v302 = vmul.f32 %v263, %v271
      %v303 = vmul.f32 %v264, %v271
      %v304 = vmul.f32 %v265, %v271
      %v305 = vld [vmem:[%s2] sm:$0x1]
      %v307 = vlaneseq
      %v308 = vshrl.u32 %v307, 7
      %v309 = vsub.s32 0, %v308
      %v310 = vrot.slane %v305, %v309
      %v312 = vadd.f32 %v273, %v310
      %v313 = vadd.f32 %v274, %v310
      %v314 = vadd.f32 %v275, %v310
      %v315 = vadd.f32 %v276, %v310
      %v316 = vadd.f32 %v277, %v310
      %v317 = vadd.f32 %v278, %v310
      %v318 = vadd.f32 %v279, %v310
      %v319 = vadd.f32 %v280, %v310
      %v320 = vadd.f32 %v281, %v310
      %v321 = vadd.f32 %v282, %v310
      %v322 = vadd.f32 %v283, %v310
      %v323 = vadd.f32 %v284, %v310
      %v324 = vadd.f32 %v285, %v310
      %v325 = vadd.f32 %v286, %v310
      %v326 = vadd.f32 %v287, %v310
      %v327 = vadd.f32 %v288, %v310
      %v328 = vadd.f32 %v289, %v310
      %v329 = vadd.f32 %v290, %v310
      %v330 = vadd.f32 %v291, %v310
      %v331 = vadd.f32 %v292, %v310
      %v332 = vadd.f32 %v293, %v310
      %v333 = vadd.f32 %v294, %v310
      %v334 = vadd.f32 %v295, %v310
      %v335 = vadd.f32 %v296, %v310
      %v336 = vadd.f32 %v297, %v310
      %v337 = vadd.f32 %v298, %v310
      %v338 = vadd.f32 %v299, %v310
      %v339 = vadd.f32 %v300, %v310
      %v340 = vadd.f32 %v301, %v310
      %v341 = vadd.f32 %v302, %v310
      %v342 = vadd.f32 %v303, %v310
      %v343 = vadd.f32 %v304, %v310
      %v344 = vmax.f32 %v312, 0.0
      %v345 = vmax.f32 %v313, 0.0
      %v346 = vmax.f32 %v314, 0.0
      %v347 = vmax.f32 %v315, 0.0
      %v348 = vmax.f32 %v316, 0.0
      %v349 = vmax.f32 %v317, 0.0
      %v350 = vmax.f32 %v318, 0.0
      %v351 = vmax.f32 %v319, 0.0
      %v352 = vmax.f32 %v320, 0.0
      %v353 = vmax.f32 %v321, 0.0
      %v354 = vmax.f32 %v322, 0.0
      %v355 = vmax.f32 %v323, 0.0
      %v356 = vmax.f32 %v324, 0.0
      %v357 = vmax.f32 %v325, 0.0
      %v358 = vmax.f32 %v326, 0.0
      %v359 = vmax.f32 %v327, 0.0
      %v360 = vmax.f32 %v328, 0.0
      %v361 = vmax.f32 %v329, 0.0
      %v362 = vmax.f32 %v330, 0.0
      %v363 = vmax.f32 %v331, 0.0
      %v364 = vmax.f32 %v332, 0.0
      %v365 = vmax.f32 %v333, 0.0
      %v366 = vmax.f32 %v334, 0.0
      %v367 = vmax.f32 %v335, 0.0
      %v368 = vmax.f32 %v336, 0.0
      %v369 = vmax.f32 %v337, 0.0
      %v370 = vmax.f32 %v338, 0.0
      %v371 = vmax.f32 %v339, 0.0
      %v372 = vmax.f32 %v340, 0.0
      %v373 = vmax.f32 %v341, 0.0
      %v374 = vmax.f32 %v342, 0.0
      %v375 = vmax.f32 %v343, 0.0
      %vm376 = vcmask 261120
      %377 = vst.msk [vmem:[#allocation2] sm:$0xff] %vm376, 0.0
      %378 = vst.msk [vmem:[#allocation2 + $0x8] sm:$0xff] %vm376, 0.0
      %379 = vst.msk [vmem:[#allocation2 + $0x110] sm:$0xff] %vm376, 0.0
      %380 = vst.msk [vmem:[#allocation2 + $0x118] sm:$0xff] %vm376, 0.0
      %381 = vst.msk [vmem:[#allocation2 + $0x10] sm:$0xff] %vm376, %v344
      %382 = vst.msk [vmem:[#allocation2 + $0x18] sm:$0xff] %vm376, %v345
      %383 = vst.msk [vmem:[#allocation2 + $0x20] sm:$0xff] %vm376, %v346
      %384 = vst.msk [vmem:[#allocation2 + $0x28] sm:$0xff] %vm376, %v347
      %385 = vst.msk [vmem:[#allocation2 + $0x30] sm:$0xff] %vm376, %v348
      %386 = vst.msk [vmem:[#allocation2 + $0x38] sm:$0xff] %vm376, %v349
      %387 = vst.msk [vmem:[#allocation2 + $0x40] sm:$0xff] %vm376, %v350
      %388 = vst.msk [vmem:[#allocation2 + $0x48] sm:$0xff] %vm376, %v351
      %389 = vst.msk [vmem:[#allocation2 + $0x50] sm:$0xff] %vm376, %v352
      %390 = vst.msk [vmem:[#allocation2 + $0x58] sm:$0xff] %vm376, %v353
      %391 = vst.msk [vmem:[#allocation2 + $0x60] sm:$0xff] %vm376, %v354
      %392 = vst.msk [vmem:[#allocation2 + $0x68] sm:$0xff] %vm376, %v355
      %393 = vst.msk [vmem:[#allocation2 + $0x70] sm:$0xff] %vm376, %v356
      %394 = vst.msk [vmem:[#allocation2 + $0x78] sm:$0xff] %vm376, %v357
      %395 = vst.msk [vmem:[#allocation2 + $0x80] sm:$0xff] %vm376, %v358
      %396 = vst.msk [vmem:[#allocation2 + $0x88] sm:$0xff] %vm376, %v359
      %397 = vst.msk [vmem:[#allocation2 + $0x90] sm:$0xff] %vm376, %v360
      %398 = vst.msk [vmem:[#allocation2 + $0x98] sm:$0xff] %vm376, %v361
      %399 = vst.msk [vmem:[#allocation2 + $0xa0] sm:$0xff] %vm376, %v362
      %400 = vst.msk [vmem:[#allocation2 + $0xa8] sm:$0xff] %vm376, %v363
      %401 = vst.msk [vmem:[#allocation2 + $0xb0] sm:$0xff] %vm376, %v364
      %402 = vst.msk [vmem:[#allocation2 + $0xb8] sm:$0xff] %vm376, %v365
      %403 = vst.msk [vmem:[#allocation2 + $0xc0] sm:$0xff] %vm376, %v366
      %404 = vst.msk [vmem:[#allocation2 + $0xc8] sm:$0xff] %vm376, %v367
      %405 = vst.msk [vmem:[#allocation2 + $0xd0] sm:$0xff] %vm376, %v368
      %406 = vst.msk [vmem:[#allocation2 + $0xd8] sm:$0xff] %vm376, %v369
      %407 = vst.msk [vmem:[#allocation2 + $0xe0] sm:$0xff] %vm376, %v370
      %408 = vst.msk [vmem:[#allocation2 + $0xe8] sm:$0xff] %vm376, %v371
      %409 = vst.msk [vmem:[#allocation2 + $0xf0] sm:$0xff] %vm376, %v372
      %410 = vst.msk [vmem:[#allocation2 + $0xf8] sm:$0xff] %vm376, %v373
      %411 = vst.msk [vmem:[#allocation2 + $0x100] sm:$0xff] %vm376, %v374
      %412 = vst.msk [vmem:[#allocation2 + $0x108] sm:$0xff] %vm376, %v375
      %v413 = vlaneseq
      %v414 = vshrl.u32 %v413, 7
      %v415 = vadd.s32 %v414, 8
      %vm416 = vcmp.ge.s32.totalorder %v414, 1
      %vm417 = vcmp.ge.s32.totalorder %v415, 1
      %vm418 = vcmp.lt.s32.totalorder %v414, 15
      %vm419 = vcmp.lt.s32.totalorder %v415, 15
      %v420 = vld [vmem:[#allocation2] sm:$0xff]
      %v421 = vld [vmem:[#allocation2 + $0x8] sm:$0xff]
      %v422 = vld [vmem:[#allocation2 + $0x10] sm:$0xff]
      %v423 = vld [vmem:[#allocation2 + $0x18] sm:$0xff]
      %v424 = vld [vmem:[#allocation2 + $0x20] sm:$0xff]
      %v425 = vld [vmem:[#allocation2 + $0x28] sm:$0xff]
      %v426 = vld [vmem:[#allocation2 + $0x30] sm:$0xff]
      %v427 = vld [vmem:[#allocation2 + $0x38] sm:$0xff]
      %v428 = vld [vmem:[#allocation2 + $0x40] sm:$0xff]
      %v429 = vld [vmem:[#allocation2 + $0x48] sm:$0xff]
      %v430 = vld [vmem:[#allocation2 + $0x50] sm:$0xff]
      %v431 = vld [vmem:[#allocation2 + $0x58] sm:$0xff]
      %v432 = vld [vmem:[#allocation2 + $0x60] sm:$0xff]
      %v433 = vld [vmem:[#allocation2 + $0x68] sm:$0xff]
      %v434 = vld [vmem:[#allocation2 + $0x70] sm:$0xff]
      %v435 = vld [vmem:[#allocation2 + $0x78] sm:$0xff]
      %v436 = vld [vmem:[#allocation2 + $0x80] sm:$0xff]
      %v437 = vld [vmem:[#allocation2 + $0x88] sm:$0xff]
      %v438 = vld [vmem:[#allocation2 + $0x90] sm:$0xff]
      %v439 = vld [vmem:[#allocation2 + $0x98] sm:$0xff]
      %v440 = vld [vmem:[#allocation2 + $0xa0] sm:$0xff]
      %v441 = vld [vmem:[#allocation2 + $0xa8] sm:$0xff]
      %v442 = vld [vmem:[#allocation2 + $0xb0] sm:$0xff]
      %v443 = vld [vmem:[#allocation2 + $0xb8] sm:$0xff]
      %v444 = vld [vmem:[#allocation2 + $0xc0] sm:$0xff]
      %v445 = vld [vmem:[#allocation2 + $0xc8] sm:$0xff]
      %v446 = vld [vmem:[#allocation2 + $0xd0] sm:$0xff]
      %v447 = vld [vmem:[#allocation2 + $0xd8] sm:$0xff]
      %v448 = vld [vmem:[#allocation2 + $0xe0] sm:$0xff]
      %v449 = vld [vmem:[#allocation2 + $0xe8] sm:$0xff]
      %v450 = vld [vmem:[#allocation2 + $0xf0] sm:$0xff]
      %v451 = vld [vmem:[#allocation2 + $0xf8] sm:$0xff]
      %v452 = vrot.slane %v420, 7
      %v453 = vrot.slane %v421, 7
      %v454 = vrot.slane %v422, 7
      %v455 = vrot.slane %v423, 7
      %v456 = vrot.slane %v424, 7
      %v457 = vrot.slane %v425, 7
      %v458 = vrot.slane %v426, 7
      %v459 = vrot.slane %v427, 7
      %v460 = vrot.slane %v428, 7
      %v461 = vrot.slane %v429, 7
      %v462 = vrot.slane %v430, 7
      %v463 = vrot.slane %v431, 7
      %v464 = vrot.slane %v432, 7
      %v465 = vrot.slane %v433, 7
      %v466 = vrot.slane %v434, 7
      %v467 = vrot.slane %v435, 7
      %v468 = vrot.slane %v436, 7
      %v469 = vrot.slane %v437, 7
      %v470 = vrot.slane %v438, 7
      %v471 = vrot.slane %v439, 7
      %v472 = vrot.slane %v440, 7
      %v473 = vrot.slane %v441, 7
      %v474 = vrot.slane %v442, 7
      %v475 = vrot.slane %v443, 7
      %v476 = vrot.slane %v444, 7
      %v477 = vrot.slane %v445, 7
      %v478 = vrot.slane %v446, 7
      %v479 = vrot.slane %v447, 7
      %v480 = vrot.slane %v448, 7
      %v481 = vrot.slane %v449, 7
      %v482 = vrot.slane %v450, 7
      %v483 = vrot.slane %v451, 7
      %vm484 = vcmp.lt.s32.totalorder %v414, 1
      %v485 = vsel %vm484, %v482, %v483
      %v486 = vsel %vm484, %v481, %v482
      %v487 = vsel %vm484, %v480, %v481
      %v488 = vsel %vm484, %v479, %v480
      %v489 = vsel %vm484, %v478, %v479
      %v490 = vsel %vm484, %v477, %v478
      %v491 = vsel %vm484, %v476, %v477
      %v492 = vsel %vm484, %v475, %v476
      %v493 = vsel %vm484, %v474, %v475
      %v494 = vsel %vm484, %v473, %v474
      %v495 = vsel %vm484, %v472, %v473
      %v496 = vsel %vm484, %v471, %v472
      %v497 = vsel %vm484, %v470, %v471
      %v498 = vsel %vm484, %v469, %v470
      %v499 = vsel %vm484, %v468, %v469
      %v500 = vsel %vm484, %v467, %v468
      %v501 = vsel %vm484, %v466, %v467
      %v502 = vsel %vm484, %v465, %v466
      %v503 = vsel %vm484, %v464, %v465
      %v504 = vsel %vm484, %v463, %v464
      %v505 = vsel %vm484, %v462, %v463
      %v506 = vsel %vm484, %v461, %v462
      %v507 = vsel %vm484, %v460, %v461
      %v508 = vsel %vm484, %v459, %v460
      %v509 = vsel %vm484, %v458, %v459
      %v510 = vsel %vm484, %v457, %v458
      %v511 = vsel %vm484, %v456, %v457
      %v512 = vsel %vm484, %v455, %v456
      %v513 = vsel %vm484, %v454, %v455
      %v514 = vsel %vm484, %v453, %v454
      %v515 = vsel %vm484, %v452, %v453
      %v516 = vsel %vm484, %v483, %v452
      %v517 = vsel %vm416, %v516, 0.0
      %v518 = vsel %vm417, %v515, 0.0
      %v519 = vsel %vm416, %v514, 0.0
      %v520 = vsel %vm417, %v513, 0.0
      %v521 = vsel %vm416, %v512, 0.0
      %v522 = vsel %vm417, %v511, 0.0
      %v523 = vsel %vm416, %v510, 0.0
      %v524 = vsel %vm417, %v509, 0.0
      %v525 = vsel %vm416, %v508, 0.0
      %v526 = vsel %vm417, %v507, 0.0
      %v527 = vsel %vm416, %v506, 0.0
      %v528 = vsel %vm417, %v505, 0.0
      %v529 = vsel %vm416, %v504, 0.0
      %v530 = vsel %vm417, %v503, 0.0
      %v531 = vsel %vm416, %v502, 0.0
      %v532 = vsel %vm417, %v501, 0.0
      %v533 = vsel %vm416, %v500, 0.0
      %v534 = vsel %vm417, %v499, 0.0
      %v535 = vsel %vm416, %v498, 0.0
      %v536 = vsel %vm417, %v497, 0.0
      %v537 = vsel %vm416, %v496, 0.0
      %v538 = vsel %vm417, %v495, 0.0
      %v539 = vsel %vm416, %v494, 0.0
      %v540 = vsel %vm417, %v493, 0.0
      %v541 = vsel %vm416, %v492, 0.0
      %v542 = vsel %vm417, %v491, 0.0
      %v543 = vsel %vm416, %v490, 0.0
      %v544 = vsel %vm417, %v489, 0.0
      %v545 = vsel %vm416, %v488, 0.0
      %v546 = vsel %vm417, %v487, 0.0
      %v547 = vsel %vm416, %v486, 0.0
      %v548 = vsel %vm417, %v485, 0.0
      %v549 = vpack.c.bf16 %v518, %v517
      %v550 = vpack.c.bf16 %v520, %v519
      %v551 = vpack.c.bf16 %v522, %v521
      %v552 = vpack.c.bf16 %v524, %v523
      %v553 = vpack.c.bf16 %v526, %v525
      %v554 = vpack.c.bf16 %v528, %v527
      %v555 = vpack.c.bf16 %v530, %v529
      %v556 = vpack.c.bf16 %v532, %v531
      %v557 = vpack.c.bf16 %v534, %v533
      %v558 = vpack.c.bf16 %v536, %v535
      %v559 = vpack.c.bf16 %v538, %v537
      %v560 = vpack.c.bf16 %v540, %v539
      %v561 = vpack.c.bf16 %v542, %v541
      %v562 = vpack.c.bf16 %v544, %v543
      %v563 = vpack.c.bf16 %v546, %v545
      %v564 = vpack.c.bf16 %v548, %v547
      %v565 = vld [vmem:[%s3] sm:$0xf]
      %v566 = vld [vmem:[%s3 + $0x4] sm:$0xf]
      %v567 = vld [vmem:[%s3 + $0x8] sm:$0xf]
      %v568 = vld [vmem:[%s3 + $0xc] sm:$0xf]
      %v569 = vpack.c.bf16 %v421, %v420
      %v570 = vpack.c.bf16 %v423, %v422
      %v571 = vpack.c.bf16 %v425, %v424
      %v572 = vpack.c.bf16 %v427, %v426
      %v573 = vpack.c.bf16 %v429, %v428
      %v574 = vpack.c.bf16 %v431, %v430
      %v575 = vpack.c.bf16 %v433, %v432
      %v576 = vpack.c.bf16 %v435, %v434
      %v577 = vpack.c.bf16 %v437, %v436
      %v578 = vpack.c.bf16 %v439, %v438
      %v579 = vpack.c.bf16 %v441, %v440
      %v580 = vpack.c.bf16 %v443, %v442
      %v581 = vpack.c.bf16 %v445, %v444
      %v582 = vpack.c.bf16 %v447, %v446
      %v583 = vpack.c.bf16 %v449, %v448
      %v584 = vpack.c.bf16 %v451, %v450
      %s585 = scalar_lea.vmem %s3, 16
      %v586 = vld [vmem:[%s585] sm:$0xf]
      %v587 = vld [vmem:[%s585 + $0x4] sm:$0xf]
      %v588 = vld [vmem:[%s585 + $0x8] sm:$0xf]
      %v589 = vld [vmem:[%s585 + $0xc] sm:$0xf]
      %v594 = vunpack.c.l.b16 %v586
      %v595 = vunpack.c.l.b16 %v587
      %v596 = vunpack.c.l.b16 %v588
      %v597 = vunpack.c.l.b16 %v589
      %v598 = vpack.c.b16 %v595, %v594
      %v599 = vpack.c.b16 %v597, %v596
      %v603 = vsel %vm376, %v569, 0
      %v606 = vsel %vm376, %v570, 0
      %v609 = vsel %vm376, %v571, 0
      %v612 = vsel %vm376, %v572, 0
      %v615 = vsel %vm376, %v573, 0
      %v618 = vsel %vm376, %v574, 0
      %v621 = vsel %vm376, %v575, 0
      %v624 = vsel %vm376, %v576, 0
      %v627 = vsel %vm376, %v577, 0
      %v630 = vsel %vm376, %v578, 0
      %v633 = vsel %vm376, %v579, 0
      %v636 = vsel %vm376, %v580, 0
      %v639 = vsel %vm376, %v581, 0
      %v642 = vsel %vm376, %v582, 0
      %v645 = vsel %vm376, %v583, 0
      %v648 = vsel %vm376, %v584, 0
      %650 = vmatprep.subr.bf16.mxu0 0
      %651 = vmatpush1.bf16.msra.mxu0 0
      %652 = vmatprep.subr.bf16.mxu0 0
      %653 = vmatpush1.bf16.msra.mxu0 0
      %654 = vmatprep.subr.bf16.mxu0 0
      %655 = vmatpush1.bf16.msra.mxu0 0
      %656 = vmatprep.subr.bf16.mxu0 0
      %657 = vmatpush1.bf16.msra.mxu0 0
      %658 = vmatprep.subr.bf16.mxu0 0
      %659 = vmatpush1.bf16.msra.mxu0 0
      %660 = vmatprep.subr.bf16.mxu0 0
      %661 = vmatpush1.bf16.msra.mxu0 0
      %662 = vmatprep.subr.bf16.mxu0 0
      %663 = vmatpush1.bf16.msra.mxu0 %v599
      %664 = vmatprep.subr.bf16.mxu0 0
      %665 = vmatpush1.bf16.msra.mxu0 %v598
      %666 = vmatprep.subr.bf16.mxu0 0
      %667 = vmatpush2.bf16.msra.mxu0 0
      %668 = vmatprep.subr.bf16.mxu0 0
      %669 = vmatpush2.bf16.msra.mxu0 0
      %670 = vmatprep.subr.bf16.mxu0 0
      %671 = vmatpush2.bf16.msra.mxu0 0
      %672 = vmatprep.subr.bf16.mxu0 0
      %673 = vmatpush2.bf16.msra.mxu0 0
      %674 = vmatprep.subr.bf16.mxu0 0
      %675 = vmatpush2.bf16.msra.mxu0 0
      %676 = vmatprep.subr.bf16.mxu0 0
      %677 = vmatpush2.bf16.msra.mxu0 0
      %678 = vmatprep.subr.bf16.mxu0 0
      %679 = vmatpush2.bf16.msra.mxu0 0
      %680 = vmatprep.subr.bf16.mxu0 0
      %681 = vmatpush2.bf16.msra.mxu0 0
      %682 = vmatprep.mubr.bf16.mxu0 0
      %683 = vmatmul.mubr.bf16.gmra.mxu0 %v603
      %v684 = vpop.f32.mrf.mxu0
      %v685 = vadd.f32 0.0, %v684
      %v686 = vpop.f32.mrf.mxu0
      %v687 = vpop.f32.mrf.mxu0
      %v688 = vadd.f32 0.0, %v687
      %v689 = vpop.f32.mrf.mxu0
      %690 = vmatprep.mubr.bf16.mxu0 0
      %691 = vmatmul.mubr.bf16.gmra.mxu0 %v606
      %v692 = vpop.f32.mrf.mxu0
      %v693 = vadd.f32 0.0, %v692
      %v694 = vpop.f32.mrf.mxu0
      %v695 = vpop.f32.mrf.mxu0
      %v696 = vadd.f32 0.0, %v695
      %v697 = vpop.f32.mrf.mxu0
      %698 = vmatprep.mubr.bf16.mxu0 0
      %699 = vmatmul.mubr.bf16.gmra.mxu0 %v609
      %v700 = vpop.f32.mrf.mxu0
      %v701 = vadd.f32 0.0, %v700
      %v702 = vpop.f32.mrf.mxu0
      %v703 = vpop.f32.mrf.mxu0
      %v704 = vadd.f32 0.0, %v703
      %v705 = vpop.f32.mrf.mxu0
      %706 = vmatprep.mubr.bf16.mxu0 0
      %707 = vmatmul.mubr.bf16.gmra.mxu0 %v612
      %v708 = vpop.f32.mrf.mxu0
      %v709 = vadd.f32 0.0, %v708
      %v710 = vpop.f32.mrf.mxu0
      %v711 = vpop.f32.mrf.mxu0
      %v712 = vadd.f32 0.0, %v711
      %v713 = vpop.f32.mrf.mxu0
      %714 = vmatprep.mubr.bf16.mxu0 0
      %715 = vmatmul.mubr.bf16.gmra.mxu0 %v615
      %v716 = vpop.f32.mrf.mxu0
      %v717 = vadd.f32 0.0, %v716
      %v718 = vpop.f32.mrf.mxu0
      %v719 = vpop.f32.mrf.mxu0
      %v720 = vadd.f32 0.0, %v719
      %v721 = vpop.f32.mrf.mxu0
      %722 = vmatprep.mubr.bf16.mxu0 0
      %723 = vmatmul.mubr.bf16.gmra.mxu0 %v618
      %v724 = vpop.f32.mrf.mxu0
      %v725 = vadd.f32 0.0, %v724
      %v726 = vpop.f32.mrf.mxu0
      %v727 = vpop.f32.mrf.mxu0
      %v728 = vadd.f32 0.0, %v727
      %v729 = vpop.f32.mrf.mxu0
      %730 = vmatprep.mubr.bf16.mxu0 0
      %731 = vmatmul.mubr.bf16.gmra.mxu0 %v621
      %v732 = vpop.f32.mrf.mxu0
      %v733 = vadd.f32 0.0, %v732
      %v734 = vpop.f32.mrf.mxu0
      %v735 = vpop.f32.mrf.mxu0
      %v736 = vadd.f32 0.0, %v735
      %v737 = vpop.f32.mrf.mxu0
      %738 = vmatprep.mubr.bf16.mxu0 0
      %739 = vmatmul.mubr.bf16.gmra.mxu0 %v624
      %v740 = vpop.f32.mrf.mxu0
      %v741 = vadd.f32 0.0, %v740
      %v742 = vpop.f32.mrf.mxu0
      %v743 = vpop.f32.mrf.mxu0
      %v744 = vadd.f32 0.0, %v743
      %v745 = vpop.f32.mrf.mxu0
      %746 = vmatprep.mubr.bf16.mxu0 0
      %747 = vmatmul.mubr.bf16.gmra.mxu0 %v627
      %v748 = vpop.f32.mrf.mxu0
      %v749 = vadd.f32 0.0, %v748
      %v750 = vpop.f32.mrf.mxu0
      %v751 = vpop.f32.mrf.mxu0
      %v752 = vadd.f32 0.0, %v751
      %v753 = vpop.f32.mrf.mxu0
      %754 = vmatprep.mubr.bf16.mxu0 0
      %755 = vmatmul.mubr.bf16.gmra.mxu0 %v630
      %v756 = vpop.f32.mrf.mxu0
      %v757 = vadd.f32 0.0, %v756
      %v758 = vpop.f32.mrf.mxu0
      %v759 = vpop.f32.mrf.mxu0
      %v760 = vadd.f32 0.0, %v759
      %v761 = vpop.f32.mrf.mxu0
      %762 = vmatprep.mubr.bf16.mxu0 0
      %763 = vmatmul.mubr.bf16.gmra.mxu0 %v633
      %v764 = vpop.f32.mrf.mxu0
      %v765 = vadd.f32 0.0, %v764
      %v766 = vpop.f32.mrf.mxu0
      %v767 = vpop.f32.mrf.mxu0
      %v768 = vadd.f32 0.0, %v767
      %v769 = vpop.f32.mrf.mxu0
      %770 = vmatprep.mubr.bf16.mxu0 0
      %771 = vmatmul.mubr.bf16.gmra.mxu0 %v636
      %v772 = vpop.f32.mrf.mxu0
      %v773 = vadd.f32 0.0, %v772
      %v774 = vpop.f32.mrf.mxu0
      %v775 = vpop.f32.mrf.mxu0
      %v776 = vadd.f32 0.0, %v775
      %v777 = vpop.f32.mrf.mxu0
      %778 = vmatprep.mubr.bf16.mxu0 0
      %779 = vmatmul.mubr.bf16.gmra.mxu0 %v639
      %v780 = vpop.f32.mrf.mxu0
      %v781 = vadd.f32 0.0, %v780
      %v782 = vpop.f32.mrf.mxu0
      %v783 = vpop.f32.mrf.mxu0
      %v784 = vadd.f32 0.0, %v783
      %v785 = vpop.f32.mrf.mxu0
      %786 = vmatprep.mubr.bf16.mxu0 0
      %787 = vmatmul.mubr.bf16.gmra.mxu0 %v642
      %v788 = vpop.f32.mrf.mxu0
      %v789 = vadd.f32 0.0, %v788
      %v790 = vpop.f32.mrf.mxu0
      %v791 = vpop.f32.mrf.mxu0
      %v792 = vadd.f32 0.0, %v791
      %v793 = vpop.f32.mrf.mxu0
      %794 = vmatprep.mubr.bf16.mxu0 0
      %795 = vmatmul.mubr.bf16.gmra.mxu0 %v645
      %v796 = vpop.f32.mrf.mxu0
      %v797 = vadd.f32 0.0, %v796
      %v798 = vpop.f32.mrf.mxu0
      %v799 = vpop.f32.mrf.mxu0
      %v800 = vadd.f32 0.0, %v799
      %v801 = vpop.f32.mrf.mxu0
      %802 = vmatprep.mubr.bf16.mxu0 0
      %803 = vmatmul.mubr.bf16.gmra.mxu0 %v648
      %v804 = vpop.f32.mrf.mxu0
      %v805 = vadd.f32 0.0, %v804
      %v806 = vpop.f32.mrf.mxu0
      %v807 = vpop.f32.mrf.mxu0
      %v808 = vadd.f32 0.0, %v807
      %v809 = vpop.f32.mrf.mxu0
      %810 = vdwg.mxu0
      %v815 = vunpack.c.l.b16 %v565
      %v816 = vunpack.c.l.b16 %v566
      %v817 = vunpack.c.l.b16 %v567
      %v818 = vunpack.c.l.b16 %v568
      %v819 = vpack.c.b16 %v816, %v815
      %v820 = vpack.c.b16 %v818, %v817
      %v824 = vsel %vm376, %v549, 0
      %v827 = vsel %vm376, %v550, 0
      %v830 = vsel %vm376, %v551, 0
      %v833 = vsel %vm376, %v552, 0
      %v836 = vsel %vm376, %v553, 0
      %v839 = vsel %vm376, %v554, 0
      %v842 = vsel %vm376, %v555, 0
      %v845 = vsel %vm376, %v556, 0
      %v848 = vsel %vm376, %v557, 0
      %v851 = vsel %vm376, %v558, 0
      %v854 = vsel %vm376, %v559, 0
      %v857 = vsel %vm376, %v560, 0
      %v860 = vsel %vm376, %v561, 0
      %v863 = vsel %vm376, %v562, 0
      %v866 = vsel %vm376, %v563, 0
      %v869 = vsel %vm376, %v564, 0
      %871 = vmatprep.subr.bf16.mxu0 0
      %872 = vmatpush1.bf16.msra.mxu0 0
      %873 = vmatprep.subr.bf16.mxu0 0
      %874 = vmatpush1.bf16.msra.mxu0 0
      %875 = vmatprep.subr.bf16.mxu0 0
      %876 = vmatpush1.bf16.msra.mxu0 0
      %877 = vmatprep.subr.bf16.mxu0 0
      %878 = vmatpush1.bf16.msra.mxu0 0
      %879 = vmatprep.subr.bf16.mxu0 0
      %880 = vmatpush1.bf16.msra.mxu0 0
      %881 = vmatprep.subr.bf16.mxu0 0
      %882 = vmatpush1.bf16.msra.mxu0 0
      %883 = vmatprep.subr.bf16.mxu0 0
      %884 = vmatpush1.bf16.msra.mxu0 %v820
      %885 = vmatprep.subr.bf16.mxu0 0
      %886 = vmatpush1.bf16.msra.mxu0 %v819
      %887 = vmatprep.subr.bf16.mxu0 0
      %888 = vmatpush2.bf16.msra.mxu0 0
      %889 = vmatprep.subr.bf16.mxu0 0
      %890 = vmatpush2.bf16.msra.mxu0 0
      %891 = vmatprep.subr.bf16.mxu0 0
      %892 = vmatpush2.bf16.msra.mxu0 0
      %893 = vmatprep.subr.bf16.mxu0 0
      %894 = vmatpush2.bf16.msra.mxu0 0
      %895 = vmatprep.subr.bf16.mxu0 0
      %896 = vmatpush2.bf16.msra.mxu0 0
      %897 = vmatprep.subr.bf16.mxu0 0
      %898 = vmatpush2.bf16.msra.mxu0 0
      %899 = vmatprep.subr.bf16.mxu0 0
      %900 = vmatpush2.bf16.msra.mxu0 0
      %901 = vmatprep.subr.bf16.mxu0 0
      %902 = vmatpush2.bf16.msra.mxu0 0
      %903 = vmatprep.mubr.bf16.mxu0 0
      %904 = vmatmul.mubr.bf16.gmra.mxu0 %v824
      %v905 = vpop.f32.mrf.mxu0
      %v906 = vadd.f32 %v685, %v905
      %v907 = vpop.f32.mrf.mxu0
      %v908 = vpop.f32.mrf.mxu0
      %v909 = vadd.f32 %v688, %v908
      %v910 = vpop.f32.mrf.mxu0
      %911 = vmatprep.mubr.bf16.mxu0 0
      %912 = vmatmul.mubr.bf16.gmra.mxu0 %v827
      %v913 = vpop.f32.mrf.mxu0
      %v914 = vadd.f32 %v693, %v913
      %v915 = vpop.f32.mrf.mxu0
      %v916 = vpop.f32.mrf.mxu0
      %v917 = vadd.f32 %v696, %v916
      %v918 = vpop.f32.mrf.mxu0
      %919 = vmatprep.mubr.bf16.mxu0 0
      %920 = vmatmul.mubr.bf16.gmra.mxu0 %v830
      %v921 = vpop.f32.mrf.mxu0
      %v922 = vadd.f32 %v701, %v921
      %v923 = vpop.f32.mrf.mxu0
      %v924 = vpop.f32.mrf.mxu0
      %v925 = vadd.f32 %v704, %v924
      %v926 = vpop.f32.mrf.mxu0
      %927 = vmatprep.mubr.bf16.mxu0 0
      %928 = vmatmul.mubr.bf16.gmra.mxu0 %v833
      %v929 = vpop.f32.mrf.mxu0
      %v930 = vadd.f32 %v709, %v929
      %v931 = vpop.f32.mrf.mxu0
      %v932 = vpop.f32.mrf.mxu0
      %v933 = vadd.f32 %v712, %v932
      %v934 = vpop.f32.mrf.mxu0
      %935 = vmatprep.mubr.bf16.mxu0 0
      %936 = vmatmul.mubr.bf16.gmra.mxu0 %v836
      %v937 = vpop.f32.mrf.mxu0
      %v938 = vadd.f32 %v717, %v937
      %v939 = vpop.f32.mrf.mxu0
      %v940 = vpop.f32.mrf.mxu0
      %v941 = vadd.f32 %v720, %v940
      %v942 = vpop.f32.mrf.mxu0
      %943 = vmatprep.mubr.bf16.mxu0 0
      %944 = vmatmul.mubr.bf16.gmra.mxu0 %v839
      %v945 = vpop.f32.mrf.mxu0
      %v946 = vadd.f32 %v725, %v945
      %v947 = vpop.f32.mrf.mxu0
      %v948 = vpop.f32.mrf.mxu0
      %v949 = vadd.f32 %v728, %v948
      %v950 = vpop.f32.mrf.mxu0
      %951 = vmatprep.mubr.bf16.mxu0 0
      %952 = vmatmul.mubr.bf16.gmra.mxu0 %v842
      %v953 = vpop.f32.mrf.mxu0
      %v954 = vadd.f32 %v733, %v953
      %v955 = vpop.f32.mrf.mxu0
      %v956 = vpop.f32.mrf.mxu0
      %v957 = vadd.f32 %v736, %v956
      %v958 = vpop.f32.mrf.mxu0
      %959 = vmatprep.mubr.bf16.mxu0 0
      %960 = vmatmul.mubr.bf16.gmra.mxu0 %v845
      %v961 = vpop.f32.mrf.mxu0
      %v962 = vadd.f32 %v741, %v961
      %v963 = vpop.f32.mrf.mxu0
      %v964 = vpop.f32.mrf.mxu0
      %v965 = vadd.f32 %v744, %v964
      %v966 = vpop.f32.mrf.mxu0
      %967 = vmatprep.mubr.bf16.mxu0 0
      %968 = vmatmul.mubr.bf16.gmra.mxu0 %v848
      %v969 = vpop.f32.mrf.mxu0
      %v970 = vadd.f32 %v749, %v969
      %v971 = vpop.f32.mrf.mxu0
      %v972 = vpop.f32.mrf.mxu0
      %v973 = vadd.f32 %v752, %v972
      %v974 = vpop.f32.mrf.mxu0
      %975 = vmatprep.mubr.bf16.mxu0 0
      %976 = vmatmul.mubr.bf16.gmra.mxu0 %v851
      %v977 = vpop.f32.mrf.mxu0
      %v978 = vadd.f32 %v757, %v977
      %v979 = vpop.f32.mrf.mxu0
      %v980 = vpop.f32.mrf.mxu0
      %v981 = vadd.f32 %v760, %v980
      %v982 = vpop.f32.mrf.mxu0
      %983 = vmatprep.mubr.bf16.mxu0 0
      %984 = vmatmul.mubr.bf16.gmra.mxu0 %v854
      %v985 = vpop.f32.mrf.mxu0
      %v986 = vadd.f32 %v765, %v985
      %v987 = vpop.f32.mrf.mxu0
      %v988 = vpop.f32.mrf.mxu0
      %v989 = vadd.f32 %v768, %v988
      %v990 = vpop.f32.mrf.mxu0
      %991 = vmatprep.mubr.bf16.mxu0 0
      %992 = vmatmul.mubr.bf16.gmra.mxu0 %v857
      %v993 = vpop.f32.mrf.mxu0
      %v994 = vadd.f32 %v773, %v993
      %v995 = vpop.f32.mrf.mxu0
      %v996 = vpop.f32.mrf.mxu0
      %v997 = vadd.f32 %v776, %v996
      %v998 = vpop.f32.mrf.mxu0
      %999 = vmatprep.mubr.bf16.mxu0 0
      %1000 = vmatmul.mubr.bf16.gmra.mxu0 %v860
      %v1001 = vpop.f32.mrf.mxu0
      %v1002 = vadd.f32 %v781, %v1001
      %v1003 = vpop.f32.mrf.mxu0
      %v1004 = vpop.f32.mrf.mxu0
      %v1005 = vadd.f32 %v784, %v1004
      %v1006 = vpop.f32.mrf.mxu0
      %1007 = vmatprep.mubr.bf16.mxu0 0
      %1008 = vmatmul.mubr.bf16.gmra.mxu0 %v863
      %v1009 = vpop.f32.mrf.mxu0
      %v1010 = vadd.f32 %v789, %v1009
      %v1011 = vpop.f32.mrf.mxu0
      %v1012 = vpop.f32.mrf.mxu0
      %v1013 = vadd.f32 %v792, %v1012
      %v1014 = vpop.f32.mrf.mxu0
      %1015 = vmatprep.mubr.bf16.mxu0 0
      %1016 = vmatmul.mubr.bf16.gmra.mxu0 %v866
      %v1017 = vpop.f32.mrf.mxu0
      %v1018 = vadd.f32 %v797, %v1017
      %v1019 = vpop.f32.mrf.mxu0
      %v1020 = vpop.f32.mrf.mxu0
      %v1021 = vadd.f32 %v800, %v1020
      %v1022 = vpop.f32.mrf.mxu0
      %1023 = vmatprep.mubr.bf16.mxu0 0
      %1024 = vmatmul.mubr.bf16.gmra.mxu0 %v869
      %v1025 = vpop.f32.mrf.mxu0
      %v1026 = vadd.f32 %v805, %v1025
      %v1027 = vpop.f32.mrf.mxu0
      %v1028 = vpop.f32.mrf.mxu0
      %v1029 = vadd.f32 %v808, %v1028
      %v1030 = vpop.f32.mrf.mxu0
      %1031 = vdwg.mxu0
      %v1032 = vrot.slane %v420, 1
      %v1033 = vrot.slane %v421, 1
      %v1034 = vrot.slane %v422, 1
      %v1035 = vrot.slane %v423, 1
      %v1036 = vrot.slane %v424, 1
      %v1037 = vrot.slane %v425, 1
      %v1038 = vrot.slane %v426, 1
      %v1039 = vrot.slane %v427, 1
      %v1040 = vrot.slane %v428, 1
      %v1041 = vrot.slane %v429, 1
      %v1042 = vrot.slane %v430, 1
      %v1043 = vrot.slane %v431, 1
      %v1044 = vrot.slane %v432, 1
      %v1045 = vrot.slane %v433, 1
      %v1046 = vrot.slane %v434, 1
      %v1047 = vrot.slane %v435, 1
      %v1048 = vrot.slane %v436, 1
      %v1049 = vrot.slane %v437, 1
      %v1050 = vrot.slane %v438, 1
      %v1051 = vrot.slane %v439, 1
      %v1052 = vrot.slane %v440, 1
      %v1053 = vrot.slane %v441, 1
      %v1054 = vrot.slane %v442, 1
      %v1055 = vrot.slane %v443, 1
      %v1056 = vrot.slane %v444, 1
      %v1057 = vrot.slane %v445, 1
      %v1058 = vrot.slane %v446, 1
      %v1059 = vrot.slane %v447, 1
      %v1060 = vrot.slane %v448, 1
      %v1061 = vrot.slane %v449, 1
      %v1062 = vrot.slane %v450, 1
      %v1063 = vrot.slane %v451, 1
      %vm1064 = vcmp.lt.s32.totalorder %v414, 7
      %v1065 = vsel %vm1064, %v1062, %v1063
      %v1066 = vsel %vm1064, %v1061, %v1062
      %v1067 = vsel %vm1064, %v1060, %v1061
      %v1068 = vsel %vm1064, %v1059, %v1060
      %v1069 = vsel %vm1064, %v1058, %v1059
      %v1070 = vsel %vm1064, %v1057, %v1058
      %v1071 = vsel %vm1064, %v1056, %v1057
      %v1072 = vsel %vm1064, %v1055, %v1056
      %v1073 = vsel %vm1064, %v1054, %v1055
      %v1074 = vsel %vm1064, %v1053, %v1054
      %v1075 = vsel %vm1064, %v1052, %v1053
      %v1076 = vsel %vm1064, %v1051, %v1052
      %v1077 = vsel %vm1064, %v1050, %v1051
      %v1078 = vsel %vm1064, %v1049, %v1050
      %v1079 = vsel %vm1064, %v1048, %v1049
      %v1080 = vsel %vm1064, %v1047, %v1048
      %v1081 = vsel %vm1064, %v1046, %v1047
      %v1082 = vsel %vm1064, %v1045, %v1046
      %v1083 = vsel %vm1064, %v1044, %v1045
      %v1084 = vsel %vm1064, %v1043, %v1044
      %v1085 = vsel %vm1064, %v1042, %v1043
      %v1086 = vsel %vm1064, %v1041, %v1042
      %v1087 = vsel %vm1064, %v1040, %v1041
      %v1088 = vsel %vm1064, %v1039, %v1040
      %v1089 = vsel %vm1064, %v1038, %v1039
      %v1090 = vsel %vm1064, %v1037, %v1038
      %v1091 = vsel %vm1064, %v1036, %v1037
      %v1092 = vsel %vm1064, %v1035, %v1036
      %v1093 = vsel %vm1064, %v1034, %v1035
      %v1094 = vsel %vm1064, %v1033, %v1034
      %v1095 = vsel %vm1064, %v1032, %v1033
      %v1096 = vsel %vm1064, %v1063, %v1032
      %v1097 = vsel %vm418, %v1095, 0.0
      %v1098 = vsel %vm419, %v1094, 0.0
      %v1099 = vsel %vm418, %v1093, 0.0
      %v1100 = vsel %vm419, %v1092, 0.0
      %v1101 = vsel %vm418, %v1091, 0.0
      %v1102 = vsel %vm419, %v1090, 0.0
      %v1103 = vsel %vm418, %v1089, 0.0
      %v1104 = vsel %vm419, %v1088, 0.0
      %v1105 = vsel %vm418, %v1087, 0.0
      %v1106 = vsel %vm419, %v1086, 0.0
      %v1107 = vsel %vm418, %v1085, 0.0
      %v1108 = vsel %vm419, %v1084, 0.0
      %v1109 = vsel %vm418, %v1083, 0.0
      %v1110 = vsel %vm419, %v1082, 0.0
      %v1111 = vsel %vm418, %v1081, 0.0
      %v1112 = vsel %vm419, %v1080, 0.0
      %v1113 = vsel %vm418, %v1079, 0.0
      %v1114 = vsel %vm419, %v1078, 0.0
      %v1115 = vsel %vm418, %v1077, 0.0
      %v1116 = vsel %vm419, %v1076, 0.0
      %v1117 = vsel %vm418, %v1075, 0.0
      %v1118 = vsel %vm419, %v1074, 0.0
      %v1119 = vsel %vm418, %v1073, 0.0
      %v1120 = vsel %vm419, %v1072, 0.0
      %v1121 = vsel %vm418, %v1071, 0.0
      %v1122 = vsel %vm419, %v1070, 0.0
      %v1123 = vsel %vm418, %v1069, 0.0
      %v1124 = vsel %vm419, %v1068, 0.0
      %v1125 = vsel %vm418, %v1067, 0.0
      %v1126 = vsel %vm419, %v1066, 0.0
      %v1127 = vsel %vm418, %v1065, 0.0
      %v1128 = vsel %vm419, %v1096, 0.0
      %v1129 = vpack.c.bf16 %v1098, %v1097
      %v1130 = vpack.c.bf16 %v1100, %v1099
      %v1131 = vpack.c.bf16 %v1102, %v1101
      %v1132 = vpack.c.bf16 %v1104, %v1103
      %v1133 = vpack.c.bf16 %v1106, %v1105
      %v1134 = vpack.c.bf16 %v1108, %v1107
      %v1135 = vpack.c.bf16 %v1110, %v1109
      %v1136 = vpack.c.bf16 %v1112, %v1111
      %v1137 = vpack.c.bf16 %v1114, %v1113
      %v1138 = vpack.c.bf16 %v1116, %v1115
      %v1139 = vpack.c.bf16 %v1118, %v1117
      %v1140 = vpack.c.bf16 %v1120, %v1119
      %v1141 = vpack.c.bf16 %v1122, %v1121
      %v1142 = vpack.c.bf16 %v1124, %v1123
      %v1143 = vpack.c.bf16 %v1126, %v1125
      %v1144 = vpack.c.bf16 %v1128, %v1127
      %s1145 = scalar_lea.vmem %s3, 32
      %v1146 = vld [vmem:[%s1145] sm:$0xf]
      %v1147 = vld [vmem:[%s1145 + $0x4] sm:$0xf]
      %v1148 = vld [vmem:[%s1145 + $0x8] sm:$0xf]
      %v1149 = vld [vmem:[%s1145 + $0xc] sm:$0xf]
      %v1154 = vunpack.c.l.b16 %v1146
      %v1155 = vunpack.c.l.b16 %v1147
      %v1156 = vunpack.c.l.b16 %v1148
      %v1157 = vunpack.c.l.b16 %v1149
      %v1158 = vpack.c.b16 %v1155, %v1154
      %v1159 = vpack.c.b16 %v1157, %v1156
      %v1163 = vsel %vm376, %v1129, 0
      %v1166 = vsel %vm376, %v1130, 0
      %v1169 = vsel %vm376, %v1131, 0
      %v1172 = vsel %vm376, %v1132, 0
      %v1175 = vsel %vm376, %v1133, 0
      %v1178 = vsel %vm376, %v1134, 0
      %v1181 = vsel %vm376, %v1135, 0
      %v1184 = vsel %vm376, %v1136, 0
      %v1187 = vsel %vm376, %v1137, 0
      %v1190 = vsel %vm376, %v1138, 0
      %v1193 = vsel %vm376, %v1139, 0
      %v1196 = vsel %vm376, %v1140, 0
      %v1199 = vsel %vm376, %v1141, 0
      %v1202 = vsel %vm376, %v1142, 0
      %v1205 = vsel %vm376, %v1143, 0
      %v1208 = vsel %vm376, %v1144, 0
      %1210 = vmatprep.subr.bf16.mxu0 0
      %1211 = vmatpush1.bf16.msra.mxu0 0
      %1212 = vmatprep.subr.bf16.mxu0 0
      %1213 = vmatpush1.bf16.msra.mxu0 0
      %1214 = vmatprep.subr.bf16.mxu0 0
      %1215 = vmatpush1.bf16.msra.mxu0 0
      %1216 = vmatprep.subr.bf16.mxu0 0
      %1217 = vmatpush1.bf16.msra.mxu0 0
      %1218 = vmatprep.subr.bf16.mxu0 0
      %1219 = vmatpush1.bf16.msra.mxu0 0
      %1220 = vmatprep.subr.bf16.mxu0 0
      %1221 = vmatpush1.bf16.msra.mxu0 0
      %1222 = vmatprep.subr.bf16.mxu0 0
      %1223 = vmatpush1.bf16.msra.mxu0 %v1159
      %1224 = vmatprep.subr.bf16.mxu0 0
      %1225 = vmatpush1.bf16.msra.mxu0 %v1158
      %1226 = vmatprep.subr.bf16.mxu0 0
      %1227 = vmatpush2.bf16.msra.mxu0 0
      %1228 = vmatprep.subr.bf16.mxu0 0
      %1229 = vmatpush2.bf16.msra.mxu0 0
      %1230 = vmatprep.subr.bf16.mxu0 0
      %1231 = vmatpush2.bf16.msra.mxu0 0
      %1232 = vmatprep.subr.bf16.mxu0 0
      %1233 = vmatpush2.bf16.msra.mxu0 0
      %1234 = vmatprep.subr.bf16.mxu0 0
      %1235 = vmatpush2.bf16.msra.mxu0 0
      %1236 = vmatprep.subr.bf16.mxu0 0
      %1237 = vmatpush2.bf16.msra.mxu0 0
      %1238 = vmatprep.subr.bf16.mxu0 0
      %1239 = vmatpush2.bf16.msra.mxu0 0
      %1240 = vmatprep.subr.bf16.mxu0 0
      %1241 = vmatpush2.bf16.msra.mxu0 0
      %1242 = vmatprep.mubr.bf16.mxu0 0
      %1243 = vmatmul.mubr.bf16.gmra.mxu0 %v1163
      %v1244 = vpop.f32.mrf.mxu0
      %v1245 = vadd.f32 0.0, %v1244
      %v1246 = vpop.f32.mrf.mxu0
      %v1247 = vpop.f32.mrf.mxu0
      %v1248 = vadd.f32 0.0, %v1247
      %v1249 = vpop.f32.mrf.mxu0
      %1250 = vmatprep.mubr.bf16.mxu0 0
      %1251 = vmatmul.mubr.bf16.gmra.mxu0 %v1166
      %v1252 = vpop.f32.mrf.mxu0
      %v1253 = vadd.f32 0.0, %v1252
      %v1254 = vpop.f32.mrf.mxu0
      %v1255 = vpop.f32.mrf.mxu0
      %v1256 = vadd.f32 0.0, %v1255
      %v1257 = vpop.f32.mrf.mxu0
      %1258 = vmatprep.mubr.bf16.mxu0 0
      %1259 = vmatmul.mubr.bf16.gmra.mxu0 %v1169
      %v1260 = vpop.f32.mrf.mxu0
      %v1261 = vadd.f32 0.0, %v1260
      %v1262 = vpop.f32.mrf.mxu0
      %v1263 = vpop.f32.mrf.mxu0
      %v1264 = vadd.f32 0.0, %v1263
      %v1265 = vpop.f32.mrf.mxu0
      %1266 = vmatprep.mubr.bf16.mxu0 0
      %1267 = vmatmul.mubr.bf16.gmra.mxu0 %v1172
      %v1268 = vpop.f32.mrf.mxu0
      %v1269 = vadd.f32 0.0, %v1268
      %v1270 = vpop.f32.mrf.mxu0
      %v1271 = vpop.f32.mrf.mxu0
      %v1272 = vadd.f32 0.0, %v1271
      %v1273 = vpop.f32.mrf.mxu0
      %1274 = vmatprep.mubr.bf16.mxu0 0
      %1275 = vmatmul.mubr.bf16.gmra.mxu0 %v1175
      %v1276 = vpop.f32.mrf.mxu0
      %v1277 = vadd.f32 0.0, %v1276
      %v1278 = vpop.f32.mrf.mxu0
      %v1279 = vpop.f32.mrf.mxu0
      %v1280 = vadd.f32 0.0, %v1279
      %v1281 = vpop.f32.mrf.mxu0
      %1282 = vmatprep.mubr.bf16.mxu0 0
      %1283 = vmatmul.mubr.bf16.gmra.mxu0 %v1178
      %v1284 = vpop.f32.mrf.mxu0
      %v1285 = vadd.f32 0.0, %v1284
      %v1286 = vpop.f32.mrf.mxu0
      %v1287 = vpop.f32.mrf.mxu0
      %v1288 = vadd.f32 0.0, %v1287
      %v1289 = vpop.f32.mrf.mxu0
      %1290 = vmatprep.mubr.bf16.mxu0 0
      %1291 = vmatmul.mubr.bf16.gmra.mxu0 %v1181
      %v1292 = vpop.f32.mrf.mxu0
      %v1293 = vadd.f32 0.0, %v1292
      %v1294 = vpop.f32.mrf.mxu0
      %v1295 = vpop.f32.mrf.mxu0
      %v1296 = vadd.f32 0.0, %v1295
      %v1297 = vpop.f32.mrf.mxu0
      %1298 = vmatprep.mubr.bf16.mxu0 0
      %1299 = vmatmul.mubr.bf16.gmra.mxu0 %v1184
      %v1300 = vpop.f32.mrf.mxu0
      %v1301 = vadd.f32 0.0, %v1300
      %v1302 = vpop.f32.mrf.mxu0
      %v1303 = vpop.f32.mrf.mxu0
      %v1304 = vadd.f32 0.0, %v1303
      %v1305 = vpop.f32.mrf.mxu0
      %1306 = vmatprep.mubr.bf16.mxu0 0
      %1307 = vmatmul.mubr.bf16.gmra.mxu0 %v1187
      %v1308 = vpop.f32.mrf.mxu0
      %v1309 = vadd.f32 0.0, %v1308
      %v1310 = vpop.f32.mrf.mxu0
      %v1311 = vpop.f32.mrf.mxu0
      %v1312 = vadd.f32 0.0, %v1311
      %v1313 = vpop.f32.mrf.mxu0
      %1314 = vmatprep.mubr.bf16.mxu0 0
      %1315 = vmatmul.mubr.bf16.gmra.mxu0 %v1190
      %v1316 = vpop.f32.mrf.mxu0
      %v1317 = vadd.f32 0.0, %v1316
      %v1318 = vpop.f32.mrf.mxu0
      %v1319 = vpop.f32.mrf.mxu0
      %v1320 = vadd.f32 0.0, %v1319
      %v1321 = vpop.f32.mrf.mxu0
      %1322 = vmatprep.mubr.bf16.mxu0 0
      %1323 = vmatmul.mubr.bf16.gmra.mxu0 %v1193
      %v1324 = vpop.f32.mrf.mxu0
      %v1325 = vadd.f32 0.0, %v1324
      %v1326 = vpop.f32.mrf.mxu0
      %v1327 = vpop.f32.mrf.mxu0
      %v1328 = vadd.f32 0.0, %v1327
      %v1329 = vpop.f32.mrf.mxu0
      %1330 = vmatprep.mubr.bf16.mxu0 0
      %1331 = vmatmul.mubr.bf16.gmra.mxu0 %v1196
      %v1332 = vpop.f32.mrf.mxu0
      %v1333 = vadd.f32 0.0, %v1332
      %v1334 = vpop.f32.mrf.mxu0
      %v1335 = vpop.f32.mrf.mxu0
      %v1336 = vadd.f32 0.0, %v1335
      %v1337 = vpop.f32.mrf.mxu0
      %1338 = vmatprep.mubr.bf16.mxu0 0
      %1339 = vmatmul.mubr.bf16.gmra.mxu0 %v1199
      %v1340 = vpop.f32.mrf.mxu0
      %v1341 = vadd.f32 0.0, %v1340
      %v1342 = vpop.f32.mrf.mxu0
      %v1343 = vpop.f32.mrf.mxu0
      %v1344 = vadd.f32 0.0, %v1343
      %v1345 = vpop.f32.mrf.mxu0
      %1346 = vmatprep.mubr.bf16.mxu0 0
      %1347 = vmatmul.mubr.bf16.gmra.mxu0 %v1202
      %v1348 = vpop.f32.mrf.mxu0
      %v1349 = vadd.f32 0.0, %v1348
      %v1350 = vpop.f32.mrf.mxu0
      %v1351 = vpop.f32.mrf.mxu0
      %v1352 = vadd.f32 0.0, %v1351
      %v1353 = vpop.f32.mrf.mxu0
      %1354 = vmatprep.mubr.bf16.mxu0 0
      %1355 = vmatmul.mubr.bf16.gmra.mxu0 %v1205
      %v1356 = vpop.f32.mrf.mxu0
      %v1357 = vadd.f32 0.0, %v1356
      %v1358 = vpop.f32.mrf.mxu0
      %v1359 = vpop.f32.mrf.mxu0
      %v1360 = vadd.f32 0.0, %v1359
      %v1361 = vpop.f32.mrf.mxu0
      %1362 = vmatprep.mubr.bf16.mxu0 0
      %1363 = vmatmul.mubr.bf16.gmra.mxu0 %v1208
      %v1364 = vpop.f32.mrf.mxu0
      %v1365 = vadd.f32 0.0, %v1364
      %v1366 = vpop.f32.mrf.mxu0
      %v1367 = vpop.f32.mrf.mxu0
      %v1368 = vadd.f32 0.0, %v1367
      %v1369 = vpop.f32.mrf.mxu0
      %1370 = vdwg.mxu0
      %v1371 = vadd.f32 %v906, %v1245
      %v1372 = vadd.f32 %v909, %v1248
      %v1373 = vadd.f32 %v914, %v1253
      %v1374 = vadd.f32 %v917, %v1256
      %v1375 = vadd.f32 %v922, %v1261
      %v1376 = vadd.f32 %v925, %v1264
      %v1377 = vadd.f32 %v930, %v1269
      %v1378 = vadd.f32 %v933, %v1272
      %v1379 = vadd.f32 %v938, %v1277
      %v1380 = vadd.f32 %v941, %v1280
      %v1381 = vadd.f32 %v946, %v1285
      %v1382 = vadd.f32 %v949, %v1288
      %v1383 = vadd.f32 %v954, %v1293
      %v1384 = vadd.f32 %v957, %v1296
      %v1385 = vadd.f32 %v962, %v1301
      %v1386 = vadd.f32 %v965, %v1304
      %v1387 = vadd.f32 %v970, %v1309
      %v1388 = vadd.f32 %v973, %v1312
      %v1389 = vadd.f32 %v978, %v1317
      %v1390 = vadd.f32 %v981, %v1320
      %v1391 = vadd.f32 %v986, %v1325
      %v1392 = vadd.f32 %v989, %v1328
      %v1393 = vadd.f32 %v994, %v1333
      %v1394 = vadd.f32 %v997, %v1336
      %v1395 = vadd.f32 %v1002, %v1341
      %v1396 = vadd.f32 %v1005, %v1344
      %v1397 = vadd.f32 %v1010, %v1349
      %v1398 = vadd.f32 %v1013, %v1352
      %v1399 = vadd.f32 %v1018, %v1357
      %v1400 = vadd.f32 %v1021, %v1360
      %v1401 = vadd.f32 %v1026, %v1365
      %v1402 = vadd.f32 %v1029, %v1368
      %v1403 = vld [vmem:[#allocation2 + $0x10] sm:$0xff]
      %v1404 = vld [vmem:[#allocation2 + $0x18] sm:$0xff]
      %v1405 = vld [vmem:[#allocation2 + $0x20] sm:$0xff]
      %v1406 = vld [vmem:[#allocation2 + $0x28] sm:$0xff]
      %v1407 = vld [vmem:[#allocation2 + $0x30] sm:$0xff]
      %v1408 = vld [vmem:[#allocation2 + $0x38] sm:$0xff]
      %v1409 = vld [vmem:[#allocation2 + $0x40] sm:$0xff]
      %v1410 = vld [vmem:[#allocation2 + $0x48] sm:$0xff]
      %v1411 = vld [vmem:[#allocation2 + $0x50] sm:$0xff]
      %v1412 = vld [vmem:[#allocation2 + $0x58] sm:$0xff]
      %v1413 = vld [vmem:[#allocation2 + $0x60] sm:$0xff]
      %v1414 = vld [vmem:[#allocation2 + $0x68] sm:$0xff]
      %v1415 = vld [vmem:[#allocation2 + $0x70] sm:$0xff]
      %v1416 = vld [vmem:[#allocation2 + $0x78] sm:$0xff]
      %v1417 = vld [vmem:[#allocation2 + $0x80] sm:$0xff]
      %v1418 = vld [vmem:[#allocation2 + $0x88] sm:$0xff]
      %v1419 = vld [vmem:[#allocation2 + $0x90] sm:$0xff]
      %v1420 = vld [vmem:[#allocation2 + $0x98] sm:$0xff]
      %v1421 = vld [vmem:[#allocation2 + $0xa0] sm:$0xff]
      %v1422 = vld [vmem:[#allocation2 + $0xa8] sm:$0xff]
      %v1423 = vld [vmem:[#allocation2 + $0xb0] sm:$0xff]
      %v1424 = vld [vmem:[#allocation2 + $0xb8] sm:$0xff]
      %v1425 = vld [vmem:[#allocation2 + $0xc0] sm:$0xff]
      %v1426 = vld [vmem:[#allocation2 + $0xc8] sm:$0xff]
      %v1427 = vld [vmem:[#allocation2 + $0xd0] sm:$0xff]
      %v1428 = vld [vmem:[#allocation2 + $0xd8] sm:$0xff]
      %v1429 = vld [vmem:[#allocation2 + $0xe0] sm:$0xff]
      %v1430 = vld [vmem:[#allocation2 + $0xe8] sm:$0xff]
      %v1431 = vld [vmem:[#allocation2 + $0xf0] sm:$0xff]
      %v1432 = vld [vmem:[#allocation2 + $0xf8] sm:$0xff]
      %v1433 = vld [vmem:[#allocation2 + $0x100] sm:$0xff]
      %v1434 = vld [vmem:[#allocation2 + $0x108] sm:$0xff]
      %v1435 = vrot.slane %v1403, 7
      %v1436 = vrot.slane %v1404, 7
      %v1437 = vrot.slane %v1405, 7
      %v1438 = vrot.slane %v1406, 7
      %v1439 = vrot.slane %v1407, 7
      %v1440 = vrot.slane %v1408, 7
      %v1441 = vrot.slane %v1409, 7
      %v1442 = vrot.slane %v1410, 7
      %v1443 = vrot.slane %v1411, 7
      %v1444 = vrot.slane %v1412, 7
      %v1445 = vrot.slane %v1413, 7
      %v1446 = vrot.slane %v1414, 7
      %v1447 = vrot.slane %v1415, 7
      %v1448 = vrot.slane %v1416, 7
      %v1449 = vrot.slane %v1417, 7
      %v1450 = vrot.slane %v1418, 7
      %v1451 = vrot.slane %v1419, 7
      %v1452 = vrot.slane %v1420, 7
      %v1453 = vrot.slane %v1421, 7
      %v1454 = vrot.slane %v1422, 7
      %v1455 = vrot.slane %v1423, 7
      %v1456 = vrot.slane %v1424, 7
      %v1457 = vrot.slane %v1425, 7
      %v1458 = vrot.slane %v1426, 7
      %v1459 = vrot.slane %v1427, 7
      %v1460 = vrot.slane %v1428, 7
      %v1461 = vrot.slane %v1429, 7
      %v1462 = vrot.slane %v1430, 7
      %v1463 = vrot.slane %v1431, 7
      %v1464 = vrot.slane %v1432, 7
      %v1465 = vrot.slane %v1433, 7
      %v1466 = vrot.slane %v1434, 7
      %v1467 = vsel %vm484, %v1465, %v1466
      %v1468 = vsel %vm484, %v1464, %v1465
      %v1469 = vsel %vm484, %v1463, %v1464
      %v1470 = vsel %vm484, %v1462, %v1463
      %v1471 = vsel %vm484, %v1461, %v1462
      %v1472 = vsel %vm484, %v1460, %v1461
      %v1473 = vsel %vm484, %v1459, %v1460
      %v1474 = vsel %vm484, %v1458, %v1459
      %v1475 = vsel %vm484, %v1457, %v1458
      %v1476 = vsel %vm484, %v1456, %v1457
      %v1477 = vsel %vm484, %v1455, %v1456
      %v1478 = vsel %vm484, %v1454, %v1455
      %v1479 = vsel %vm484, %v1453, %v1454
      %v1480 = vsel %vm484, %v1452, %v1453
      %v1481 = vsel %vm484, %v1451, %v1452
      %v1482 = vsel %vm484, %v1450, %v1451
      %v1483 = vsel %vm484, %v1449, %v1450
      %v1484 = vsel %vm484, %v1448, %v1449
      %v1485 = vsel %vm484, %v1447, %v1448
      %v1486 = vsel %vm484, %v1446, %v1447
      %v1487 = vsel %vm484, %v1445, %v1446
      %v1488 = vsel %vm484, %v1444, %v1445
      %v1489 = vsel %vm484, %v1443, %v1444
      %v1490 = vsel %vm484, %v1442, %v1443
      %v1491 = vsel %vm484, %v1441, %v1442
      %v1492 = vsel %vm484, %v1440, %v1441
      %v1493 = vsel %vm484, %v1439, %v1440
      %v1494 = vsel %vm484, %v1438, %v1439
      %v1495 = vsel %vm484, %v1437, %v1438
      %v1496 = vsel %vm484, %v1436, %v1437
      %v1497 = vsel %vm484, %v1435, %v1436
      %v1498 = vsel %vm484, %v1466, %v1435
      %v1499 = vsel %vm416, %v1498, 0.0
      %v1500 = vsel %vm417, %v1497, 0.0
      %v1501 = vsel %vm416, %v1496, 0.0
      %v1502 = vsel %vm417, %v1495, 0.0
      %v1503 = vsel %vm416, %v1494, 0.0
      %v1504 = vsel %vm417, %v1493, 0.0
      %v1505 = vsel %vm416, %v1492, 0.0
      %v1506 = vsel %vm417, %v1491, 0.0
      %v1507 = vsel %vm416, %v1490, 0.0
      %v1508 = vsel %vm417, %v1489, 0.0
      %v1509 = vsel %vm416, %v1488, 0.0
      %v1510 = vsel %vm417, %v1487, 0.0
      %v1511 = vsel %vm416, %v1486, 0.0
      %v1512 = vsel %vm417, %v1485, 0.0
      %v1513 = vsel %vm416, %v1484, 0.0
      %v1514 = vsel %vm417, %v1483, 0.0
      %v1515 = vsel %vm416, %v1482, 0.0
      %v1516 = vsel %vm417, %v1481, 0.0
      %v1517 = vsel %vm416, %v1480, 0.0
      %v1518 = vsel %vm417, %v1479, 0.0
      %v1519 = vsel %vm416, %v1478, 0.0
      %v1520 = vsel %vm417, %v1477, 0.0
      %v1521 = vsel %vm416, %v1476, 0.0
      %v1522 = vsel %vm417, %v1475, 0.0
      %v1523 = vsel %vm416, %v1474, 0.0
      %v1524 = vsel %vm417, %v1473, 0.0
      %v1525 = vsel %vm416, %v1472, 0.0
      %v1526 = vsel %vm417, %v1471, 0.0
      %v1527 = vsel %vm416, %v1470, 0.0
      %v1528 = vsel %vm417, %v1469, 0.0
      %v1529 = vsel %vm416, %v1468, 0.0
      %v1530 = vsel %vm417, %v1467, 0.0
      %v1531 = vpack.c.bf16 %v1500, %v1499
      %v1532 = vpack.c.bf16 %v1502, %v1501
      %v1533 = vpack.c.bf16 %v1504, %v1503
      %v1534 = vpack.c.bf16 %v1506, %v1505
      %v1535 = vpack.c.bf16 %v1508, %v1507
      %v1536 = vpack.c.bf16 %v1510, %v1509
      %v1537 = vpack.c.bf16 %v1512, %v1511
      %v1538 = vpack.c.bf16 %v1514, %v1513
      %v1539 = vpack.c.bf16 %v1516, %v1515
      %v1540 = vpack.c.bf16 %v1518, %v1517
      %v1541 = vpack.c.bf16 %v1520, %v1519
      %v1542 = vpack.c.bf16 %v1522, %v1521
      %v1543 = vpack.c.bf16 %v1524, %v1523
      %v1544 = vpack.c.bf16 %v1526, %v1525
      %v1545 = vpack.c.bf16 %v1528, %v1527
      %v1546 = vpack.c.bf16 %v1530, %v1529
      %s1547 = scalar_lea.vmem %s3, 48
      %v1548 = vld [vmem:[%s1547] sm:$0xf]
      %v1549 = vld [vmem:[%s1547 + $0x4] sm:$0xf]
      %v1550 = vld [vmem:[%s1547 + $0x8] sm:$0xf]
      %v1551 = vld [vmem:[%s1547 + $0xc] sm:$0xf]
      %v1556 = vunpack.c.l.b16 %v1548
      %v1557 = vunpack.c.l.b16 %v1549
      %v1558 = vunpack.c.l.b16 %v1550
      %v1559 = vunpack.c.l.b16 %v1551
      %v1560 = vpack.c.b16 %v1557, %v1556
      %v1561 = vpack.c.b16 %v1559, %v1558
      %v1565 = vsel %vm376, %v1531, 0
      %v1568 = vsel %vm376, %v1532, 0
      %v1571 = vsel %vm376, %v1533, 0
      %v1574 = vsel %vm376, %v1534, 0
      %v1577 = vsel %vm376, %v1535, 0
      %v1580 = vsel %vm376, %v1536, 0
      %v1583 = vsel %vm376, %v1537, 0
      %v1586 = vsel %vm376, %v1538, 0
      %v1589 = vsel %vm376, %v1539, 0
      %v1592 = vsel %vm376, %v1540, 0
      %v1595 = vsel %vm376, %v1541, 0
      %v1598 = vsel %vm376, %v1542, 0
      %v1601 = vsel %vm376, %v1543, 0
      %v1604 = vsel %vm376, %v1544, 0
      %v1607 = vsel %vm376, %v1545, 0
      %v1610 = vsel %vm376, %v1546, 0
      %1612 = vmatprep.subr.bf16.mxu0 0
      %1613 = vmatpush1.bf16.msra.mxu0 0
      %1614 = vmatprep.subr.bf16.mxu0 0
      %1615 = vmatpush1.bf16.msra.mxu0 0
      %1616 = vmatprep.subr.bf16.mxu0 0
      %1617 = vmatpush1.bf16.msra.mxu0 0
      %1618 = vmatprep.subr.bf16.mxu0 0
      %1619 = vmatpush1.bf16.msra.mxu0 0
      %1620 = vmatprep.subr.bf16.mxu0 0
      %1621 = vmatpush1.bf16.msra.mxu0 0
      %1622 = vmatprep.subr.bf16.mxu0 0
      %1623 = vmatpush1.bf16.msra.mxu0 0
      %1624 = vmatprep.subr.bf16.mxu0 0
      %1625 = vmatpush1.bf16.msra.mxu0 %v1561
      %1626 = vmatprep.subr.bf16.mxu0 0
      %1627 = vmatpush1.bf16.msra.mxu0 %v1560
      %1628 = vmatprep.subr.bf16.mxu0 0
      %1629 = vmatpush2.bf16.msra.mxu0 0
      %1630 = vmatprep.subr.bf16.mxu0 0
      %1631 = vmatpush2.bf16.msra.mxu0 0
      %1632 = vmatprep.subr.bf16.mxu0 0
      %1633 = vmatpush2.bf16.msra.mxu0 0
      %1634 = vmatprep.subr.bf16.mxu0 0
      %1635 = vmatpush2.bf16.msra.mxu0 0
      %1636 = vmatprep.subr.bf16.mxu0 0
      %1637 = vmatpush2.bf16.msra.mxu0 0
      %1638 = vmatprep.subr.bf16.mxu0 0
      %1639 = vmatpush2.bf16.msra.mxu0 0
      %1640 = vmatprep.subr.bf16.mxu0 0
      %1641 = vmatpush2.bf16.msra.mxu0 0
      %1642 = vmatprep.subr.bf16.mxu0 0
      %1643 = vmatpush2.bf16.msra.mxu0 0
      %1644 = vmatprep.mubr.bf16.mxu0 0
      %1645 = vmatmul.mubr.bf16.gmra.mxu0 %v1565
      %v1646 = vpop.f32.mrf.mxu0
      %v1647 = vadd.f32 0.0, %v1646
      %v1648 = vpop.f32.mrf.mxu0
      %v1649 = vpop.f32.mrf.mxu0
      %v1650 = vadd.f32 0.0, %v1649
      %v1651 = vpop.f32.mrf.mxu0
      %1652 = vmatprep.mubr.bf16.mxu0 0
      %1653 = vmatmul.mubr.bf16.gmra.mxu0 %v1568
      %v1654 = vpop.f32.mrf.mxu0
      %v1655 = vadd.f32 0.0, %v1654
      %v1656 = vpop.f32.mrf.mxu0
      %v1657 = vpop.f32.mrf.mxu0
      %v1658 = vadd.f32 0.0, %v1657
      %v1659 = vpop.f32.mrf.mxu0
      %1660 = vmatprep.mubr.bf16.mxu0 0
      %1661 = vmatmul.mubr.bf16.gmra.mxu0 %v1571
      %v1662 = vpop.f32.mrf.mxu0
      %v1663 = vadd.f32 0.0, %v1662
      %v1664 = vpop.f32.mrf.mxu0
      %v1665 = vpop.f32.mrf.mxu0
      %v1666 = vadd.f32 0.0, %v1665
      %v1667 = vpop.f32.mrf.mxu0
      %1668 = vmatprep.mubr.bf16.mxu0 0
      %1669 = vmatmul.mubr.bf16.gmra.mxu0 %v1574
      %v1670 = vpop.f32.mrf.mxu0
      %v1671 = vadd.f32 0.0, %v1670
      %v1672 = vpop.f32.mrf.mxu0
      %v1673 = vpop.f32.mrf.mxu0
      %v1674 = vadd.f32 0.0, %v1673
      %v1675 = vpop.f32.mrf.mxu0
      %1676 = vmatprep.mubr.bf16.mxu0 0
      %1677 = vmatmul.mubr.bf16.gmra.mxu0 %v1577
      %v1678 = vpop.f32.mrf.mxu0
      %v1679 = vadd.f32 0.0, %v1678
      %v1680 = vpop.f32.mrf.mxu0
      %v1681 = vpop.f32.mrf.mxu0
      %v1682 = vadd.f32 0.0, %v1681
      %v1683 = vpop.f32.mrf.mxu0
      %1684 = vmatprep.mubr.bf16.mxu0 0
      %1685 = vmatmul.mubr.bf16.gmra.mxu0 %v1580
      %v1686 = vpop.f32.mrf.mxu0
      %v1687 = vadd.f32 0.0, %v1686
      %v1688 = vpop.f32.mrf.mxu0
      %v1689 = vpop.f32.mrf.mxu0
      %v1690 = vadd.f32 0.0, %v1689
      %v1691 = vpop.f32.mrf.mxu0
      %1692 = vmatprep.mubr.bf16.mxu0 0
      %1693 = vmatmul.mubr.bf16.gmra.mxu0 %v1583
      %v1694 = vpop.f32.mrf.mxu0
      %v1695 = vadd.f32 0.0, %v1694
      %v1696 = vpop.f32.mrf.mxu0
      %v1697 = vpop.f32.mrf.mxu0
      %v1698 = vadd.f32 0.0, %v1697
      %v1699 = vpop.f32.mrf.mxu0
      %1700 = vmatprep.mubr.bf16.mxu0 0
      %1701 = vmatmul.mubr.bf16.gmra.mxu0 %v1586
      %v1702 = vpop.f32.mrf.mxu0
      %v1703 = vadd.f32 0.0, %v1702
      %v1704 = vpop.f32.mrf.mxu0
      %v1705 = vpop.f32.mrf.mxu0
      %v1706 = vadd.f32 0.0, %v1705
      %v1707 = vpop.f32.mrf.mxu0
      %1708 = vmatprep.mubr.bf16.mxu0 0
      %1709 = vmatmul.mubr.bf16.gmra.mxu0 %v1589
      %v1710 = vpop.f32.mrf.mxu0
      %v1711 = vadd.f32 0.0, %v1710
      %v1712 = vpop.f32.mrf.mxu0
      %v1713 = vpop.f32.mrf.mxu0
      %v1714 = vadd.f32 0.0, %v1713
      %v1715 = vpop.f32.mrf.mxu0
      %1716 = vmatprep.mubr.bf16.mxu0 0
      %1717 = vmatmul.mubr.bf16.gmra.mxu0 %v1592
      %v1718 = vpop.f32.mrf.mxu0
      %v1719 = vadd.f32 0.0, %v1718
      %v1720 = vpop.f32.mrf.mxu0
      %v1721 = vpop.f32.mrf.mxu0
      %v1722 = vadd.f32 0.0, %v1721
      %v1723 = vpop.f32.mrf.mxu0
      %1724 = vmatprep.mubr.bf16.mxu0 0
      %1725 = vmatmul.mubr.bf16.gmra.mxu0 %v1595
      %v1726 = vpop.f32.mrf.mxu0
      %v1727 = vadd.f32 0.0, %v1726
      %v1728 = vpop.f32.mrf.mxu0
      %v1729 = vpop.f32.mrf.mxu0
      %v1730 = vadd.f32 0.0, %v1729
      %v1731 = vpop.f32.mrf.mxu0
      %1732 = vmatprep.mubr.bf16.mxu0 0
      %1733 = vmatmul.mubr.bf16.gmra.mxu0 %v1598
      %v1734 = vpop.f32.mrf.mxu0
      %v1735 = vadd.f32 0.0, %v1734
      %v1736 = vpop.f32.mrf.mxu0
      %v1737 = vpop.f32.mrf.mxu0
      %v1738 = vadd.f32 0.0, %v1737
      %v1739 = vpop.f32.mrf.mxu0
      %1740 = vmatprep.mubr.bf16.mxu0 0
      %1741 = vmatmul.mubr.bf16.gmra.mxu0 %v1601
      %v1742 = vpop.f32.mrf.mxu0
      %v1743 = vadd.f32 0.0, %v1742
      %v1744 = vpop.f32.mrf.mxu0
      %v1745 = vpop.f32.mrf.mxu0
      %v1746 = vadd.f32 0.0, %v1745
      %v1747 = vpop.f32.mrf.mxu0
      %1748 = vmatprep.mubr.bf16.mxu0 0
      %1749 = vmatmul.mubr.bf16.gmra.mxu0 %v1604
      %v1750 = vpop.f32.mrf.mxu0
      %v1751 = vadd.f32 0.0, %v1750
      %v1752 = vpop.f32.mrf.mxu0
      %v1753 = vpop.f32.mrf.mxu0
      %v1754 = vadd.f32 0.0, %v1753
      %v1755 = vpop.f32.mrf.mxu0
      %1756 = vmatprep.mubr.bf16.mxu0 0
      %1757 = vmatmul.mubr.bf16.gmra.mxu0 %v1607
      %v1758 = vpop.f32.mrf.mxu0
      %v1759 = vadd.f32 0.0, %v1758
      %v1760 = vpop.f32.mrf.mxu0
      %v1761 = vpop.f32.mrf.mxu0
      %v1762 = vadd.f32 0.0, %v1761
      %v1763 = vpop.f32.mrf.mxu0
      %1764 = vmatprep.mubr.bf16.mxu0 0
      %1765 = vmatmul.mubr.bf16.gmra.mxu0 %v1610
      %v1766 = vpop.f32.mrf.mxu0
      %v1767 = vadd.f32 0.0, %v1766
      %v1768 = vpop.f32.mrf.mxu0
      %v1769 = vpop.f32.mrf.mxu0
      %v1770 = vadd.f32 0.0, %v1769
      %v1771 = vpop.f32.mrf.mxu0
      %1772 = vdwg.mxu0
      %v1773 = vadd.f32 %v1371, %v1647
      %v1774 = vadd.f32 %v1372, %v1650
      %v1775 = vadd.f32 %v1373, %v1655
      %v1776 = vadd.f32 %v1374, %v1658
      %v1777 = vadd.f32 %v1375, %v1663
      %v1778 = vadd.f32 %v1376, %v1666
      %v1779 = vadd.f32 %v1377, %v1671
      %v1780 = vadd.f32 %v1378, %v1674
      %v1781 = vadd.f32 %v1379, %v1679
      %v1782 = vadd.f32 %v1380, %v1682
      %v1783 = vadd.f32 %v1381, %v1687
      %v1784 = vadd.f32 %v1382, %v1690
      %v1785 = vadd.f32 %v1383, %v1695
      %v1786 = vadd.f32 %v1384, %v1698
      %v1787 = vadd.f32 %v1385, %v1703
      %v1788 = vadd.f32 %v1386, %v1706
      %v1789 = vadd.f32 %v1387, %v1711
      %v1790 = vadd.f32 %v1388, %v1714
      %v1791 = vadd.f32 %v1389, %v1719
      %v1792 = vadd.f32 %v1390, %v1722
      %v1793 = vadd.f32 %v1391, %v1727
      %v1794 = vadd.f32 %v1392, %v1730
      %v1795 = vadd.f32 %v1393, %v1735
      %v1796 = vadd.f32 %v1394, %v1738
      %v1797 = vadd.f32 %v1395, %v1743
      %v1798 = vadd.f32 %v1396, %v1746
      %v1799 = vadd.f32 %v1397, %v1751
      %v1800 = vadd.f32 %v1398, %v1754
      %v1801 = vadd.f32 %v1399, %v1759
      %v1802 = vadd.f32 %v1400, %v1762
      %v1803 = vadd.f32 %v1401, %v1767
      %v1804 = vadd.f32 %v1402, %v1770
      %v1805 = vpack.c.bf16 %v1404, %v1403
      %v1806 = vpack.c.bf16 %v1406, %v1405
      %v1807 = vpack.c.bf16 %v1408, %v1407
      %v1808 = vpack.c.bf16 %v1410, %v1409
      %v1809 = vpack.c.bf16 %v1412, %v1411
      %v1810 = vpack.c.bf16 %v1414, %v1413
      %v1811 = vpack.c.bf16 %v1416, %v1415
      %v1812 = vpack.c.bf16 %v1418, %v1417
      %v1813 = vpack.c.bf16 %v1420, %v1419
      %v1814 = vpack.c.bf16 %v1422, %v1421
      %v1815 = vpack.c.bf16 %v1424, %v1423
      %v1816 = vpack.c.bf16 %v1426, %v1425
      %v1817 = vpack.c.bf16 %v1428, %v1427
      %v1818 = vpack.c.bf16 %v1430, %v1429
      %v1819 = vpack.c.bf16 %v1432, %v1431
      %v1820 = vpack.c.bf16 %v1434, %v1433
      %s1821 = scalar_lea.vmem %s3, 64
      %v1822 = vld [vmem:[%s1821] sm:$0xf]
      %v1823 = vld [vmem:[%s1821 + $0x4] sm:$0xf]
      %v1824 = vld [vmem:[%s1821 + $0x8] sm:$0xf]
      %v1825 = vld [vmem:[%s1821 + $0xc] sm:$0xf]
      %v1830 = vunpack.c.l.b16 %v1822
      %v1831 = vunpack.c.l.b16 %v1823
      %v1832 = vunpack.c.l.b16 %v1824
      %v1833 = vunpack.c.l.b16 %v1825
      %v1834 = vpack.c.b16 %v1831, %v1830
      %v1835 = vpack.c.b16 %v1833, %v1832
      %v1839 = vsel %vm376, %v1805, 0
      %v1842 = vsel %vm376, %v1806, 0
      %v1845 = vsel %vm376, %v1807, 0
      %v1848 = vsel %vm376, %v1808, 0
      %v1851 = vsel %vm376, %v1809, 0
      %v1854 = vsel %vm376, %v1810, 0
      %v1857 = vsel %vm376, %v1811, 0
      %v1860 = vsel %vm376, %v1812, 0
      %v1863 = vsel %vm376, %v1813, 0
      %v1866 = vsel %vm376, %v1814, 0
      %v1869 = vsel %vm376, %v1815, 0
      %v1872 = vsel %vm376, %v1816, 0
      %v1875 = vsel %vm376, %v1817, 0
      %v1878 = vsel %vm376, %v1818, 0
      %v1881 = vsel %vm376, %v1819, 0
      %v1884 = vsel %vm376, %v1820, 0
      %1886 = vmatprep.subr.bf16.mxu0 0
      %1887 = vmatpush1.bf16.msra.mxu0 0
      %1888 = vmatprep.subr.bf16.mxu0 0
      %1889 = vmatpush1.bf16.msra.mxu0 0
      %1890 = vmatprep.subr.bf16.mxu0 0
      %1891 = vmatpush1.bf16.msra.mxu0 0
      %1892 = vmatprep.subr.bf16.mxu0 0
      %1893 = vmatpush1.bf16.msra.mxu0 0
      %1894 = vmatprep.subr.bf16.mxu0 0
      %1895 = vmatpush1.bf16.msra.mxu0 0
      %1896 = vmatprep.subr.bf16.mxu0 0
      %1897 = vmatpush1.bf16.msra.mxu0 0
      %1898 = vmatprep.subr.bf16.mxu0 0
      %1899 = vmatpush1.bf16.msra.mxu0 %v1835
      %1900 = vmatprep.subr.bf16.mxu0 0
      %1901 = vmatpush1.bf16.msra.mxu0 %v1834
      %1902 = vmatprep.subr.bf16.mxu0 0
      %1903 = vmatpush2.bf16.msra.mxu0 0
      %1904 = vmatprep.subr.bf16.mxu0 0
      %1905 = vmatpush2.bf16.msra.mxu0 0
      %1906 = vmatprep.subr.bf16.mxu0 0
      %1907 = vmatpush2.bf16.msra.mxu0 0
      %1908 = vmatprep.subr.bf16.mxu0 0
      %1909 = vmatpush2.bf16.msra.mxu0 0
      %1910 = vmatprep.subr.bf16.mxu0 0
      %1911 = vmatpush2.bf16.msra.mxu0 0
      %1912 = vmatprep.subr.bf16.mxu0 0
      %1913 = vmatpush2.bf16.msra.mxu0 0
      %1914 = vmatprep.subr.bf16.mxu0 0
      %1915 = vmatpush2.bf16.msra.mxu0 0
      %1916 = vmatprep.subr.bf16.mxu0 0
      %1917 = vmatpush2.bf16.msra.mxu0 0
      %1918 = vmatprep.mubr.bf16.mxu0 0
      %1919 = vmatmul.mubr.bf16.gmra.mxu0 %v1839
      %v1920 = vpop.f32.mrf.mxu0
      %v1921 = vadd.f32 0.0, %v1920
      %v1922 = vpop.f32.mrf.mxu0
      %v1923 = vpop.f32.mrf.mxu0
      %v1924 = vadd.f32 0.0, %v1923
      %v1925 = vpop.f32.mrf.mxu0
      %1926 = vmatprep.mubr.bf16.mxu0 0
      %1927 = vmatmul.mubr.bf16.gmra.mxu0 %v1842
      %v1928 = vpop.f32.mrf.mxu0
      %v1929 = vadd.f32 0.0, %v1928
      %v1930 = vpop.f32.mrf.mxu0
      %v1931 = vpop.f32.mrf.mxu0
      %v1932 = vadd.f32 0.0, %v1931
      %v1933 = vpop.f32.mrf.mxu0
      %1934 = vmatprep.mubr.bf16.mxu0 0
      %1935 = vmatmul.mubr.bf16.gmra.mxu0 %v1845
      %v1936 = vpop.f32.mrf.mxu0
      %v1937 = vadd.f32 0.0, %v1936
      %v1938 = vpop.f32.mrf.mxu0
      %v1939 = vpop.f32.mrf.mxu0
      %v1940 = vadd.f32 0.0, %v1939
      %v1941 = vpop.f32.mrf.mxu0
      %1942 = vmatprep.mubr.bf16.mxu0 0
      %1943 = vmatmul.mubr.bf16.gmra.mxu0 %v1848
      %v1944 = vpop.f32.mrf.mxu0
      %v1945 = vadd.f32 0.0, %v1944
      %v1946 = vpop.f32.mrf.mxu0
      %v1947 = vpop.f32.mrf.mxu0
      %v1948 = vadd.f32 0.0, %v1947
      %v1949 = vpop.f32.mrf.mxu0
      %1950 = vmatprep.mubr.bf16.mxu0 0
      %1951 = vmatmul.mubr.bf16.gmra.mxu0 %v1851
      %v1952 = vpop.f32.mrf.mxu0
      %v1953 = vadd.f32 0.0, %v1952
      %v1954 = vpop.f32.mrf.mxu0
      %v1955 = vpop.f32.mrf.mxu0
      %v1956 = vadd.f32 0.0, %v1955
      %v1957 = vpop.f32.mrf.mxu0
      %1958 = vmatprep.mubr.bf16.mxu0 0
      %1959 = vmatmul.mubr.bf16.gmra.mxu0 %v1854
      %v1960 = vpop.f32.mrf.mxu0
      %v1961 = vadd.f32 0.0, %v1960
      %v1962 = vpop.f32.mrf.mxu0
      %v1963 = vpop.f32.mrf.mxu0
      %v1964 = vadd.f32 0.0, %v1963
      %v1965 = vpop.f32.mrf.mxu0
      %1966 = vmatprep.mubr.bf16.mxu0 0
      %1967 = vmatmul.mubr.bf16.gmra.mxu0 %v1857
      %v1968 = vpop.f32.mrf.mxu0
      %v1969 = vadd.f32 0.0, %v1968
      %v1970 = vpop.f32.mrf.mxu0
      %v1971 = vpop.f32.mrf.mxu0
      %v1972 = vadd.f32 0.0, %v1971
      %v1973 = vpop.f32.mrf.mxu0
      %1974 = vmatprep.mubr.bf16.mxu0 0
      %1975 = vmatmul.mubr.bf16.gmra.mxu0 %v1860
      %v1976 = vpop.f32.mrf.mxu0
      %v1977 = vadd.f32 0.0, %v1976
      %v1978 = vpop.f32.mrf.mxu0
      %v1979 = vpop.f32.mrf.mxu0
      %v1980 = vadd.f32 0.0, %v1979
      %v1981 = vpop.f32.mrf.mxu0
      %1982 = vmatprep.mubr.bf16.mxu0 0
      %1983 = vmatmul.mubr.bf16.gmra.mxu0 %v1863
      %v1984 = vpop.f32.mrf.mxu0
      %v1985 = vadd.f32 0.0, %v1984
      %v1986 = vpop.f32.mrf.mxu0
      %v1987 = vpop.f32.mrf.mxu0
      %v1988 = vadd.f32 0.0, %v1987
      %v1989 = vpop.f32.mrf.mxu0
      %1990 = vmatprep.mubr.bf16.mxu0 0
      %1991 = vmatmul.mubr.bf16.gmra.mxu0 %v1866
      %v1992 = vpop.f32.mrf.mxu0
      %v1993 = vadd.f32 0.0, %v1992
      %v1994 = vpop.f32.mrf.mxu0
      %v1995 = vpop.f32.mrf.mxu0
      %v1996 = vadd.f32 0.0, %v1995
      %v1997 = vpop.f32.mrf.mxu0
      %1998 = vmatprep.mubr.bf16.mxu0 0
      %1999 = vmatmul.mubr.bf16.gmra.mxu0 %v1869
      %v2000 = vpop.f32.mrf.mxu0
      %v2001 = vadd.f32 0.0, %v2000
      %v2002 = vpop.f32.mrf.mxu0
      %v2003 = vpop.f32.mrf.mxu0
      %v2004 = vadd.f32 0.0, %v2003
      %v2005 = vpop.f32.mrf.mxu0
      %2006 = vmatprep.mubr.bf16.mxu0 0
      %2007 = vmatmul.mubr.bf16.gmra.mxu0 %v1872
      %v2008 = vpop.f32.mrf.mxu0
      %v2009 = vadd.f32 0.0, %v2008
      %v2010 = vpop.f32.mrf.mxu0
      %v2011 = vpop.f32.mrf.mxu0
      %v2012 = vadd.f32 0.0, %v2011
      %v2013 = vpop.f32.mrf.mxu0
      %2014 = vmatprep.mubr.bf16.mxu0 0
      %2015 = vmatmul.mubr.bf16.gmra.mxu0 %v1875
      %v2016 = vpop.f32.mrf.mxu0
      %v2017 = vadd.f32 0.0, %v2016
      %v2018 = vpop.f32.mrf.mxu0
      %v2019 = vpop.f32.mrf.mxu0
      %v2020 = vadd.f32 0.0, %v2019
      %v2021 = vpop.f32.mrf.mxu0
      %2022 = vmatprep.mubr.bf16.mxu0 0
      %2023 = vmatmul.mubr.bf16.gmra.mxu0 %v1878
      %v2024 = vpop.f32.mrf.mxu0
      %v2025 = vadd.f32 0.0, %v2024
      %v2026 = vpop.f32.mrf.mxu0
      %v2027 = vpop.f32.mrf.mxu0
      %v2028 = vadd.f32 0.0, %v2027
      %v2029 = vpop.f32.mrf.mxu0
      %2030 = vmatprep.mubr.bf16.mxu0 0
      %2031 = vmatmul.mubr.bf16.gmra.mxu0 %v1881
      %v2032 = vpop.f32.mrf.mxu0
      %v2033 = vadd.f32 0.0, %v2032
      %v2034 = vpop.f32.mrf.mxu0
      %v2035 = vpop.f32.mrf.mxu0
      %v2036 = vadd.f32 0.0, %v2035
      %v2037 = vpop.f32.mrf.mxu0
      %2038 = vmatprep.mubr.bf16.mxu0 0
      %2039 = vmatmul.mubr.bf16.gmra.mxu0 %v1884
      %v2040 = vpop.f32.mrf.mxu0
      %v2041 = vadd.f32 0.0, %v2040
      %v2042 = vpop.f32.mrf.mxu0
      %v2043 = vpop.f32.mrf.mxu0
      %v2044 = vadd.f32 0.0, %v2043
      %v2045 = vpop.f32.mrf.mxu0
      %2046 = vdwg.mxu0
      %v2047 = vadd.f32 %v1773, %v1921
      %v2048 = vadd.f32 %v1774, %v1924
      %v2049 = vadd.f32 %v1775, %v1929
      %v2050 = vadd.f32 %v1776, %v1932
      %v2051 = vadd.f32 %v1777, %v1937
      %v2052 = vadd.f32 %v1778, %v1940
      %v2053 = vadd.f32 %v1779, %v1945
      %v2054 = vadd.f32 %v1780, %v1948
      %v2055 = vadd.f32 %v1781, %v1953
      %v2056 = vadd.f32 %v1782, %v1956
      %v2057 = vadd.f32 %v1783, %v1961
      %v2058 = vadd.f32 %v1784, %v1964
      %v2059 = vadd.f32 %v1785, %v1969
      %v2060 = vadd.f32 %v1786, %v1972
      %v2061 = vadd.f32 %v1787, %v1977
      %v2062 = vadd.f32 %v1788, %v1980
      %v2063 = vadd.f32 %v1789, %v1985
      %v2064 = vadd.f32 %v1790, %v1988
      %v2065 = vadd.f32 %v1791, %v1993
      %v2066 = vadd.f32 %v1792, %v1996
      %v2067 = vadd.f32 %v1793, %v2001
      %v2068 = vadd.f32 %v1794, %v2004
      %v2069 = vadd.f32 %v1795, %v2009
      %v2070 = vadd.f32 %v1796, %v2012
      %v2071 = vadd.f32 %v1797, %v2017
      %v2072 = vadd.f32 %v1798, %v2020
      %v2073 = vadd.f32 %v1799, %v2025
      %v2074 = vadd.f32 %v1800, %v2028
      %v2075 = vadd.f32 %v1801, %v2033
      %v2076 = vadd.f32 %v1802, %v2036
      %v2077 = vadd.f32 %v1803, %v2041
      %v2078 = vadd.f32 %v1804, %v2044
      %v2079 = vrot.slane %v1403, 1
      %v2080 = vrot.slane %v1404, 1
      %v2081 = vrot.slane %v1405, 1
      %v2082 = vrot.slane %v1406, 1
      %v2083 = vrot.slane %v1407, 1
      %v2084 = vrot.slane %v1408, 1
      %v2085 = vrot.slane %v1409, 1
      %v2086 = vrot.slane %v1410, 1
      %v2087 = vrot.slane %v1411, 1
      %v2088 = vrot.slane %v1412, 1
      %v2089 = vrot.slane %v1413, 1
      %v2090 = vrot.slane %v1414, 1
      %v2091 = vrot.slane %v1415, 1
      %v2092 = vrot.slane %v1416, 1
      %v2093 = vrot.slane %v1417, 1
      %v2094 = vrot.slane %v1418, 1
      %v2095 = vrot.slane %v1419, 1
      %v2096 = vrot.slane %v1420, 1
      %v2097 = vrot.slane %v1421, 1
      %v2098 = vrot.slane %v1422, 1
      %v2099 = vrot.slane %v1423, 1
      %v2100 = vrot.slane %v1424, 1
      %v2101 = vrot.slane %v1425, 1
      %v2102 = vrot.slane %v1426, 1
      %v2103 = vrot.slane %v1427, 1
      %v2104 = vrot.slane %v1428, 1
      %v2105 = vrot.slane %v1429, 1
      %v2106 = vrot.slane %v1430, 1
      %v2107 = vrot.slane %v1431, 1
      %v2108 = vrot.slane %v1432, 1
      %v2109 = vrot.slane %v1433, 1
      %v2110 = vrot.slane %v1434, 1
      %v2111 = vsel %vm1064, %v2109, %v2110
      %v2112 = vsel %vm1064, %v2108, %v2109
      %v2113 = vsel %vm1064, %v2107, %v2108
      %v2114 = vsel %vm1064, %v2106, %v2107
      %v2115 = vsel %vm1064, %v2105, %v2106
      %v2116 = vsel %vm1064, %v2104, %v2105
      %v2117 = vsel %vm1064, %v2103, %v2104
      %v2118 = vsel %vm1064, %v2102, %v2103
      %v2119 = vsel %vm1064, %v2101, %v2102
      %v2120 = vsel %vm1064, %v2100, %v2101
      %v2121 = vsel %vm1064, %v2099, %v2100
      %v2122 = vsel %vm1064, %v2098, %v2099
      %v2123 = vsel %vm1064, %v2097, %v2098
      %v2124 = vsel %vm1064, %v2096, %v2097
      %v2125 = vsel %vm1064, %v2095, %v2096
      %v2126 = vsel %vm1064, %v2094, %v2095
      %v2127 = vsel %vm1064, %v2093, %v2094
      %v2128 = vsel %vm1064, %v2092, %v2093
      %v2129 = vsel %vm1064, %v2091, %v2092
      %v2130 = vsel %vm1064, %v2090, %v2091
      %v2131 = vsel %vm1064, %v2089, %v2090
      %v2132 = vsel %vm1064, %v2088, %v2089
      %v2133 = vsel %vm1064, %v2087, %v2088
      %v2134 = vsel %vm1064, %v2086, %v2087
      %v2135 = vsel %vm1064, %v2085, %v2086
      %v2136 = vsel %vm1064, %v2084, %v2085
      %v2137 = vsel %vm1064, %v2083, %v2084
      %v2138 = vsel %vm1064, %v2082, %v2083
      %v2139 = vsel %vm1064, %v2081, %v2082
      %v2140 = vsel %vm1064, %v2080, %v2081
      %v2141 = vsel %vm1064, %v2079, %v2080
      %v2142 = vsel %vm1064, %v2110, %v2079
      %v2143 = vsel %vm418, %v2141, 0.0
      %v2144 = vsel %vm419, %v2140, 0.0
      %v2145 = vsel %vm418, %v2139, 0.0
      %v2146 = vsel %vm419, %v2138, 0.0
      %v2147 = vsel %vm418, %v2137, 0.0
      %v2148 = vsel %vm419, %v2136, 0.0
      %v2149 = vsel %vm418, %v2135, 0.0
      %v2150 = vsel %vm419, %v2134, 0.0
      %v2151 = vsel %vm418, %v2133, 0.0
      %v2152 = vsel %vm419, %v2132, 0.0
      %v2153 = vsel %vm418, %v2131, 0.0
      %v2154 = vsel %vm419, %v2130, 0.0
      %v2155 = vsel %vm418, %v2129, 0.0
      %v2156 = vsel %vm419, %v2128, 0.0
      %v2157 = vsel %vm418, %v2127, 0.0
      %v2158 = vsel %vm419, %v2126, 0.0
      %v2159 = vsel %vm418, %v2125, 0.0
      %v2160 = vsel %vm419, %v2124, 0.0
      %v2161 = vsel %vm418, %v2123, 0.0
      %v2162 = vsel %vm419, %v2122, 0.0
      %v2163 = vsel %vm418, %v2121, 0.0
      %v2164 = vsel %vm419, %v2120, 0.0
      %v2165 = vsel %vm418, %v2119, 0.0
      %v2166 = vsel %vm419, %v2118, 0.0
      %v2167 = vsel %vm418, %v2117, 0.0
      %v2168 = vsel %vm419, %v2116, 0.0
      %v2169 = vsel %vm418, %v2115, 0.0
      %v2170 = vsel %vm419, %v2114, 0.0
      %v2171 = vsel %vm418, %v2113, 0.0
      %v2172 = vsel %vm419, %v2112, 0.0
      %v2173 = vsel %vm418, %v2111, 0.0
      %v2174 = vsel %vm419, %v2142, 0.0
      %v2175 = vpack.c.bf16 %v2144, %v2143
      %v2176 = vpack.c.bf16 %v2146, %v2145
      %v2177 = vpack.c.bf16 %v2148, %v2147
      %v2178 = vpack.c.bf16 %v2150, %v2149
      %v2179 = vpack.c.bf16 %v2152, %v2151
      %v2180 = vpack.c.bf16 %v2154, %v2153
      %v2181 = vpack.c.bf16 %v2156, %v2155
      %v2182 = vpack.c.bf16 %v2158, %v2157
      %v2183 = vpack.c.bf16 %v2160, %v2159
      %v2184 = vpack.c.bf16 %v2162, %v2161
      %v2185 = vpack.c.bf16 %v2164, %v2163
      %v2186 = vpack.c.bf16 %v2166, %v2165
      %v2187 = vpack.c.bf16 %v2168, %v2167
      %v2188 = vpack.c.bf16 %v2170, %v2169
      %v2189 = vpack.c.bf16 %v2172, %v2171
      %v2190 = vpack.c.bf16 %v2174, %v2173
      %s2191 = scalar_lea.vmem %s3, 80
      %v2192 = vld [vmem:[%s2191] sm:$0xf]
      %v2193 = vld [vmem:[%s2191 + $0x4] sm:$0xf]
      %v2194 = vld [vmem:[%s2191 + $0x8] sm:$0xf]
      %v2195 = vld [vmem:[%s2191 + $0xc] sm:$0xf]
      %v2200 = vunpack.c.l.b16 %v2192
      %v2201 = vunpack.c.l.b16 %v2193
      %v2202 = vunpack.c.l.b16 %v2194
      %v2203 = vunpack.c.l.b16 %v2195
      %v2204 = vpack.c.b16 %v2201, %v2200
      %v2205 = vpack.c.b16 %v2203, %v2202
      %v2209 = vsel %vm376, %v2175, 0
      %v2212 = vsel %vm376, %v2176, 0
      %v2215 = vsel %vm376, %v2177, 0
      %v2218 = vsel %vm376, %v2178, 0
      %v2221 = vsel %vm376, %v2179, 0
      %v2224 = vsel %vm376, %v2180, 0
      %v2227 = vsel %vm376, %v2181, 0
      %v2230 = vsel %vm376, %v2182, 0
      %v2233 = vsel %vm376, %v2183, 0
      %v2236 = vsel %vm376, %v2184, 0
      %v2239 = vsel %vm376, %v2185, 0
      %v2242 = vsel %vm376, %v2186, 0
      %v2245 = vsel %vm376, %v2187, 0
      %v2248 = vsel %vm376, %v2188, 0
      %v2251 = vsel %vm376, %v2189, 0
      %v2254 = vsel %vm376, %v2190, 0
      %2256 = vmatprep.subr.bf16.mxu0 0
      %2257 = vmatpush1.bf16.msra.mxu0 0
      %2258 = vmatprep.subr.bf16.mxu0 0
      %2259 = vmatpush1.bf16.msra.mxu0 0
      %2260 = vmatprep.subr.bf16.mxu0 0
      %2261 = vmatpush1.bf16.msra.mxu0 0
      %2262 = vmatprep.subr.bf16.mxu0 0
      %2263 = vmatpush1.bf16.msra.mxu0 0
      %2264 = vmatprep.subr.bf16.mxu0 0
      %2265 = vmatpush1.bf16.msra.mxu0 0
      %2266 = vmatprep.subr.bf16.mxu0 0
      %2267 = vmatpush1.bf16.msra.mxu0 0
      %2268 = vmatprep.subr.bf16.mxu0 0
      %2269 = vmatpush1.bf16.msra.mxu0 %v2205
      %2270 = vmatprep.subr.bf16.mxu0 0
      %2271 = vmatpush1.bf16.msra.mxu0 %v2204
      %2272 = vmatprep.subr.bf16.mxu0 0
      %2273 = vmatpush2.bf16.msra.mxu0 0
      %2274 = vmatprep.subr.bf16.mxu0 0
      %2275 = vmatpush2.bf16.msra.mxu0 0
      %2276 = vmatprep.subr.bf16.mxu0 0
      %2277 = vmatpush2.bf16.msra.mxu0 0
      %2278 = vmatprep.subr.bf16.mxu0 0
      %2279 = vmatpush2.bf16.msra.mxu0 0
      %2280 = vmatprep.subr.bf16.mxu0 0
      %2281 = vmatpush2.bf16.msra.mxu0 0
      %2282 = vmatprep.subr.bf16.mxu0 0
      %2283 = vmatpush2.bf16.msra.mxu0 0
      %2284 = vmatprep.subr.bf16.mxu0 0
      %2285 = vmatpush2.bf16.msra.mxu0 0
      %2286 = vmatprep.subr.bf16.mxu0 0
      %2287 = vmatpush2.bf16.msra.mxu0 0
      %2288 = vmatprep.mubr.bf16.mxu0 0
      %2289 = vmatmul.mubr.bf16.gmra.mxu0 %v2209
      %v2290 = vpop.f32.mrf.mxu0
      %v2291 = vadd.f32 0.0, %v2290
      %v2292 = vpop.f32.mrf.mxu0
      %v2293 = vpop.f32.mrf.mxu0
      %v2294 = vadd.f32 0.0, %v2293
      %v2295 = vpop.f32.mrf.mxu0
      %2296 = vmatprep.mubr.bf16.mxu0 0
      %2297 = vmatmul.mubr.bf16.gmra.mxu0 %v2212
      %v2298 = vpop.f32.mrf.mxu0
      %v2299 = vadd.f32 0.0, %v2298
      %v2300 = vpop.f32.mrf.mxu0
      %v2301 = vpop.f32.mrf.mxu0
      %v2302 = vadd.f32 0.0, %v2301
      %v2303 = vpop.f32.mrf.mxu0
      %2304 = vmatprep.mubr.bf16.mxu0 0
      %2305 = vmatmul.mubr.bf16.gmra.mxu0 %v2215
      %v2306 = vpop.f32.mrf.mxu0
      %v2307 = vadd.f32 0.0, %v2306
      %v2308 = vpop.f32.mrf.mxu0
      %v2309 = vpop.f32.mrf.mxu0
      %v2310 = vadd.f32 0.0, %v2309
      %v2311 = vpop.f32.mrf.mxu0
      %2312 = vmatprep.mubr.bf16.mxu0 0
      %2313 = vmatmul.mubr.bf16.gmra.mxu0 %v2218
      %v2314 = vpop.f32.mrf.mxu0
      %v2315 = vadd.f32 0.0, %v2314
      %v2316 = vpop.f32.mrf.mxu0
      %v2317 = vpop.f32.mrf.mxu0
      %v2318 = vadd.f32 0.0, %v2317
      %v2319 = vpop.f32.mrf.mxu0
      %2320 = vmatprep.mubr.bf16.mxu0 0
      %2321 = vmatmul.mubr.bf16.gmra.mxu0 %v2221
      %v2322 = vpop.f32.mrf.mxu0
      %v2323 = vadd.f32 0.0, %v2322
      %v2324 = vpop.f32.mrf.mxu0
      %v2325 = vpop.f32.mrf.mxu0
      %v2326 = vadd.f32 0.0, %v2325
      %v2327 = vpop.f32.mrf.mxu0
      %2328 = vmatprep.mubr.bf16.mxu0 0
      %2329 = vmatmul.mubr.bf16.gmra.mxu0 %v2224
      %v2330 = vpop.f32.mrf.mxu0
      %v2331 = vadd.f32 0.0, %v2330
      %v2332 = vpop.f32.mrf.mxu0
      %v2333 = vpop.f32.mrf.mxu0
      %v2334 = vadd.f32 0.0, %v2333
      %v2335 = vpop.f32.mrf.mxu0
      %2336 = vmatprep.mubr.bf16.mxu0 0
      %2337 = vmatmul.mubr.bf16.gmra.mxu0 %v2227
      %v2338 = vpop.f32.mrf.mxu0
      %v2339 = vadd.f32 0.0, %v2338
      %v2340 = vpop.f32.mrf.mxu0
      %v2341 = vpop.f32.mrf.mxu0
      %v2342 = vadd.f32 0.0, %v2341
      %v2343 = vpop.f32.mrf.mxu0
      %2344 = vmatprep.mubr.bf16.mxu0 0
      %2345 = vmatmul.mubr.bf16.gmra.mxu0 %v2230
      %v2346 = vpop.f32.mrf.mxu0
      %v2347 = vadd.f32 0.0, %v2346
      %v2348 = vpop.f32.mrf.mxu0
      %v2349 = vpop.f32.mrf.mxu0
      %v2350 = vadd.f32 0.0, %v2349
      %v2351 = vpop.f32.mrf.mxu0
      %2352 = vmatprep.mubr.bf16.mxu0 0
      %2353 = vmatmul.mubr.bf16.gmra.mxu0 %v2233
      %v2354 = vpop.f32.mrf.mxu0
      %v2355 = vadd.f32 0.0, %v2354
      %v2356 = vpop.f32.mrf.mxu0
      %v2357 = vpop.f32.mrf.mxu0
      %v2358 = vadd.f32 0.0, %v2357
      %v2359 = vpop.f32.mrf.mxu0
      %2360 = vmatprep.mubr.bf16.mxu0 0
      %2361 = vmatmul.mubr.bf16.gmra.mxu0 %v2236
      %v2362 = vpop.f32.mrf.mxu0
      %v2363 = vadd.f32 0.0, %v2362
      %v2364 = vpop.f32.mrf.mxu0
      %v2365 = vpop.f32.mrf.mxu0
      %v2366 = vadd.f32 0.0, %v2365
      %v2367 = vpop.f32.mrf.mxu0
      %2368 = vmatprep.mubr.bf16.mxu0 0
      %2369 = vmatmul.mubr.bf16.gmra.mxu0 %v2239
      %v2370 = vpop.f32.mrf.mxu0
      %v2371 = vadd.f32 0.0, %v2370
      %v2372 = vpop.f32.mrf.mxu0
      %v2373 = vpop.f32.mrf.mxu0
      %v2374 = vadd.f32 0.0, %v2373
      %v2375 = vpop.f32.mrf.mxu0
      %2376 = vmatprep.mubr.bf16.mxu0 0
      %2377 = vmatmul.mubr.bf16.gmra.mxu0 %v2242
      %v2378 = vpop.f32.mrf.mxu0
      %v2379 = vadd.f32 0.0, %v2378
      %v2380 = vpop.f32.mrf.mxu0
      %v2381 = vpop.f32.mrf.mxu0
      %v2382 = vadd.f32 0.0, %v2381
      %v2383 = vpop.f32.mrf.mxu0
      %2384 = vmatprep.mubr.bf16.mxu0 0
      %2385 = vmatmul.mubr.bf16.gmra.mxu0 %v2245
      %v2386 = vpop.f32.mrf.mxu0
      %v2387 = vadd.f32 0.0, %v2386
      %v2388 = vpop.f32.mrf.mxu0
      %v2389 = vpop.f32.mrf.mxu0
      %v2390 = vadd.f32 0.0, %v2389
      %v2391 = vpop.f32.mrf.mxu0
      %2392 = vmatprep.mubr.bf16.mxu0 0
      %2393 = vmatmul.mubr.bf16.gmra.mxu0 %v2248
      %v2394 = vpop.f32.mrf.mxu0
      %v2395 = vadd.f32 0.0, %v2394
      %v2396 = vpop.f32.mrf.mxu0
      %v2397 = vpop.f32.mrf.mxu0
      %v2398 = vadd.f32 0.0, %v2397
      %v2399 = vpop.f32.mrf.mxu0
      %2400 = vmatprep.mubr.bf16.mxu0 0
      %2401 = vmatmul.mubr.bf16.gmra.mxu0 %v2251
      %v2402 = vpop.f32.mrf.mxu0
      %v2403 = vadd.f32 0.0, %v2402
      %v2404 = vpop.f32.mrf.mxu0
      %v2405 = vpop.f32.mrf.mxu0
      %v2406 = vadd.f32 0.0, %v2405
      %v2407 = vpop.f32.mrf.mxu0
      %2408 = vmatprep.mubr.bf16.mxu0 0
      %2409 = vmatmul.mubr.bf16.gmra.mxu0 %v2254
      %v2410 = vpop.f32.mrf.mxu0
      %v2411 = vadd.f32 0.0, %v2410
      %v2412 = vpop.f32.mrf.mxu0
      %v2413 = vpop.f32.mrf.mxu0
      %v2414 = vadd.f32 0.0, %v2413
      %v2415 = vpop.f32.mrf.mxu0
      %2416 = vdwg.mxu0
      %v2417 = vadd.f32 %v2047, %v2291
      %v2418 = vadd.f32 %v2048, %v2294
      %v2419 = vadd.f32 %v2049, %v2299
      %v2420 = vadd.f32 %v2050, %v2302
      %v2421 = vadd.f32 %v2051, %v2307
      %v2422 = vadd.f32 %v2052, %v2310
      %v2423 = vadd.f32 %v2053, %v2315
      %v2424 = vadd.f32 %v2054, %v2318
      %v2425 = vadd.f32 %v2055, %v2323
      %v2426 = vadd.f32 %v2056, %v2326
      %v2427 = vadd.f32 %v2057, %v2331
      %v2428 = vadd.f32 %v2058, %v2334
      %v2429 = vadd.f32 %v2059, %v2339
      %v2430 = vadd.f32 %v2060, %v2342
      %v2431 = vadd.f32 %v2061, %v2347
      %v2432 = vadd.f32 %v2062, %v2350
      %v2433 = vadd.f32 %v2063, %v2355
      %v2434 = vadd.f32 %v2064, %v2358
      %v2435 = vadd.f32 %v2065, %v2363
      %v2436 = vadd.f32 %v2066, %v2366
      %v2437 = vadd.f32 %v2067, %v2371
      %v2438 = vadd.f32 %v2068, %v2374
      %v2439 = vadd.f32 %v2069, %v2379
      %v2440 = vadd.f32 %v2070, %v2382
      %v2441 = vadd.f32 %v2071, %v2387
      %v2442 = vadd.f32 %v2072, %v2390
      %v2443 = vadd.f32 %v2073, %v2395
      %v2444 = vadd.f32 %v2074, %v2398
      %v2445 = vadd.f32 %v2075, %v2403
      %v2446 = vadd.f32 %v2076, %v2406
      %v2447 = vadd.f32 %v2077, %v2411
      %v2448 = vadd.f32 %v2078, %v2414
      %v2449 = vld [vmem:[#allocation2 + $0x20] sm:$0xff]
      %v2450 = vld [vmem:[#allocation2 + $0x28] sm:$0xff]
      %v2451 = vld [vmem:[#allocation2 + $0x30] sm:$0xff]
      %v2452 = vld [vmem:[#allocation2 + $0x38] sm:$0xff]
      %v2453 = vld [vmem:[#allocation2 + $0x40] sm:$0xff]
      %v2454 = vld [vmem:[#allocation2 + $0x48] sm:$0xff]
      %v2455 = vld [vmem:[#allocation2 + $0x50] sm:$0xff]
      %v2456 = vld [vmem:[#allocation2 + $0x58] sm:$0xff]
      %v2457 = vld [vmem:[#allocation2 + $0x60] sm:$0xff]
      %v2458 = vld [vmem:[#allocation2 + $0x68] sm:$0xff]
      %v2459 = vld [vmem:[#allocation2 + $0x70] sm:$0xff]
      %v2460 = vld [vmem:[#allocation2 + $0x78] sm:$0xff]
      %v2461 = vld [vmem:[#allocation2 + $0x80] sm:$0xff]
      %v2462 = vld [vmem:[#allocation2 + $0x88] sm:$0xff]
      %v2463 = vld [vmem:[#allocation2 + $0x90] sm:$0xff]
      %v2464 = vld [vmem:[#allocation2 + $0x98] sm:$0xff]
      %v2465 = vld [vmem:[#allocation2 + $0xa0] sm:$0xff]
      %v2466 = vld [vmem:[#allocation2 + $0xa8] sm:$0xff]
      %v2467 = vld [vmem:[#allocation2 + $0xb0] sm:$0xff]
      %v2468 = vld [vmem:[#allocation2 + $0xb8] sm:$0xff]
      %v2469 = vld [vmem:[#allocation2 + $0xc0] sm:$0xff]
      %v2470 = vld [vmem:[#allocation2 + $0xc8] sm:$0xff]
      %v2471 = vld [vmem:[#allocation2 + $0xd0] sm:$0xff]
      %v2472 = vld [vmem:[#allocation2 + $0xd8] sm:$0xff]
      %v2473 = vld [vmem:[#allocation2 + $0xe0] sm:$0xff]
      %v2474 = vld [vmem:[#allocation2 + $0xe8] sm:$0xff]
      %v2475 = vld [vmem:[#allocation2 + $0xf0] sm:$0xff]
      %v2476 = vld [vmem:[#allocation2 + $0xf8] sm:$0xff]
      %v2477 = vld [vmem:[#allocation2 + $0x100] sm:$0xff]
      %v2478 = vld [vmem:[#allocation2 + $0x108] sm:$0xff]
      %v2479 = vld [vmem:[#allocation2 + $0x110] sm:$0xff]
      %v2480 = vld [vmem:[#allocation2 + $0x118] sm:$0xff]
      %v2481 = vrot.slane %v2449, 7
      %v2482 = vrot.slane %v2450, 7
      %v2483 = vrot.slane %v2451, 7
      %v2484 = vrot.slane %v2452, 7
      %v2485 = vrot.slane %v2453, 7
      %v2486 = vrot.slane %v2454, 7
      %v2487 = vrot.slane %v2455, 7
      %v2488 = vrot.slane %v2456, 7
      %v2489 = vrot.slane %v2457, 7
      %v2490 = vrot.slane %v2458, 7
      %v2491 = vrot.slane %v2459, 7
      %v2492 = vrot.slane %v2460, 7
      %v2493 = vrot.slane %v2461, 7
      %v2494 = vrot.slane %v2462, 7
      %v2495 = vrot.slane %v2463, 7
      %v2496 = vrot.slane %v2464, 7
      %v2497 = vrot.slane %v2465, 7
      %v2498 = vrot.slane %v2466, 7
      %v2499 = vrot.slane %v2467, 7
      %v2500 = vrot.slane %v2468, 7
      %v2501 = vrot.slane %v2469, 7
      %v2502 = vrot.slane %v2470, 7
      %v2503 = vrot.slane %v2471, 7
      %v2504 = vrot.slane %v2472, 7
      %v2505 = vrot.slane %v2473, 7
      %v2506 = vrot.slane %v2474, 7
      %v2507 = vrot.slane %v2475, 7
      %v2508 = vrot.slane %v2476, 7
      %v2509 = vrot.slane %v2477, 7
      %v2510 = vrot.slane %v2478, 7
      %v2511 = vrot.slane %v2479, 7
      %v2512 = vrot.slane %v2480, 7
      %v2513 = vsel %vm484, %v2511, %v2512
      %v2514 = vsel %vm484, %v2510, %v2511
      %v2515 = vsel %vm484, %v2509, %v2510
      %v2516 = vsel %vm484, %v2508, %v2509
      %v2517 = vsel %vm484, %v2507, %v2508
      %v2518 = vsel %vm484, %v2506, %v2507
      %v2519 = vsel %vm484, %v2505, %v2506
      %v2520 = vsel %vm484, %v2504, %v2505
      %v2521 = vsel %vm484, %v2503, %v2504
      %v2522 = vsel %vm484, %v2502, %v2503
      %v2523 = vsel %vm484, %v2501, %v2502
      %v2524 = vsel %vm484, %v2500, %v2501
      %v2525 = vsel %vm484, %v2499, %v2500
      %v2526 = vsel %vm484, %v2498, %v2499
      %v2527 = vsel %vm484, %v2497, %v2498
      %v2528 = vsel %vm484, %v2496, %v2497
      %v2529 = vsel %vm484, %v2495, %v2496
      %v2530 = vsel %vm484, %v2494, %v2495
      %v2531 = vsel %vm484, %v2493, %v2494
      %v2532 = vsel %vm484, %v2492, %v2493
      %v2533 = vsel %vm484, %v2491, %v2492
      %v2534 = vsel %vm484, %v2490, %v2491
      %v2535 = vsel %vm484, %v2489, %v2490
      %v2536 = vsel %vm484, %v2488, %v2489
      %v2537 = vsel %vm484, %v2487, %v2488
      %v2538 = vsel %vm484, %v2486, %v2487
      %v2539 = vsel %vm484, %v2485, %v2486
      %v2540 = vsel %vm484, %v2484, %v2485
      %v2541 = vsel %vm484, %v2483, %v2484
      %v2542 = vsel %vm484, %v2482, %v2483
      %v2543 = vsel %vm484, %v2481, %v2482
      %v2544 = vsel %vm484, %v2512, %v2481
      %v2545 = vsel %vm416, %v2544, 0.0
      %v2546 = vsel %vm417, %v2543, 0.0
      %v2547 = vsel %vm416, %v2542, 0.0
      %v2548 = vsel %vm417, %v2541, 0.0
      %v2549 = vsel %vm416, %v2540, 0.0
      %v2550 = vsel %vm417, %v2539, 0.0
      %v2551 = vsel %vm416, %v2538, 0.0
      %v2552 = vsel %vm417, %v2537, 0.0
      %v2553 = vsel %vm416, %v2536, 0.0
      %v2554 = vsel %vm417, %v2535, 0.0
      %v2555 = vsel %vm416, %v2534, 0.0
      %v2556 = vsel %vm417, %v2533, 0.0
      %v2557 = vsel %vm416, %v2532, 0.0
      %v2558 = vsel %vm417, %v2531, 0.0
      %v2559 = vsel %vm416, %v2530, 0.0
      %v2560 = vsel %vm417, %v2529, 0.0
      %v2561 = vsel %vm416, %v2528, 0.0
      %v2562 = vsel %vm417, %v2527, 0.0
      %v2563 = vsel %vm416, %v2526, 0.0
      %v2564 = vsel %vm417, %v2525, 0.0
      %v2565 = vsel %vm416, %v2524, 0.0
      %v2566 = vsel %vm417, %v2523, 0.0
      %v2567 = vsel %vm416, %v2522, 0.0
      %v2568 = vsel %vm417, %v2521, 0.0
      %v2569 = vsel %vm416, %v2520, 0.0
      %v2570 = vsel %vm417, %v2519, 0.0
      %v2571 = vsel %vm416, %v2518, 0.0
      %v2572 = vsel %vm417, %v2517, 0.0
      %v2573 = vsel %vm416, %v2516, 0.0
      %v2574 = vsel %vm417, %v2515, 0.0
      %v2575 = vsel %vm416, %v2514, 0.0
      %v2576 = vsel %vm417, %v2513, 0.0
      %v2577 = vpack.c.bf16 %v2546, %v2545
      %v2578 = vpack.c.bf16 %v2548, %v2547
      %v2579 = vpack.c.bf16 %v2550, %v2549
      %v2580 = vpack.c.bf16 %v2552, %v2551
      %v2581 = vpack.c.bf16 %v2554, %v2553
      %v2582 = vpack.c.bf16 %v2556, %v2555
      %v2583 = vpack.c.bf16 %v2558, %v2557
      %v2584 = vpack.c.bf16 %v2560, %v2559
      %v2585 = vpack.c.bf16 %v2562, %v2561
      %v2586 = vpack.c.bf16 %v2564, %v2563
      %v2587 = vpack.c.bf16 %v2566, %v2565
      %v2588 = vpack.c.bf16 %v2568, %v2567
      %v2589 = vpack.c.bf16 %v2570, %v2569
      %v2590 = vpack.c.bf16 %v2572, %v2571
      %v2591 = vpack.c.bf16 %v2574, %v2573
      %v2592 = vpack.c.bf16 %v2576, %v2575
      %s2593 = scalar_lea.vmem %s3, 96
      %v2594 = vld [vmem:[%s2593] sm:$0xf]
      %v2595 = vld [vmem:[%s2593 + $0x4] sm:$0xf]
      %v2596 = vld [vmem:[%s2593 + $0x8] sm:$0xf]
      %v2597 = vld [vmem:[%s2593 + $0xc] sm:$0xf]
      %v2602 = vunpack.c.l.b16 %v2594
      %v2603 = vunpack.c.l.b16 %v2595
      %v2604 = vunpack.c.l.b16 %v2596
      %v2605 = vunpack.c.l.b16 %v2597
      %v2606 = vpack.c.b16 %v2603, %v2602
      %v2607 = vpack.c.b16 %v2605, %v2604
      %v2611 = vsel %vm376, %v2577, 0
      %v2614 = vsel %vm376, %v2578, 0
      %v2617 = vsel %vm376, %v2579, 0
      %v2620 = vsel %vm376, %v2580, 0
      %v2623 = vsel %vm376, %v2581, 0
      %v2626 = vsel %vm376, %v2582, 0
      %v2629 = vsel %vm376, %v2583, 0
      %v2632 = vsel %vm376, %v2584, 0
      %v2635 = vsel %vm376, %v2585, 0
      %v2638 = vsel %vm376, %v2586, 0
      %v2641 = vsel %vm376, %v2587, 0
      %v2644 = vsel %vm376, %v2588, 0
      %v2647 = vsel %vm376, %v2589, 0
      %v2650 = vsel %vm376, %v2590, 0
      %v2653 = vsel %vm376, %v2591, 0
      %v2656 = vsel %vm376, %v2592, 0
      %2658 = vmatprep.subr.bf16.mxu0 0
      %2659 = vmatpush1.bf16.msra.mxu0 0
      %2660 = vmatprep.subr.bf16.mxu0 0
      %2661 = vmatpush1.bf16.msra.mxu0 0
      %2662 = vmatprep.subr.bf16.mxu0 0
      %2663 = vmatpush1.bf16.msra.mxu0 0
      %2664 = vmatprep.subr.bf16.mxu0 0
      %2665 = vmatpush1.bf16.msra.mxu0 0
      %2666 = vmatprep.subr.bf16.mxu0 0
      %2667 = vmatpush1.bf16.msra.mxu0 0
      %2668 = vmatprep.subr.bf16.mxu0 0
      %2669 = vmatpush1.bf16.msra.mxu0 0
      %2670 = vmatprep.subr.bf16.mxu0 0
      %2671 = vmatpush1.bf16.msra.mxu0 %v2607
      %2672 = vmatprep.subr.bf16.mxu0 0
      %2673 = vmatpush1.bf16.msra.mxu0 %v2606
      %2674 = vmatprep.subr.bf16.mxu0 0
      %2675 = vmatpush2.bf16.msra.mxu0 0
      %2676 = vmatprep.subr.bf16.mxu0 0
      %2677 = vmatpush2.bf16.msra.mxu0 0
      %2678 = vmatprep.subr.bf16.mxu0 0
      %2679 = vmatpush2.bf16.msra.mxu0 0
      %2680 = vmatprep.subr.bf16.mxu0 0
      %2681 = vmatpush2.bf16.msra.mxu0 0
      %2682 = vmatprep.subr.bf16.mxu0 0
      %2683 = vmatpush2.bf16.msra.mxu0 0
      %2684 = vmatprep.subr.bf16.mxu0 0
      %2685 = vmatpush2.bf16.msra.mxu0 0
      %2686 = vmatprep.subr.bf16.mxu0 0
      %2687 = vmatpush2.bf16.msra.mxu0 0
      %2688 = vmatprep.subr.bf16.mxu0 0
      %2689 = vmatpush2.bf16.msra.mxu0 0
      %2690 = vmatprep.mubr.bf16.mxu0 0
      %2691 = vmatmul.mubr.bf16.gmra.mxu0 %v2611
      %v2692 = vpop.f32.mrf.mxu0
      %v2693 = vadd.f32 0.0, %v2692
      %v2694 = vpop.f32.mrf.mxu0
      %v2695 = vpop.f32.mrf.mxu0
      %v2696 = vadd.f32 0.0, %v2695
      %v2697 = vpop.f32.mrf.mxu0
      %2698 = vmatprep.mubr.bf16.mxu0 0
      %2699 = vmatmul.mubr.bf16.gmra.mxu0 %v2614
      %v2700 = vpop.f32.mrf.mxu0
      %v2701 = vadd.f32 0.0, %v2700
      %v2702 = vpop.f32.mrf.mxu0
      %v2703 = vpop.f32.mrf.mxu0
      %v2704 = vadd.f32 0.0, %v2703
      %v2705 = vpop.f32.mrf.mxu0
      %2706 = vmatprep.mubr.bf16.mxu0 0
      %2707 = vmatmul.mubr.bf16.gmra.mxu0 %v2617
      %v2708 = vpop.f32.mrf.mxu0
      %v2709 = vadd.f32 0.0, %v2708
      %v2710 = vpop.f32.mrf.mxu0
      %v2711 = vpop.f32.mrf.mxu0
      %v2712 = vadd.f32 0.0, %v2711
      %v2713 = vpop.f32.mrf.mxu0
      %2714 = vmatprep.mubr.bf16.mxu0 0
      %2715 = vmatmul.mubr.bf16.gmra.mxu0 %v2620
      %v2716 = vpop.f32.mrf.mxu0
      %v2717 = vadd.f32 0.0, %v2716
      %v2718 = vpop.f32.mrf.mxu0
      %v2719 = vpop.f32.mrf.mxu0
      %v2720 = vadd.f32 0.0, %v2719
      %v2721 = vpop.f32.mrf.mxu0
      %2722 = vmatprep.mubr.bf16.mxu0 0
      %2723 = vmatmul.mubr.bf16.gmra.mxu0 %v2623
      %v2724 = vpop.f32.mrf.mxu0
      %v2725 = vadd.f32 0.0, %v2724
      %v2726 = vpop.f32.mrf.mxu0
      %v2727 = vpop.f32.mrf.mxu0
      %v2728 = vadd.f32 0.0, %v2727
      %v2729 = vpop.f32.mrf.mxu0
      %2730 = vmatprep.mubr.bf16.mxu0 0
      %2731 = vmatmul.mubr.bf16.gmra.mxu0 %v2626
      %v2732 = vpop.f32.mrf.mxu0
      %v2733 = vadd.f32 0.0, %v2732
      %v2734 = vpop.f32.mrf.mxu0
      %v2735 = vpop.f32.mrf.mxu0
      %v2736 = vadd.f32 0.0, %v2735
      %v2737 = vpop.f32.mrf.mxu0
      %2738 = vmatprep.mubr.bf16.mxu0 0
      %2739 = vmatmul.mubr.bf16.gmra.mxu0 %v2629
      %v2740 = vpop.f32.mrf.mxu0
      %v2741 = vadd.f32 0.0, %v2740
      %v2742 = vpop.f32.mrf.mxu0
      %v2743 = vpop.f32.mrf.mxu0
      %v2744 = vadd.f32 0.0, %v2743
      %v2745 = vpop.f32.mrf.mxu0
      %2746 = vmatprep.mubr.bf16.mxu0 0
      %2747 = vmatmul.mubr.bf16.gmra.mxu0 %v2632
      %v2748 = vpop.f32.mrf.mxu0
      %v2749 = vadd.f32 0.0, %v2748
      %v2750 = vpop.f32.mrf.mxu0
      %v2751 = vpop.f32.mrf.mxu0
      %v2752 = vadd.f32 0.0, %v2751
      %v2753 = vpop.f32.mrf.mxu0
      %2754 = vmatprep.mubr.bf16.mxu0 0
      %2755 = vmatmul.mubr.bf16.gmra.mxu0 %v2635
      %v2756 = vpop.f32.mrf.mxu0
      %v2757 = vadd.f32 0.0, %v2756
      %v2758 = vpop.f32.mrf.mxu0
      %v2759 = vpop.f32.mrf.mxu0
      %v2760 = vadd.f32 0.0, %v2759
      %v2761 = vpop.f32.mrf.mxu0
      %2762 = vmatprep.mubr.bf16.mxu0 0
      %2763 = vmatmul.mubr.bf16.gmra.mxu0 %v2638
      %v2764 = vpop.f32.mrf.mxu0
      %v2765 = vadd.f32 0.0, %v2764
      %v2766 = vpop.f32.mrf.mxu0
      %v2767 = vpop.f32.mrf.mxu0
      %v2768 = vadd.f32 0.0, %v2767
      %v2769 = vpop.f32.mrf.mxu0
      %2770 = vmatprep.mubr.bf16.mxu0 0
      %2771 = vmatmul.mubr.bf16.gmra.mxu0 %v2641
      %v2772 = vpop.f32.mrf.mxu0
      %v2773 = vadd.f32 0.0, %v2772
      %v2774 = vpop.f32.mrf.mxu0
      %v2775 = vpop.f32.mrf.mxu0
      %v2776 = vadd.f32 0.0, %v2775
      %v2777 = vpop.f32.mrf.mxu0
      %2778 = vmatprep.mubr.bf16.mxu0 0
      %2779 = vmatmul.mubr.bf16.gmra.mxu0 %v2644
      %v2780 = vpop.f32.mrf.mxu0
      %v2781 = vadd.f32 0.0, %v2780
      %v2782 = vpop.f32.mrf.mxu0
      %v2783 = vpop.f32.mrf.mxu0
      %v2784 = vadd.f32 0.0, %v2783
      %v2785 = vpop.f32.mrf.mxu0
      %2786 = vmatprep.mubr.bf16.mxu0 0
      %2787 = vmatmul.mubr.bf16.gmra.mxu0 %v2647
      %v2788 = vpop.f32.mrf.mxu0
      %v2789 = vadd.f32 0.0, %v2788
      %v2790 = vpop.f32.mrf.mxu0
      %v2791 = vpop.f32.mrf.mxu0
      %v2792 = vadd.f32 0.0, %v2791
      %v2793 = vpop.f32.mrf.mxu0
      %2794 = vmatprep.mubr.bf16.mxu0 0
      %2795 = vmatmul.mubr.bf16.gmra.mxu0 %v2650
      %v2796 = vpop.f32.mrf.mxu0
      %v2797 = vadd.f32 0.0, %v2796
      %v2798 = vpop.f32.mrf.mxu0
      %v2799 = vpop.f32.mrf.mxu0
      %v2800 = vadd.f32 0.0, %v2799
      %v2801 = vpop.f32.mrf.mxu0
      %2802 = vmatprep.mubr.bf16.mxu0 0
      %2803 = vmatmul.mubr.bf16.gmra.mxu0 %v2653
      %v2804 = vpop.f32.mrf.mxu0
      %v2805 = vadd.f32 0.0, %v2804
      %v2806 = vpop.f32.mrf.mxu0
      %v2807 = vpop.f32.mrf.mxu0
      %v2808 = vadd.f32 0.0, %v2807
      %v2809 = vpop.f32.mrf.mxu0
      %2810 = vmatprep.mubr.bf16.mxu0 0
      %2811 = vmatmul.mubr.bf16.gmra.mxu0 %v2656
      %v2812 = vpop.f32.mrf.mxu0
      %v2813 = vadd.f32 0.0, %v2812
      %v2814 = vpop.f32.mrf.mxu0
      %v2815 = vpop.f32.mrf.mxu0
      %v2816 = vadd.f32 0.0, %v2815
      %v2817 = vpop.f32.mrf.mxu0
      %2818 = vdwg.mxu0
      %v2819 = vadd.f32 %v2417, %v2693
      %v2820 = vadd.f32 %v2418, %v2696
      %v2821 = vadd.f32 %v2419, %v2701
      %v2822 = vadd.f32 %v2420, %v2704
      %v2823 = vadd.f32 %v2421, %v2709
      %v2824 = vadd.f32 %v2422, %v2712
      %v2825 = vadd.f32 %v2423, %v2717
      %v2826 = vadd.f32 %v2424, %v2720
      %v2827 = vadd.f32 %v2425, %v2725
      %v2828 = vadd.f32 %v2426, %v2728
      %v2829 = vadd.f32 %v2427, %v2733
      %v2830 = vadd.f32 %v2428, %v2736
      %v2831 = vadd.f32 %v2429, %v2741
      %v2832 = vadd.f32 %v2430, %v2744
      %v2833 = vadd.f32 %v2431, %v2749
      %v2834 = vadd.f32 %v2432, %v2752
      %v2835 = vadd.f32 %v2433, %v2757
      %v2836 = vadd.f32 %v2434, %v2760
      %v2837 = vadd.f32 %v2435, %v2765
      %v2838 = vadd.f32 %v2436, %v2768
      %v2839 = vadd.f32 %v2437, %v2773
      %v2840 = vadd.f32 %v2438, %v2776
      %v2841 = vadd.f32 %v2439, %v2781
      %v2842 = vadd.f32 %v2440, %v2784
      %v2843 = vadd.f32 %v2441, %v2789
      %v2844 = vadd.f32 %v2442, %v2792
      %v2845 = vadd.f32 %v2443, %v2797
      %v2846 = vadd.f32 %v2444, %v2800
      %v2847 = vadd.f32 %v2445, %v2805
      %v2848 = vadd.f32 %v2446, %v2808
      %v2849 = vadd.f32 %v2447, %v2813
      %v2850 = vadd.f32 %v2448, %v2816
      %v2851 = vpack.c.bf16 %v2450, %v2449
      %v2852 = vpack.c.bf16 %v2452, %v2451
      %v2853 = vpack.c.bf16 %v2454, %v2453
      %v2854 = vpack.c.bf16 %v2456, %v2455
      %v2855 = vpack.c.bf16 %v2458, %v2457
      %v2856 = vpack.c.bf16 %v2460, %v2459
      %v2857 = vpack.c.bf16 %v2462, %v2461
      %v2858 = vpack.c.bf16 %v2464, %v2463
      %v2859 = vpack.c.bf16 %v2466, %v2465
      %v2860 = vpack.c.bf16 %v2468, %v2467
      %v2861 = vpack.c.bf16 %v2470, %v2469
      %v2862 = vpack.c.bf16 %v2472, %v2471
      %v2863 = vpack.c.bf16 %v2474, %v2473
      %v2864 = vpack.c.bf16 %v2476, %v2475
      %v2865 = vpack.c.bf16 %v2478, %v2477
      %v2866 = vpack.c.bf16 %v2480, %v2479
      %s2867 = scalar_lea.vmem %s3, 112
      %v2868 = vld [vmem:[%s2867] sm:$0xf]
      %v2869 = vld [vmem:[%s2867 + $0x4] sm:$0xf]
      %v2870 = vld [vmem:[%s2867 + $0x8] sm:$0xf]
      %v2871 = vld [vmem:[%s2867 + $0xc] sm:$0xf]
      %v2876 = vunpack.c.l.b16 %v2868
      %v2877 = vunpack.c.l.b16 %v2869
      %v2878 = vunpack.c.l.b16 %v2870
      %v2879 = vunpack.c.l.b16 %v2871
      %v2880 = vpack.c.b16 %v2877, %v2876
      %v2881 = vpack.c.b16 %v2879, %v2878
      %v2885 = vsel %vm376, %v2851, 0
      %v2888 = vsel %vm376, %v2852, 0
      %v2891 = vsel %vm376, %v2853, 0
      %v2894 = vsel %vm376, %v2854, 0
      %v2897 = vsel %vm376, %v2855, 0
      %v2900 = vsel %vm376, %v2856, 0
      %v2903 = vsel %vm376, %v2857, 0
      %v2906 = vsel %vm376, %v2858, 0
      %v2909 = vsel %vm376, %v2859, 0
      %v2912 = vsel %vm376, %v2860, 0
      %v2915 = vsel %vm376, %v2861, 0
      %v2918 = vsel %vm376, %v2862, 0
      %v2921 = vsel %vm376, %v2863, 0
      %v2924 = vsel %vm376, %v2864, 0
      %v2927 = vsel %vm376, %v2865, 0
      %v2930 = vsel %vm376, %v2866, 0
      %2932 = vmatprep.subr.bf16.mxu0 0
      %2933 = vmatpush1.bf16.msra.mxu0 0
      %2934 = vmatprep.subr.bf16.mxu0 0
      %2935 = vmatpush1.bf16.msra.mxu0 0
      %2936 = vmatprep.subr.bf16.mxu0 0
      %2937 = vmatpush1.bf16.msra.mxu0 0
      %2938 = vmatprep.subr.bf16.mxu0 0
      %2939 = vmatpush1.bf16.msra.mxu0 0
      %2940 = vmatprep.subr.bf16.mxu0 0
      %2941 = vmatpush1.bf16.msra.mxu0 0
      %2942 = vmatprep.subr.bf16.mxu0 0
      %2943 = vmatpush1.bf16.msra.mxu0 0
      %2944 = vmatprep.subr.bf16.mxu0 0
      %2945 = vmatpush1.bf16.msra.mxu0 %v2881
      %2946 = vmatprep.subr.bf16.mxu0 0
      %2947 = vmatpush1.bf16.msra.mxu0 %v2880
      %2948 = vmatprep.subr.bf16.mxu0 0
      %2949 = vmatpush2.bf16.msra.mxu0 0
      %2950 = vmatprep.subr.bf16.mxu0 0
      %2951 = vmatpush2.bf16.msra.mxu0 0
      %2952 = vmatprep.subr.bf16.mxu0 0
      %2953 = vmatpush2.bf16.msra.mxu0 0
      %2954 = vmatprep.subr.bf16.mxu0 0
      %2955 = vmatpush2.bf16.msra.mxu0 0
      %2956 = vmatprep.subr.bf16.mxu0 0
      %2957 = vmatpush2.bf16.msra.mxu0 0
      %2958 = vmatprep.subr.bf16.mxu0 0
      %2959 = vmatpush2.bf16.msra.mxu0 0
      %2960 = vmatprep.subr.bf16.mxu0 0
      %2961 = vmatpush2.bf16.msra.mxu0 0
      %2962 = vmatprep.subr.bf16.mxu0 0
      %2963 = vmatpush2.bf16.msra.mxu0 0
      %2964 = vmatprep.mubr.bf16.mxu0 0
      %2965 = vmatmul.mubr.bf16.gmra.mxu0 %v2885
      %v2966 = vpop.f32.mrf.mxu0
      %v2967 = vadd.f32 0.0, %v2966
      %v2968 = vpop.f32.mrf.mxu0
      %v2969 = vpop.f32.mrf.mxu0
      %v2970 = vadd.f32 0.0, %v2969
      %v2971 = vpop.f32.mrf.mxu0
      %2972 = vmatprep.mubr.bf16.mxu0 0
      %2973 = vmatmul.mubr.bf16.gmra.mxu0 %v2888
      %v2974 = vpop.f32.mrf.mxu0
      %v2975 = vadd.f32 0.0, %v2974
      %v2976 = vpop.f32.mrf.mxu0
      %v2977 = vpop.f32.mrf.mxu0
      %v2978 = vadd.f32 0.0, %v2977
      %v2979 = vpop.f32.mrf.mxu0
      %2980 = vmatprep.mubr.bf16.mxu0 0
      %2981 = vmatmul.mubr.bf16.gmra.mxu0 %v2891
      %v2982 = vpop.f32.mrf.mxu0
      %v2983 = vadd.f32 0.0, %v2982
      %v2984 = vpop.f32.mrf.mxu0
      %v2985 = vpop.f32.mrf.mxu0
      %v2986 = vadd.f32 0.0, %v2985
      %v2987 = vpop.f32.mrf.mxu0
      %2988 = vmatprep.mubr.bf16.mxu0 0
      %2989 = vmatmul.mubr.bf16.gmra.mxu0 %v2894
      %v2990 = vpop.f32.mrf.mxu0
      %v2991 = vadd.f32 0.0, %v2990
      %v2992 = vpop.f32.mrf.mxu0
      %v2993 = vpop.f32.mrf.mxu0
      %v2994 = vadd.f32 0.0, %v2993
      %v2995 = vpop.f32.mrf.mxu0
      %2996 = vmatprep.mubr.bf16.mxu0 0
      %2997 = vmatmul.mubr.bf16.gmra.mxu0 %v2897
      %v2998 = vpop.f32.mrf.mxu0
      %v2999 = vadd.f32 0.0, %v2998
      %v3000 = vpop.f32.mrf.mxu0
      %v3001 = vpop.f32.mrf.mxu0
      %v3002 = vadd.f32 0.0, %v3001
      %v3003 = vpop.f32.mrf.mxu0
      %3004 = vmatprep.mubr.bf16.mxu0 0
      %3005 = vmatmul.mubr.bf16.gmra.mxu0 %v2900
      %v3006 = vpop.f32.mrf.mxu0
      %v3007 = vadd.f32 0.0, %v3006
      %v3008 = vpop.f32.mrf.mxu0
      %v3009 = vpop.f32.mrf.mxu0
      %v3010 = vadd.f32 0.0, %v3009
      %v3011 = vpop.f32.mrf.mxu0
      %3012 = vmatprep.mubr.bf16.mxu0 0
      %3013 = vmatmul.mubr.bf16.gmra.mxu0 %v2903
      %v3014 = vpop.f32.mrf.mxu0
      %v3015 = vadd.f32 0.0, %v3014
      %v3016 = vpop.f32.mrf.mxu0
      %v3017 = vpop.f32.mrf.mxu0
      %v3018 = vadd.f32 0.0, %v3017
      %v3019 = vpop.f32.mrf.mxu0
      %3020 = vmatprep.mubr.bf16.mxu0 0
      %3021 = vmatmul.mubr.bf16.gmra.mxu0 %v2906
      %v3022 = vpop.f32.mrf.mxu0
      %v3023 = vadd.f32 0.0, %v3022
      %v3024 = vpop.f32.mrf.mxu0
      %v3025 = vpop.f32.mrf.mxu0
      %v3026 = vadd.f32 0.0, %v3025
      %v3027 = vpop.f32.mrf.mxu0
      %3028 = vmatprep.mubr.bf16.mxu0 0
      %3029 = vmatmul.mubr.bf16.gmra.mxu0 %v2909
      %v3030 = vpop.f32.mrf.mxu0
      %v3031 = vadd.f32 0.0, %v3030
      %v3032 = vpop.f32.mrf.mxu0
      %v3033 = vpop.f32.mrf.mxu0
      %v3034 = vadd.f32 0.0, %v3033
      %v3035 = vpop.f32.mrf.mxu0
      %3036 = vmatprep.mubr.bf16.mxu0 0
      %3037 = vmatmul.mubr.bf16.gmra.mxu0 %v2912
      %v3038 = vpop.f32.mrf.mxu0
      %v3039 = vadd.f32 0.0, %v3038
      %v3040 = vpop.f32.mrf.mxu0
      %v3041 = vpop.f32.mrf.mxu0
      %v3042 = vadd.f32 0.0, %v3041
      %v3043 = vpop.f32.mrf.mxu0
      %3044 = vmatprep.mubr.bf16.mxu0 0
      %3045 = vmatmul.mubr.bf16.gmra.mxu0 %v2915
      %v3046 = vpop.f32.mrf.mxu0
      %v3047 = vadd.f32 0.0, %v3046
      %v3048 = vpop.f32.mrf.mxu0
      %v3049 = vpop.f32.mrf.mxu0
      %v3050 = vadd.f32 0.0, %v3049
      %v3051 = vpop.f32.mrf.mxu0
      %3052 = vmatprep.mubr.bf16.mxu0 0
      %3053 = vmatmul.mubr.bf16.gmra.mxu0 %v2918
      %v3054 = vpop.f32.mrf.mxu0
      %v3055 = vadd.f32 0.0, %v3054
      %v3056 = vpop.f32.mrf.mxu0
      %v3057 = vpop.f32.mrf.mxu0
      %v3058 = vadd.f32 0.0, %v3057
      %v3059 = vpop.f32.mrf.mxu0
      %3060 = vmatprep.mubr.bf16.mxu0 0
      %3061 = vmatmul.mubr.bf16.gmra.mxu0 %v2921
      %v3062 = vpop.f32.mrf.mxu0
      %v3063 = vadd.f32 0.0, %v3062
      %v3064 = vpop.f32.mrf.mxu0
      %v3065 = vpop.f32.mrf.mxu0
      %v3066 = vadd.f32 0.0, %v3065
      %v3067 = vpop.f32.mrf.mxu0
      %3068 = vmatprep.mubr.bf16.mxu0 0
      %3069 = vmatmul.mubr.bf16.gmra.mxu0 %v2924
      %v3070 = vpop.f32.mrf.mxu0
      %v3071 = vadd.f32 0.0, %v3070
      %v3072 = vpop.f32.mrf.mxu0
      %v3073 = vpop.f32.mrf.mxu0
      %v3074 = vadd.f32 0.0, %v3073
      %v3075 = vpop.f32.mrf.mxu0
      %3076 = vmatprep.mubr.bf16.mxu0 0
      %3077 = vmatmul.mubr.bf16.gmra.mxu0 %v2927
      %v3078 = vpop.f32.mrf.mxu0
      %v3079 = vadd.f32 0.0, %v3078
      %v3080 = vpop.f32.mrf.mxu0
      %v3081 = vpop.f32.mrf.mxu0
      %v3082 = vadd.f32 0.0, %v3081
      %v3083 = vpop.f32.mrf.mxu0
      %3084 = vmatprep.mubr.bf16.mxu0 0
      %3085 = vmatmul.mubr.bf16.gmra.mxu0 %v2930
      %v3086 = vpop.f32.mrf.mxu0
      %v3087 = vadd.f32 0.0, %v3086
      %v3088 = vpop.f32.mrf.mxu0
      %v3089 = vpop.f32.mrf.mxu0
      %v3090 = vadd.f32 0.0, %v3089
      %v3091 = vpop.f32.mrf.mxu0
      %3092 = vdwg.mxu0
      %v3093 = vadd.f32 %v2819, %v2967
      %v3094 = vadd.f32 %v2820, %v2970
      %v3095 = vadd.f32 %v2821, %v2975
      %v3096 = vadd.f32 %v2822, %v2978
      %v3097 = vadd.f32 %v2823, %v2983
      %v3098 = vadd.f32 %v2824, %v2986
      %v3099 = vadd.f32 %v2825, %v2991
      %v3100 = vadd.f32 %v2826, %v2994
      %v3101 = vadd.f32 %v2827, %v2999
      %v3102 = vadd.f32 %v2828, %v3002
      %v3103 = vadd.f32 %v2829, %v3007
      %v3104 = vadd.f32 %v2830, %v3010
      %v3105 = vadd.f32 %v2831, %v3015
      %v3106 = vadd.f32 %v2832, %v3018
      %v3107 = vadd.f32 %v2833, %v3023
      %v3108 = vadd.f32 %v2834, %v3026
      %v3109 = vadd.f32 %v2835, %v3031
      %v3110 = vadd.f32 %v2836, %v3034
      %v3111 = vadd.f32 %v2837, %v3039
      %v3112 = vadd.f32 %v2838, %v3042
      %v3113 = vadd.f32 %v2839, %v3047
      %v3114 = vadd.f32 %v2840, %v3050
      %v3115 = vadd.f32 %v2841, %v3055
      %v3116 = vadd.f32 %v2842, %v3058
      %v3117 = vadd.f32 %v2843, %v3063
      %v3118 = vadd.f32 %v2844, %v3066
      %v3119 = vadd.f32 %v2845, %v3071
      %v3120 = vadd.f32 %v2846, %v3074
      %v3121 = vadd.f32 %v2847, %v3079
      %v3122 = vadd.f32 %v2848, %v3082
      %v3123 = vadd.f32 %v2849, %v3087
      %v3124 = vadd.f32 %v2850, %v3090
      %v3125 = vrot.slane %v2449, 1
      %v3126 = vrot.slane %v2450, 1
      %v3127 = vrot.slane %v2451, 1
      %v3128 = vrot.slane %v2452, 1
      %v3129 = vrot.slane %v2453, 1
      %v3130 = vrot.slane %v2454, 1
      %v3131 = vrot.slane %v2455, 1
      %v3132 = vrot.slane %v2456, 1
      %v3133 = vrot.slane %v2457, 1
      %v3134 = vrot.slane %v2458, 1
      %v3135 = vrot.slane %v2459, 1
      %v3136 = vrot.slane %v2460, 1
      %v3137 = vrot.slane %v2461, 1
      %v3138 = vrot.slane %v2462, 1
      %v3139 = vrot.slane %v2463, 1
      %v3140 = vrot.slane %v2464, 1
      %v3141 = vrot.slane %v2465, 1
      %v3142 = vrot.slane %v2466, 1
      %v3143 = vrot.slane %v2467, 1
      %v3144 = vrot.slane %v2468, 1
      %v3145 = vrot.slane %v2469, 1
      %v3146 = vrot.slane %v2470, 1
      %v3147 = vrot.slane %v2471, 1
      %v3148 = vrot.slane %v2472, 1
      %v3149 = vrot.slane %v2473, 1
      %v3150 = vrot.slane %v2474, 1
      %v3151 = vrot.slane %v2475, 1
      %v3152 = vrot.slane %v2476, 1
      %v3153 = vrot.slane %v2477, 1
      %v3154 = vrot.slane %v2478, 1
      %v3155 = vrot.slane %v2479, 1
      %v3156 = vrot.slane %v2480, 1
      %v3157 = vsel %vm1064, %v3155, %v3156
      %v3158 = vsel %vm1064, %v3154, %v3155
      %v3159 = vsel %vm1064, %v3153, %v3154
      %v3160 = vsel %vm1064, %v3152, %v3153
      %v3161 = vsel %vm1064, %v3151, %v3152
      %v3162 = vsel %vm1064, %v3150, %v3151
      %v3163 = vsel %vm1064, %v3149, %v3150
      %v3164 = vsel %vm1064, %v3148, %v3149
      %v3165 = vsel %vm1064, %v3147, %v3148
      %v3166 = vsel %vm1064, %v3146, %v3147
      %v3167 = vsel %vm1064, %v3145, %v3146
      %v3168 = vsel %vm1064, %v3144, %v3145
      %v3169 = vsel %vm1064, %v3143, %v3144
      %v3170 = vsel %vm1064, %v3142, %v3143
      %v3171 = vsel %vm1064, %v3141, %v3142
      %v3172 = vsel %vm1064, %v3140, %v3141
      %v3173 = vsel %vm1064, %v3139, %v3140
      %v3174 = vsel %vm1064, %v3138, %v3139
      %v3175 = vsel %vm1064, %v3137, %v3138
      %v3176 = vsel %vm1064, %v3136, %v3137
      %v3177 = vsel %vm1064, %v3135, %v3136
      %v3178 = vsel %vm1064, %v3134, %v3135
      %v3179 = vsel %vm1064, %v3133, %v3134
      %v3180 = vsel %vm1064, %v3132, %v3133
      %v3181 = vsel %vm1064, %v3131, %v3132
      %v3182 = vsel %vm1064, %v3130, %v3131
      %v3183 = vsel %vm1064, %v3129, %v3130
      %v3184 = vsel %vm1064, %v3128, %v3129
      %v3185 = vsel %vm1064, %v3127, %v3128
      %v3186 = vsel %vm1064, %v3126, %v3127
      %v3187 = vsel %vm1064, %v3125, %v3126
      %v3188 = vsel %vm1064, %v3156, %v3125
      %v3189 = vsel %vm418, %v3187, 0.0
      %v3190 = vsel %vm419, %v3186, 0.0
      %v3191 = vsel %vm418, %v3185, 0.0
      %v3192 = vsel %vm419, %v3184, 0.0
      %v3193 = vsel %vm418, %v3183, 0.0
      %v3194 = vsel %vm419, %v3182, 0.0
      %v3195 = vsel %vm418, %v3181, 0.0
      %v3196 = vsel %vm419, %v3180, 0.0
      %v3197 = vsel %vm418, %v3179, 0.0
      %v3198 = vsel %vm419, %v3178, 0.0
      %v3199 = vsel %vm418, %v3177, 0.0
      %v3200 = vsel %vm419, %v3176, 0.0
      %v3201 = vsel %vm418, %v3175, 0.0
      %v3202 = vsel %vm419, %v3174, 0.0
      %v3203 = vsel %vm418, %v3173, 0.0
      %v3204 = vsel %vm419, %v3172, 0.0
      %v3205 = vsel %vm418, %v3171, 0.0
      %v3206 = vsel %vm419, %v3170, 0.0
      %v3207 = vsel %vm418, %v3169, 0.0
      %v3208 = vsel %vm419, %v3168, 0.0
      %v3209 = vsel %vm418, %v3167, 0.0
      %v3210 = vsel %vm419, %v3166, 0.0
      %v3211 = vsel %vm418, %v3165, 0.0
      %v3212 = vsel %vm419, %v3164, 0.0
      %v3213 = vsel %vm418, %v3163, 0.0
      %v3214 = vsel %vm419, %v3162, 0.0
      %v3215 = vsel %vm418, %v3161, 0.0
      %v3216 = vsel %vm419, %v3160, 0.0
      %v3217 = vsel %vm418, %v3159, 0.0
      %v3218 = vsel %vm419, %v3158, 0.0
      %v3219 = vsel %vm418, %v3157, 0.0
      %v3220 = vsel %vm419, %v3188, 0.0
      %v3221 = vpack.c.bf16 %v3190, %v3189
      %v3222 = vpack.c.bf16 %v3192, %v3191
      %v3223 = vpack.c.bf16 %v3194, %v3193
      %v3224 = vpack.c.bf16 %v3196, %v3195
      %v3225 = vpack.c.bf16 %v3198, %v3197
      %v3226 = vpack.c.bf16 %v3200, %v3199
      %v3227 = vpack.c.bf16 %v3202, %v3201
      %v3228 = vpack.c.bf16 %v3204, %v3203
      %v3229 = vpack.c.bf16 %v3206, %v3205
      %v3230 = vpack.c.bf16 %v3208, %v3207
      %v3231 = vpack.c.bf16 %v3210, %v3209
      %v3232 = vpack.c.bf16 %v3212, %v3211
      %v3233 = vpack.c.bf16 %v3214, %v3213
      %v3234 = vpack.c.bf16 %v3216, %v3215
      %v3235 = vpack.c.bf16 %v3218, %v3217
      %v3236 = vpack.c.bf16 %v3220, %v3219
      %s3237 = scalar_lea.vmem %s3, 128
      %v3238 = vld [vmem:[%s3237] sm:$0xf]
      %v3239 = vld [vmem:[%s3237 + $0x4] sm:$0xf]
      %v3240 = vld [vmem:[%s3237 + $0x8] sm:$0xf]
      %v3241 = vld [vmem:[%s3237 + $0xc] sm:$0xf]
      %v3246 = vunpack.c.l.b16 %v3238
      %v3247 = vunpack.c.l.b16 %v3239
      %v3248 = vunpack.c.l.b16 %v3240
      %v3249 = vunpack.c.l.b16 %v3241
      %v3250 = vpack.c.b16 %v3247, %v3246
      %v3251 = vpack.c.b16 %v3249, %v3248
      %v3255 = vsel %vm376, %v3221, 0
      %v3258 = vsel %vm376, %v3222, 0
      %v3261 = vsel %vm376, %v3223, 0
      %v3264 = vsel %vm376, %v3224, 0
      %v3267 = vsel %vm376, %v3225, 0
      %v3270 = vsel %vm376, %v3226, 0
      %v3273 = vsel %vm376, %v3227, 0
      %v3276 = vsel %vm376, %v3228, 0
      %v3279 = vsel %vm376, %v3229, 0
      %v3282 = vsel %vm376, %v3230, 0
      %v3285 = vsel %vm376, %v3231, 0
      %v3288 = vsel %vm376, %v3232, 0
      %v3291 = vsel %vm376, %v3233, 0
      %v3294 = vsel %vm376, %v3234, 0
      %v3297 = vsel %vm376, %v3235, 0
      %v3300 = vsel %vm376, %v3236, 0
      %3302 = vmatprep.subr.bf16.mxu0 0
      %3303 = vmatpush1.bf16.msra.mxu0 0
      %3304 = vmatprep.subr.bf16.mxu0 0
      %3305 = vmatpush1.bf16.msra.mxu0 0
      %3306 = vmatprep.subr.bf16.mxu0 0
      %3307 = vmatpush1.bf16.msra.mxu0 0
      %3308 = vmatprep.subr.bf16.mxu0 0
      %3309 = vmatpush1.bf16.msra.mxu0 0
      %3310 = vmatprep.subr.bf16.mxu0 0
      %3311 = vmatpush1.bf16.msra.mxu0 0
      %3312 = vmatprep.subr.bf16.mxu0 0
      %3313 = vmatpush1.bf16.msra.mxu0 0
      %3314 = vmatprep.subr.bf16.mxu0 0
      %3315 = vmatpush1.bf16.msra.mxu0 %v3251
      %3316 = vmatprep.subr.bf16.mxu0 0
      %3317 = vmatpush1.bf16.msra.mxu0 %v3250
      %3318 = vmatprep.subr.bf16.mxu0 0
      %3319 = vmatpush2.bf16.msra.mxu0 0
      %3320 = vmatprep.subr.bf16.mxu0 0
      %3321 = vmatpush2.bf16.msra.mxu0 0
      %3322 = vmatprep.subr.bf16.mxu0 0
      %3323 = vmatpush2.bf16.msra.mxu0 0
      %3324 = vmatprep.subr.bf16.mxu0 0
      %3325 = vmatpush2.bf16.msra.mxu0 0
      %3326 = vmatprep.subr.bf16.mxu0 0
      %3327 = vmatpush2.bf16.msra.mxu0 0
      %3328 = vmatprep.subr.bf16.mxu0 0
      %3329 = vmatpush2.bf16.msra.mxu0 0
      %3330 = vmatprep.subr.bf16.mxu0 0
      %3331 = vmatpush2.bf16.msra.mxu0 0
      %3332 = vmatprep.subr.bf16.mxu0 0
      %3333 = vmatpush2.bf16.msra.mxu0 0
      %3334 = vmatprep.mubr.bf16.mxu0 0
      %3335 = vmatmul.mubr.bf16.gmra.mxu0 %v3255
      %v3336 = vpop.f32.mrf.mxu0
      %v3337 = vadd.f32 0.0, %v3336
      %v3338 = vpop.f32.mrf.mxu0
      %v3339 = vpop.f32.mrf.mxu0
      %v3340 = vadd.f32 0.0, %v3339
      %v3341 = vpop.f32.mrf.mxu0
      %3342 = vmatprep.mubr.bf16.mxu0 0
      %3343 = vmatmul.mubr.bf16.gmra.mxu0 %v3258
      %v3344 = vpop.f32.mrf.mxu0
      %v3345 = vadd.f32 0.0, %v3344
      %v3346 = vpop.f32.mrf.mxu0
      %v3347 = vpop.f32.mrf.mxu0
      %v3348 = vadd.f32 0.0, %v3347
      %v3349 = vpop.f32.mrf.mxu0
      %3350 = vmatprep.mubr.bf16.mxu0 0
      %3351 = vmatmul.mubr.bf16.gmra.mxu0 %v3261
      %v3352 = vpop.f32.mrf.mxu0
      %v3353 = vadd.f32 0.0, %v3352
      %v3354 = vpop.f32.mrf.mxu0
      %v3355 = vpop.f32.mrf.mxu0
      %v3356 = vadd.f32 0.0, %v3355
      %v3357 = vpop.f32.mrf.mxu0
      %3358 = vmatprep.mubr.bf16.mxu0 0
      %3359 = vmatmul.mubr.bf16.gmra.mxu0 %v3264
      %v3360 = vpop.f32.mrf.mxu0
      %v3361 = vadd.f32 0.0, %v3360
      %v3362 = vpop.f32.mrf.mxu0
      %v3363 = vpop.f32.mrf.mxu0
      %v3364 = vadd.f32 0.0, %v3363
      %v3365 = vpop.f32.mrf.mxu0
      %3366 = vmatprep.mubr.bf16.mxu0 0
      %3367 = vmatmul.mubr.bf16.gmra.mxu0 %v3267
      %v3368 = vpop.f32.mrf.mxu0
      %v3369 = vadd.f32 0.0, %v3368
      %v3370 = vpop.f32.mrf.mxu0
      %v3371 = vpop.f32.mrf.mxu0
      %v3372 = vadd.f32 0.0, %v3371
      %v3373 = vpop.f32.mrf.mxu0
      %3374 = vmatprep.mubr.bf16.mxu0 0
      %3375 = vmatmul.mubr.bf16.gmra.mxu0 %v3270
      %v3376 = vpop.f32.mrf.mxu0
      %v3377 = vadd.f32 0.0, %v3376
      %v3378 = vpop.f32.mrf.mxu0
      %v3379 = vpop.f32.mrf.mxu0
      %v3380 = vadd.f32 0.0, %v3379
      %v3381 = vpop.f32.mrf.mxu0
      %3382 = vmatprep.mubr.bf16.mxu0 0
      %3383 = vmatmul.mubr.bf16.gmra.mxu0 %v3273
      %v3384 = vpop.f32.mrf.mxu0
      %v3385 = vadd.f32 0.0, %v3384
      %v3386 = vpop.f32.mrf.mxu0
      %v3387 = vpop.f32.mrf.mxu0
      %v3388 = vadd.f32 0.0, %v3387
      %v3389 = vpop.f32.mrf.mxu0
      %3390 = vmatprep.mubr.bf16.mxu0 0
      %3391 = vmatmul.mubr.bf16.gmra.mxu0 %v3276
      %v3392 = vpop.f32.mrf.mxu0
      %v3393 = vadd.f32 0.0, %v3392
      %v3394 = vpop.f32.mrf.mxu0
      %v3395 = vpop.f32.mrf.mxu0
      %v3396 = vadd.f32 0.0, %v3395
      %v3397 = vpop.f32.mrf.mxu0
      %3398 = vmatprep.mubr.bf16.mxu0 0
      %3399 = vmatmul.mubr.bf16.gmra.mxu0 %v3279
      %v3400 = vpop.f32.mrf.mxu0
      %v3401 = vadd.f32 0.0, %v3400
      %v3402 = vpop.f32.mrf.mxu0
      %v3403 = vpop.f32.mrf.mxu0
      %v3404 = vadd.f32 0.0, %v3403
      %v3405 = vpop.f32.mrf.mxu0
      %3406 = vmatprep.mubr.bf16.mxu0 0
      %3407 = vmatmul.mubr.bf16.gmra.mxu0 %v3282
      %v3408 = vpop.f32.mrf.mxu0
      %v3409 = vadd.f32 0.0, %v3408
      %v3410 = vpop.f32.mrf.mxu0
      %v3411 = vpop.f32.mrf.mxu0
      %v3412 = vadd.f32 0.0, %v3411
      %v3413 = vpop.f32.mrf.mxu0
      %3414 = vmatprep.mubr.bf16.mxu0 0
      %3415 = vmatmul.mubr.bf16.gmra.mxu0 %v3285
      %v3416 = vpop.f32.mrf.mxu0
      %v3417 = vadd.f32 0.0, %v3416
      %v3418 = vpop.f32.mrf.mxu0
      %v3419 = vpop.f32.mrf.mxu0
      %v3420 = vadd.f32 0.0, %v3419
      %v3421 = vpop.f32.mrf.mxu0
      %3422 = vmatprep.mubr.bf16.mxu0 0
      %3423 = vmatmul.mubr.bf16.gmra.mxu0 %v3288
      %v3424 = vpop.f32.mrf.mxu0
      %v3425 = vadd.f32 0.0, %v3424
      %v3426 = vpop.f32.mrf.mxu0
      %v3427 = vpop.f32.mrf.mxu0
      %v3428 = vadd.f32 0.0, %v3427
      %v3429 = vpop.f32.mrf.mxu0
      %3430 = vmatprep.mubr.bf16.mxu0 0
      %3431 = vmatmul.mubr.bf16.gmra.mxu0 %v3291
      %v3432 = vpop.f32.mrf.mxu0
      %v3433 = vadd.f32 0.0, %v3432
      %v3434 = vpop.f32.mrf.mxu0
      %v3435 = vpop.f32.mrf.mxu0
      %v3436 = vadd.f32 0.0, %v3435
      %v3437 = vpop.f32.mrf.mxu0
      %3438 = vmatprep.mubr.bf16.mxu0 0
      %3439 = vmatmul.mubr.bf16.gmra.mxu0 %v3294
      %v3440 = vpop.f32.mrf.mxu0
      %v3441 = vadd.f32 0.0, %v3440
      %v3442 = vpop.f32.mrf.mxu0
      %v3443 = vpop.f32.mrf.mxu0
      %v3444 = vadd.f32 0.0, %v3443
      %v3445 = vpop.f32.mrf.mxu0
      %3446 = vmatprep.mubr.bf16.mxu0 0
      %3447 = vmatmul.mubr.bf16.gmra.mxu0 %v3297
      %v3448 = vpop.f32.mrf.mxu0
      %v3449 = vadd.f32 0.0, %v3448
      %v3450 = vpop.f32.mrf.mxu0
      %v3451 = vpop.f32.mrf.mxu0
      %v3452 = vadd.f32 0.0, %v3451
      %v3453 = vpop.f32.mrf.mxu0
      %3454 = vmatprep.mubr.bf16.mxu0 0
      %3455 = vmatmul.mubr.bf16.gmra.mxu0 %v3300
      %v3456 = vpop.f32.mrf.mxu0
      %v3457 = vadd.f32 0.0, %v3456
      %v3458 = vpop.f32.mrf.mxu0
      %v3459 = vpop.f32.mrf.mxu0
      %v3460 = vadd.f32 0.0, %v3459
      %v3461 = vpop.f32.mrf.mxu0
      %3462 = vdwg.mxu0
      %v3463 = vadd.f32 %v3093, %v3337
      %v3464 = vadd.f32 %v3094, %v3340
      %v3465 = vadd.f32 %v3095, %v3345
      %v3466 = vadd.f32 %v3096, %v3348
      %v3467 = vadd.f32 %v3097, %v3353
      %v3468 = vadd.f32 %v3098, %v3356
      %v3469 = vadd.f32 %v3099, %v3361
      %v3470 = vadd.f32 %v3100, %v3364
      %v3471 = vadd.f32 %v3101, %v3369
      %v3472 = vadd.f32 %v3102, %v3372
      %v3473 = vadd.f32 %v3103, %v3377
      %v3474 = vadd.f32 %v3104, %v3380
      %v3475 = vadd.f32 %v3105, %v3385
      %v3476 = vadd.f32 %v3106, %v3388
      %v3477 = vadd.f32 %v3107, %v3393
      %v3478 = vadd.f32 %v3108, %v3396
      %v3479 = vadd.f32 %v3109, %v3401
      %v3480 = vadd.f32 %v3110, %v3404
      %v3481 = vadd.f32 %v3111, %v3409
      %v3482 = vadd.f32 %v3112, %v3412
      %v3483 = vadd.f32 %v3113, %v3417
      %v3484 = vadd.f32 %v3114, %v3420
      %v3485 = vadd.f32 %v3115, %v3425
      %v3486 = vadd.f32 %v3116, %v3428
      %v3487 = vadd.f32 %v3117, %v3433
      %v3488 = vadd.f32 %v3118, %v3436
      %v3489 = vadd.f32 %v3119, %v3441
      %v3490 = vadd.f32 %v3120, %v3444
      %v3491 = vadd.f32 %v3121, %v3449
      %v3492 = vadd.f32 %v3122, %v3452
      %v3493 = vadd.f32 %v3123, %v3457
      %v3494 = vadd.f32 %v3124, %v3460
      %vm3495 = vcmask 64512
      %3496 = vst.msk [vmem:[%s199] sm:$0xff] %vm3495, %v3463
      %3497 = vst.msk [vmem:[%s199 + $0x8] sm:$0xff] %vm3495, %v3464
      %3498 = vst.msk [vmem:[%s199 + $0x10] sm:$0xff] %vm3495, %v3465
      %3499 = vst.msk [vmem:[%s199 + $0x18] sm:$0xff] %vm3495, %v3466
      %3500 = vst.msk [vmem:[%s199 + $0x20] sm:$0xff] %vm3495, %v3467
      %3501 = vst.msk [vmem:[%s199 + $0x28] sm:$0xff] %vm3495, %v3468
      %3502 = vst.msk [vmem:[%s199 + $0x30] sm:$0xff] %vm3495, %v3469
      %3503 = vst.msk [vmem:[%s199 + $0x38] sm:$0xff] %vm3495, %v3470
      %3504 = vst.msk [vmem:[%s199 + $0x40] sm:$0xff] %vm3495, %v3471
      %3505 = vst.msk [vmem:[%s199 + $0x48] sm:$0xff] %vm3495, %v3472
      %3506 = vst.msk [vmem:[%s199 + $0x50] sm:$0xff] %vm3495, %v3473
      %3507 = vst.msk [vmem:[%s199 + $0x58] sm:$0xff] %vm3495, %v3474
      %3508 = vst.msk [vmem:[%s199 + $0x60] sm:$0xff] %vm3495, %v3475
      %3509 = vst.msk [vmem:[%s199 + $0x68] sm:$0xff] %vm3495, %v3476
      %3510 = vst.msk [vmem:[%s199 + $0x70] sm:$0xff] %vm3495, %v3477
      %3511 = vst.msk [vmem:[%s199 + $0x78] sm:$0xff] %vm3495, %v3478
      %3512 = vst.msk [vmem:[%s199 + $0x80] sm:$0xff] %vm3495, %v3479
      %3513 = vst.msk [vmem:[%s199 + $0x88] sm:$0xff] %vm3495, %v3480
      %3514 = vst.msk [vmem:[%s199 + $0x90] sm:$0xff] %vm3495, %v3481
      %3515 = vst.msk [vmem:[%s199 + $0x98] sm:$0xff] %vm3495, %v3482
      %3516 = vst.msk [vmem:[%s199 + $0xa0] sm:$0xff] %vm3495, %v3483
      %3517 = vst.msk [vmem:[%s199 + $0xa8] sm:$0xff] %vm3495, %v3484
      %3518 = vst.msk [vmem:[%s199 + $0xb0] sm:$0xff] %vm3495, %v3485
      %3519 = vst.msk [vmem:[%s199 + $0xb8] sm:$0xff] %vm3495, %v3486
      %3520 = vst.msk [vmem:[%s199 + $0xc0] sm:$0xff] %vm3495, %v3487
      %3521 = vst.msk [vmem:[%s199 + $0xc8] sm:$0xff] %vm3495, %v3488
      %3522 = vst.msk [vmem:[%s199 + $0xd0] sm:$0xff] %vm3495, %v3489
      %3523 = vst.msk [vmem:[%s199 + $0xd8] sm:$0xff] %vm3495, %v3490
      %3524 = vst.msk [vmem:[%s199 + $0xe0] sm:$0xff] %vm3495, %v3491
      %3525 = vst.msk [vmem:[%s199 + $0xe8] sm:$0xff] %vm3495, %v3492
      %3526 = vst.msk [vmem:[%s199 + $0xf0] sm:$0xff] %vm3495, %v3493
      %3527 = vst.msk [vmem:[%s199 + $0xf8] sm:$0xff] %vm3495, %v3494
      %s3528 = smul.u32 32, %s15
      %p3529 = scmp.lt.s32.totalorder %s3528, 63
      %s3530 = scalar_select %p3529, %s3528, 63
      %s3531 = smul.addr %s3530, 8
      %s3532 = scalar_lea.vmem %s4, %s3531
      // Predicated region
      $region37: #{bottleneck_forward.3} parent=35 // pred_check
        %p3533 = pneg %p122
      $region38: #{bottleneck_forward.3} parent=35 // pred_check_branch
        %3535 = sbr.rel (%p3533) target = $region40
      $region39: #{bottleneck_forward.3} parent=35 // pred_region
        %s3536 = smul.u32 32, %s15
      $region40: #{bottleneck_forward.3} parent=35 // pred_fallthru
        _
    $region36: #{bottleneck_forward.3} parent=5 // pred_fallthru
      _
    %p3537 = scmp.le.s32.totalorder 2, %s10
    // Predicated region
    $region41: #{bottleneck_forward.3} parent=5 // pred_check
      %p3538 = pneg %p3537
    $region42: #{bottleneck_forward.3} parent=5 // pred_check_branch
      %3540 = sbr.rel (%p3538) target = $region44
    $region43: #{bottleneck_forward.3} parent=5 // pred_region
      %s3541 = ssub.s32 %s10, 2
      // Predicated region
      $region45: #{bottleneck_forward.3} parent=43 // pred_check
        %p3542 = pneg %p128
      $region46: #{bottleneck_forward.3} parent=43 // pred_check_branch
        %3544 = sbr.rel (%p3542) target = $region48
      $region47: #{bottleneck_forward.3} parent=43 // pred_region
        %s3545 = smul.u32 32, %s16
        %p3546 = scmp.lt.s32.totalorder %s3545, 63
        %s3547 = scalar_select %p3546, %s3545, 63
        %s3548 = smul.addr %s3547, 8
        %s3549 = scalar_lea.vmem %s4, %s3548
      $region48: #{bottleneck_forward.3} parent=43 // pred_fallthru
        _
    $region44: #{bottleneck_forward.3} parent=5 // pred_fallthru
      _
  $region6: #{bottleneck_forward.3} parent=0 // loop_footer
    %s14 = sadd.s32 1, %s10
  $region7: #{bottleneck_forward.3} parent=0 // loop_footer_branch
    %9 = sbr.rel target = $region3
  $region8: #{bottleneck_forward.3} parent=0 // loop_exit
    _

</llo_original>
